<compile_context>
chip_gen: v5e
topology: v5e:2x2
jax: 0.10.0
libtpu: 0.0.40
codegen_flags: <defaults>
</compile_context>

<pallas_src>
import math

import jax
import jax.numpy as jnp
from jax.experimental import pallas as pl
from jax.experimental.pallas import tpu as pltpu  # noqa: F401  (kept for TPU-specific tuning hooks)

# ----------------------------- static config ---------------------------------
N_NODES = 16
N_GRAPHS = 2
EMB_DIM = 32            # emb_dim
NUM_BLOCKS = 2          # num_interaction_blocks
NUM_FILTERS = 128       # SchNetBlock default num_filters
NUM_GAUSS = 50          # SchNetBlock default num_gaussians
NUM_GAUSS_PAD = 64      # padded Gaussian basis (aligned MXU contraction dim)
CUTOFF = 10.0           # SchNetBlock default cutoff
NUM_NODE_CLASS = 119
NUM_BOND_TYPE = 5
NUM_BOND_DIR = 3
ATOM_FEAT_DIMS = (NUM_NODE_CLASS, 4)   # AtomEncoder vocab sizes (2 atom feature columns)

_GAUSS_COEFF = -0.5 / float((CUTOFF / (NUM_GAUSS - 1)) ** 2)
_LOG2 = math.log(2.0)
_BF = NUM_BLOCKS * NUM_FILTERS   # lane width of the batched filter network


def _ssp(x):
    # ShiftedSoftplus: softplus(x) - log(2), numerically stable, kept in f32 (v5e-safe).
    return jnp.maximum(x, 0.0) + jnp.log1p(jnp.exp(-jnp.abs(x))) - _LOG2


# ------------------------------ fused kernel ----------------------------------
def _fused_interactor_kernel(
        # block-invariant inputs
        adj_ref, x2i_ref, x3i_ref, g_ref, cwb_ref, pmat_ref,
        mw1_ref, mb1_ref, mw2_ref, mb2_ref,
        # batched (block-concatenated) filter network
        fw1_ref, fb1_ref, fw2_ref, fb2_ref,
        # per-block stacked weights (indexed ref[b] with static b in the unrolled loop)
        eagg_ref, gw1_ref, gb1_ref, gw2_ref, gb2_ref,
        l1w_ref, l2w_ref, l2b_ref, lw_ref, lb_ref,
        iw1a_ref, iw1b_ref, ib1_ref, iw2a_ref, iw2b_ref, ib2a_ref, ib2b_ref,
        # outputs (final_pool='cat' done in the wrapper)
        r2_ref, r3_ref):
    f32 = jnp.float32
    bf16 = jnp.bfloat16

    # ----- batched SchNet filter network (block-invariant, hoisted above the block chain) -----
    # g / fw1 / fw2 arrive as bf16; accumulate in f32; elementwise ssp in f32.
    h_filt = _ssp(jnp.dot(g_ref[...], fw1_ref[...], preferred_element_type=f32) + fb1_ref[...])
    w_all = (jnp.dot(h_filt.astype(bf16), fw2_ref[...], preferred_element_type=f32)
             + fb2_ref[...]) * cwb_ref[...]                 # [N*N, B*F], cutoff mask pre-broadcast

    adj = adj_ref[...]
    x2 = x2i_ref[...]
    x3 = x3i_ref[...]
    p2 = x2                                                 # residual carries (SSA, no scratch)
    p3 = x3

    for b in range(NUM_BLOCKS):                             # statically unrolled
        # ----- 2D branch: GIN conv -> dropout(0) -> Identity norm -> residual -----
        # TODO(synk): exact GINBlock internals (per-edge ReLU / self-loop edge attrs / eps) are not
        # in the provided source; this is the standard Hu et al. GINConv dense formulation.
        agg = x2 + jnp.dot(adj, x2, preferred_element_type=f32) + eagg_ref[b]
        h2 = jnp.maximum(
            jnp.dot(agg, gw1_ref[b], preferred_element_type=f32) + gb1_ref[b], 0.0)
        x2 = jnp.dot(h2, gw2_ref[b], preferred_element_type=f32) + gb2_ref[b] + p2

        # ----- 3D branch: SchNet CFConv (filters precomputed above) -> residual -----
        wmat = w_all[:, b * NUM_FILTERS:(b + 1) * NUM_FILTERS].reshape(
            N_NODES, N_NODES, NUM_FILTERS)                  # static 128-lane-aligned slice
        xl = jnp.dot(x3, l1w_ref[b], preferred_element_type=f32)        # lin1 (no bias), [N, F]
        msg = jnp.sum(wmat * xl[None, :, :], axis=1)                    # fused, no VMEM round-trip
        h3 = _ssp(jnp.dot(msg, l2w_ref[b], preferred_element_type=f32) + l2b_ref[b])
        x3 = jnp.dot(h3, lw_ref[b], preferred_element_type=f32) + lb_ref[b] + p3

        # residual carry for the NEXT block = post-residual, pre-interactor values
        p2 = x2
        p3 = x3

        # ----- InteractionMLP: cat -> Linear -> ReLU -> Linear -> split (concat-free form) -----
        # TODO(synk): exact InteractionMLP architecture is not in the provided source; this is a
        # standard cat -> Linear -> ReLU -> Linear (Identity norm, dropout=0) variant.
        hi = jnp.maximum(
            jnp.dot(x2, iw1a_ref[b], preferred_element_type=f32)
            + jnp.dot(x3, iw1b_ref[b], preferred_element_type=f32)
            + ib1_ref[b], 0.0)
        x2 = jnp.dot(hi, iw2a_ref[b], preferred_element_type=f32) + ib2a_ref[b]
        x3 = jnp.dot(hi, iw2b_ref[b], preferred_element_type=f32) + ib2b_ref[b]

    # ----- last block: mlp_3d on x_3d, then mean-pool both branches -----
    hm = _ssp(jnp.dot(x3, mw1_ref[...], preferred_element_type=f32) + mb1_ref[...])
    x3m = jnp.dot(hm, mw2_ref[...], preferred_element_type=f32) + mb2_ref[...]
    r2_ref[...] = jnp.dot(pmat_ref[...], x2, preferred_element_type=f32)
    r3_ref[...] = jnp.dot(pmat_ref[...], x3m, preferred_element_type=f32)


# --------------------------- parameter construction ---------------------------
def _glorot(key, shape):
    lim = math.sqrt(6.0 / (shape[0] + shape[1]))
    return jax.random.uniform(key, shape, jnp.float32, -lim, lim)


def init_params(key):
    keys = iter(jax.random.split(key, 256))
    p = {}
    p["atom_emb_2d"] = [jax.random.normal(next(keys), (v, EMB_DIM), jnp.float32) * 0.1
                        for v in ATOM_FEAT_DIMS]
    p["atom_emb_3d"] = jax.random.normal(next(keys), (NUM_NODE_CLASS, EMB_DIM), jnp.float32) * 0.1
    p["blocks_2d"], p["blocks_3d"], p["interactors"] = [], [], []
    for _ in range(NUM_BLOCKS):
        p["blocks_2d"].append(dict(
            edge_emb1=jax.random.normal(next(keys), (NUM_BOND_TYPE, EMB_DIM), jnp.float32) * 0.1,
            edge_emb2=jax.random.normal(next(keys), (NUM_BOND_DIR, EMB_DIM), jnp.float32) * 0.1,
            w1=_glorot(next(keys), (EMB_DIM, 2 * EMB_DIM)),
            b1=jnp.zeros((1, 2 * EMB_DIM), jnp.float32),
            w2=_glorot(next(keys), (2 * EMB_DIM, EMB_DIM)),
            b2=jnp.zeros((1, EMB_DIM), jnp.float32)))
        p["blocks_3d"].append(dict(
            fw1=_glorot(next(keys), (NUM_GAUSS, NUM_FILTERS)),
            fb1=jnp.zeros((1, NUM_FILTERS), jnp.float32),
            fw2=_glorot(next(keys), (NUM_FILTERS, NUM_FILTERS)),
            fb2=jnp.zeros((1, NUM_FILTERS), jnp.float32),
            l1w=_glorot(next(keys), (EMB_DIM, NUM_FILTERS)),
            l2w=_glorot(next(keys), (NUM_FILTERS, EMB_DIM)),
            l2b=jnp.zeros((1, EMB_DIM), jnp.float32),
            lw=_glorot(next(keys), (EMB_DIM, EMB_DIM)),
            lb=jnp.zeros((1, EMB_DIM), jnp.float32)))
        p["interactors"].append(dict(
            w1=_glorot(next(keys), (2 * EMB_DIM, 2 * EMB_DIM)),
            b1=jnp.zeros((1, 2 * EMB_DIM), jnp.float32),
            w2=_glorot(next(keys), (2 * EMB_DIM, 2 * EMB_DIM)),
            b2=jnp.zeros((1, 2 * EMB_DIM), jnp.float32)))
    p["mlp3d"] = dict(
        w1=_glorot(next(keys), (EMB_DIM, EMB_DIM)),
        b1=jnp.zeros((1, EMB_DIM), jnp.float32),
        w2=_glorot(next(keys), (EMB_DIM, EMB_DIM)),
        b2=jnp.zeros((1, EMB_DIM), jnp.float32))
    return p


# --------------------------------- forward ------------------------------------
def _stack(blocks, key):
    return jnp.stack([b[key] for b in blocks], axis=0)


def interactor_forward(params, x_feat, edge_index, edge_attr, positions, batch_ids):
    n = x_feat.shape[0]
    f32 = jnp.float32
    bf16 = jnp.bfloat16

    # ------------- plain-JAX glue: embeddings + graph densification (one-time) -------------
    # TODO(synk): embedding gathers, scatter-adds (adj / edge aggregation) and radius_graph
    # densification have no clean Pallas equivalent at these shapes; kept as XLA glue.
    x_2d = sum(jnp.take(tab, x_feat[:, c], axis=0)
               for c, tab in enumerate(params["atom_emb_2d"]))          # AtomEncoder (OGB-style sum)
    x_3d = jnp.take(params["atom_emb_3d"], x_feat[:, 0], axis=0)        # atom_encoder_3d(x[:, 0])

    adj = jnp.zeros((n, n), f32).at[edge_index[1], edge_index[0]].add(1.0)

    # Block-invariant SchNet geometry (pairwise-difference distances; radius_graph + cosine cutoff).
    same_graph = (batch_ids[:, None] == batch_ids[None, :]) & ~jnp.eye(n, dtype=bool)
    diff = positions[:, None, :] - positions[None, :, :]
    d2 = jnp.sum(diff * diff, axis=-1)
    dist = jnp.sqrt(d2)
    rmask = same_graph & (d2 <= CUTOFF * CUTOFF)
    cw = (0.5 * (jnp.cos(dist * (math.pi / CUTOFF)) + 1.0)) * rmask.astype(f32)          # [N, N]
    # Pre-broadcast the cutoff/radius mask across the (batched) filter lanes: [N*N, B*F].
    cwb = jnp.broadcast_to(cw.reshape(n * n, 1), (n * n, _BF))

    # Gaussian smearing, zero-padded 50 -> 64 (padded fw1 rows are zero -> numerics unchanged).
    off = jnp.linspace(0.0, CUTOFF, NUM_GAUSS, dtype=f32)
    g = jnp.exp(_GAUSS_COEFF * (dist[:, :, None] - off[None, None, :]) ** 2)
    g = jnp.pad(g.reshape(n * n, NUM_GAUSS),
                ((0, 0), (0, NUM_GAUSS_PAD - NUM_GAUSS))).astype(bf16)                   # [N*N, 64]

    onehot = jax.nn.one_hot(batch_ids, N_GRAPHS, dtype=f32)
    pmat = onehot.T / jnp.sum(onehot, axis=0)[:, None]                                   # mean-pool matrix

    # ------------- per-block stacked parameters / edge aggregation -------------
    eaggs = []
    for b in params["blocks_2d"]:
        eemb = (jnp.take(b["edge_emb1"], edge_attr[:, 0], axis=0)
                + jnp.take(b["edge_emb2"], edge_attr[:, 1], axis=0))
        eaggs.append(jnp.zeros((n, EMB_DIM), f32).at[edge_index[1]].add(eemb))
    eagg = jnp.stack(eaggs)                                                              # [B, N, E]

    b2 = params["blocks_2d"]
    gw1, gb1, gw2, gb2 = (_stack(b2, k) for k in ("w1", "b1", "w2", "b2"))

    b3 = params["blocks_3d"]
    # Batched filter network: concat layer-1 along output lanes, block-diagonal layer-2.
    fw1cat = jnp.concatenate(
        [jnp.pad(b["fw1"], ((0, NUM_GAUSS_PAD - NUM_GAUSS), (0, 0))) for b in b3],
        axis=1).astype(bf16)                                                             # [64, B*F]
    fb1cat = jnp.concatenate([b["fb1"] for b in b3], axis=1)                             # [1, B*F]
    fw2bd = jax.scipy.linalg.block_diag(*[b["fw2"] for b in b3]).astype(bf16)            # [B*F, B*F]
    fb2cat = jnp.concatenate([b["fb2"] for b in b3], axis=1)                             # [1, B*F]
    l1w, l2w, l2b, lw, lb = (_stack(b3, k) for k in ("l1w", "l2w", "l2b", "lw", "lb"))

    it = params["interactors"]
    iw1a = jnp.stack([p["w1"][:EMB_DIM] for p in it])        # [B, E, 2E]   (x_2d half of cat)
    iw1b = jnp.stack([p["w1"][EMB_DIM:] for p in it])        # [B, E, 2E]   (x_3d half of cat)
    ib1 = _stack(it, "b1")                                   # [B, 1, 2E]
    iw2a = jnp.stack([p["w2"][:, :EMB_DIM] for p in it])     # [B, 2E, E]   (-> x_2d)
    iw2b = jnp.stack([p["w2"][:, EMB_DIM:] for p in it])     # [B, 2E, E]   (-> x_3d)
    ib2a = jnp.stack([p["b2"][:, :EMB_DIM] for p in it])     # [B, 1, E]
    ib2b = jnp.stack([p["b2"][:, EMB_DIM:] for p in it])     # [B, 1, E]

    m = params["mlp3d"]

    inputs = [adj, x_2d, x_3d, g, cwb, pmat,
              m["w1"], m["b1"], m["w2"], m["b2"],
              fw1cat, fb1cat, fw2bd, fb2cat,
              eagg, gw1, gb1, gw2, gb2,
              l1w, l2w, l2b, lw, lb,
              iw1a, iw1b, ib1, iw2a, iw2b, ib2a, ib2b]

    # Advisory cost estimate (dominant terms: the two batched filter GEMMs).
    flops = (2 * n * n * NUM_GAUSS_PAD * _BF            # g @ fw1cat
             + 2 * n * n * _BF * _BF                    # h @ block_diag(fw2)
             + NUM_BLOCKS * (2 * n * n * EMB_DIM        # adj @ x2
                             + 2 * 2 * n * EMB_DIM * 2 * EMB_DIM      # GIN MLP
                             + 2 * n * EMB_DIM * NUM_FILTERS          # lin1
                             + 3 * n * n * NUM_FILTERS                # wmat * xl + reduce
                             + 2 * n * NUM_FILTERS * EMB_DIM          # lin2
                             + 2 * n * EMB_DIM * EMB_DIM              # lin
                             + 4 * 2 * n * EMB_DIM * 2 * EMB_DIM)     # InteractionMLP
             + 4 * 2 * n * EMB_DIM * EMB_DIM            # mlp_3d
             + 2 * 2 * N_GRAPHS * n * EMB_DIM)          # mean pools
    transcendentals = 2 * n * n * _BF + NUM_BLOCKS * 2 * n * EMB_DIM + 2 * n * EMB_DIM
    bytes_accessed = (sum(int(a.size) * a.dtype.itemsize for a in inputs)
                      + 2 * N_GRAPHS * EMB_DIM * 4)

    # Single pallas_call, no grid: every tensor is a whole-array VMEM resident block,
    # the block loop is unrolled inside the kernel (total footprint << 1 MiB).
    r2, r3 = pl.pallas_call(
        _fused_interactor_kernel,
        out_shape=(jax.ShapeDtypeStruct((N_GRAPHS, EMB_DIM), f32),
                   jax.ShapeDtypeStruct((N_GRAPHS, EMB_DIM), f32)),
        cost_estimate=pl.CostEstimate(flops=int(flops),
                                      transcendentals=int(transcendentals),
                                      bytes_accessed=int(bytes_accessed)),
    )(*inputs)

    # final_pool='cat' in the wrapper (avoids sub-128-lane concat stores in-kernel).
    return jnp.concatenate([r2, r3], axis=-1)


# ----------------------------------- main --------------------------------------
if __name__ == "__main__":
    key = jax.random.PRNGKey(0)
    k_param, k_x1, k_x2, k_pos, k_ea1, k_ea2 = jax.random.split(key, 6)
    params = init_params(k_param)

    # atom features [N, 2] int32: (atomic number, categorical tag)
    x_feat = jnp.stack([
        jax.random.randint(k_x1, (N_NODES,), 1, NUM_NODE_CLASS),
        jax.random.randint(k_x2, (N_NODES,), 0, ATOM_FEAT_DIMS[1]),
    ], axis=1).astype(jnp.int32)

    # 2D bond graph: a ring within each molecule, bidirectional edges
    per = N_NODES // N_GRAPHS
    src, dst = [], []
    for gidx in range(N_GRAPHS):
        for k in range(per):
            a = gidx * per + k
            b = gidx * per + (k + 1) % per
            src += [a, b]
            dst += [b, a]
    edge_index = jnp.array([src, dst], dtype=jnp.int32)
    n_edges = edge_index.shape[1]
    edge_attr = jnp.stack([
        jax.random.randint(k_ea1, (n_edges,), 0, NUM_BOND_TYPE),
        jax.random.randint(k_ea2, (n_edges,), 0, NUM_BOND_DIR),
    ], axis=1).astype(jnp.int32)

    positions = jax.random.normal(k_pos, (N_NODES, 3), jnp.float32)
    batch_ids = jnp.repeat(jnp.arange(N_GRAPHS, dtype=jnp.int32), per)

    fwd = jax.jit(interactor_forward)
    out = fwd(params, x_feat, edge_index, edge_attr, positions, batch_ids)
    out = jax.block_until_ready(out)
    assert out.shape == (N_GRAPHS, 2 * EMB_DIM), out.shape
    assert bool(jnp.all(jnp.isfinite(out)))
    print("KERNEL_OK")
</pallas_src>

<mosaic_0001>
module attributes {stable_mosaic.version = 11 : i64} {
  func.func @_fused_interactor_kernel(%arg0: memref<16x16xf32, #tpu.memory_space<vmem>>, %arg1: memref<16x32xf32, #tpu.memory_space<vmem>>, %arg2: memref<16x32xf32, #tpu.memory_space<vmem>>, %arg3: memref<256x64xbf16, #tpu.memory_space<vmem>>, %arg4: memref<256x256xf32, #tpu.memory_space<vmem>>, %arg5: memref<2x16xf32, #tpu.memory_space<vmem>>, %arg6: memref<32x32xf32, #tpu.memory_space<vmem>>, %arg7: memref<1x32xf32, #tpu.memory_space<vmem>>, %arg8: memref<32x32xf32, #tpu.memory_space<vmem>>, %arg9: memref<1x32xf32, #tpu.memory_space<vmem>>, %arg10: memref<64x256xbf16, #tpu.memory_space<vmem>>, %arg11: memref<1x256xf32, #tpu.memory_space<vmem>>, %arg12: memref<256x256xbf16, #tpu.memory_space<vmem>>, %arg13: memref<1x256xf32, #tpu.memory_space<vmem>>, %arg14: memref<2x16x32xf32, #tpu.memory_space<vmem>>, %arg15: memref<2x32x64xf32, #tpu.memory_space<vmem>>, %arg16: memref<2x1x64xf32, #tpu.memory_space<vmem>>, %arg17: memref<2x64x32xf32, #tpu.memory_space<vmem>>, %arg18: memref<2x1x32xf32, #tpu.memory_space<vmem>>, %arg19: memref<2x32x128xf32, #tpu.memory_space<vmem>>, %arg20: memref<2x128x32xf32, #tpu.memory_space<vmem>>, %arg21: memref<2x1x32xf32, #tpu.memory_space<vmem>>, %arg22: memref<2x32x32xf32, #tpu.memory_space<vmem>>, %arg23: memref<2x1x32xf32, #tpu.memory_space<vmem>>, %arg24: memref<2x32x64xf32, #tpu.memory_space<vmem>>, %arg25: memref<2x32x64xf32, #tpu.memory_space<vmem>>, %arg26: memref<2x1x64xf32, #tpu.memory_space<vmem>>, %arg27: memref<2x64x32xf32, #tpu.memory_space<vmem>>, %arg28: memref<2x64x32xf32, #tpu.memory_space<vmem>>, %arg29: memref<2x1x32xf32, #tpu.memory_space<vmem>>, %arg30: memref<2x1x32xf32, #tpu.memory_space<vmem>>, %arg31: memref<2x32xf32, #tpu.memory_space<vmem>>, %arg32: memref<2x32xf32, #tpu.memory_space<vmem>>) attributes {dimension_semantics = [], scalar_prefetch = 0 : i64, scratch_operands = 0 : i64, tpu.core_type = #tpu.core_type<tc>} {
    %c0 = arith.constant 0 : index
    %c0_0 = arith.constant 0 : index
    %0 = vector.load %arg3[%c0, %c0_0] : memref<256x64xbf16, #tpu.memory_space<vmem>>, vector<256x64xbf16>
    %c0_1 = arith.constant 0 : index
    %c0_2 = arith.constant 0 : index
    %1 = vector.load %arg10[%c0_1, %c0_2] : memref<64x256xbf16, #tpu.memory_space<vmem>>, vector<64x256xbf16>
    %cst = arith.constant dense<0.000000e+00> : vector<256x256xf32>
    %2 = tpu.matmul %0, %1, %cst {dimension_numbers = #tpu.dot_dimension_numbers<[1], [0], [0], [1], [0, 0, 1, 1], [], []>} : vector<256x64xbf16>, vector<64x256xbf16>, vector<256x256xf32> -> vector<256x256xf32>
    %c0_3 = arith.constant 0 : index
    %c0_4 = arith.constant 0 : index
    %3 = vector.load %arg11[%c0_3, %c0_4] : memref<1x256xf32, #tpu.memory_space<vmem>>, vector<1x256xf32>
    %4 = vector.broadcast %3 : vector<1x256xf32> to vector<256x256xf32>
    %5 = arith.addf %2, %4 : vector<256x256xf32>
    %cst_5 = arith.constant 0.000000e+00 : f32
    %6 = vector.broadcast %cst_5 : f32 to vector<256x256xf32>
    %7 = arith.maximumf %5, %6 : vector<256x256xf32>
    %8 = math.absf %5 : vector<256x256xf32>
    %cst_6 = arith.constant 0.000000e+00 : f32
    %9 = vector.broadcast %cst_6 : f32 to vector<256x256xf32>
    %10 = arith.subf %9, %8 : vector<256x256xf32>
    %11 = math.exp %10 : vector<256x256xf32>
    %12 = math.log1p %11 : vector<256x256xf32>
    %13 = arith.addf %7, %12 : vector<256x256xf32>
    %cst_7 = arith.constant 0.693147182 : f32
    %14 = vector.broadcast %cst_7 : f32 to vector<256x256xf32>
    %15 = arith.subf %13, %14 : vector<256x256xf32>
    %16 = arith.truncf %15 : vector<256x256xf32> to vector<256x256xbf16>
    %c0_8 = arith.constant 0 : index
    %c0_9 = arith.constant 0 : index
    %17 = vector.load %arg12[%c0_8, %c0_9] : memref<256x256xbf16, #tpu.memory_space<vmem>>, vector<256x256xbf16>
    %cst_10 = arith.constant dense<0.000000e+00> : vector<256x256xf32>
    %18 = tpu.matmul %16, %17, %cst_10 {dimension_numbers = #tpu.dot_dimension_numbers<[1], [0], [0], [1], [0, 0, 1, 1], [], []>} : vector<256x256xbf16>, vector<256x256xbf16>, vector<256x256xf32> -> vector<256x256xf32>
    %c0_11 = arith.constant 0 : index
    %c0_12 = arith.constant 0 : index
    %19 = vector.load %arg13[%c0_11, %c0_12] : memref<1x256xf32, #tpu.memory_space<vmem>>, vector<1x256xf32>
    %20 = vector.broadcast %19 : vector<1x256xf32> to vector<256x256xf32>
    %21 = arith.addf %18, %20 : vector<256x256xf32>
    %c0_13 = arith.constant 0 : index
    %c0_14 = arith.constant 0 : index
    %22 = vector.load %arg4[%c0_13, %c0_14] : memref<256x256xf32, #tpu.memory_space<vmem>>, vector<256x256xf32>
    %23 = arith.mulf %21, %22 : vector<256x256xf32>
    %c0_15 = arith.constant 0 : index
    %c0_16 = arith.constant 0 : index
    %24 = vector.load %arg0[%c0_15, %c0_16] : memref<16x16xf32, #tpu.memory_space<vmem>>, vector<16x16xf32>
    %c0_17 = arith.constant 0 : index
    %c0_18 = arith.constant 0 : index
    %25 = vector.load %arg1[%c0_17, %c0_18] : memref<16x32xf32, #tpu.memory_space<vmem>>, vector<16x32xf32>
    %c0_19 = arith.constant 0 : index
    %c0_20 = arith.constant 0 : index
    %26 = vector.load %arg2[%c0_19, %c0_20] : memref<16x32xf32, #tpu.memory_space<vmem>>, vector<16x32xf32>
    %cst_21 = arith.constant dense<0.000000e+00> : vector<16x32xf32>
    %27 = tpu.matmul %24, %25, %cst_21 {dimension_numbers = #tpu.dot_dimension_numbers<[1], [0], [0], [1], [0, 0, 1, 1], [], []>} : vector<16x16xf32>, vector<16x32xf32>, vector<16x32xf32> -> vector<16x32xf32>
    %28 = arith.addf %25, %27 : vector<16x32xf32>
    %c0_22 = arith.constant 0 : index
    %c0_23 = arith.constant 0 : index
    %c0_24 = arith.constant 0 : index
    %29 = vector.load %arg14[%c0_22, %c0_23, %c0_24] : memref<2x16x32xf32, #tpu.memory_space<vmem>>, vector<1x16x32xf32>
    %30 = vector.shape_cast %29 : vector<1x16x32xf32> to vector<16x32xf32>
    %31 = arith.addf %28, %30 : vector<16x32xf32>
    %c0_25 = arith.constant 0 : index
    %c0_26 = arith.constant 0 : index
    %c0_27 = arith.constant 0 : index
    %32 = vector.load %arg15[%c0_25, %c0_26, %c0_27] : memref<2x32x64xf32, #tpu.memory_space<vmem>>, vector<1x32x64xf32>
    %33 = vector.shape_cast %32 : vector<1x32x64xf32> to vector<32x64xf32>
    %cst_28 = arith.constant dense<0.000000e+00> : vector<16x64xf32>
    %34 = tpu.matmul %31, %33, %cst_28 {dimension_numbers = #tpu.dot_dimension_numbers<[1], [0], [0], [1], [0, 0, 1, 1], [], []>} : vector<16x32xf32>, vector<32x64xf32>, vector<16x64xf32> -> vector<16x64xf32>
    %c0_29 = arith.constant 0 : index
    %c0_30 = arith.constant 0 : index
    %c0_31 = arith.constant 0 : index
    %35 = vector.load %arg16[%c0_29, %c0_30, %c0_31] : memref<2x1x64xf32, #tpu.memory_space<vmem>>, vector<1x1x64xf32>
    %36 = vector.shape_cast %35 : vector<1x1x64xf32> to vector<1x64xf32>
    %37 = vector.broadcast %36 : vector<1x64xf32> to vector<16x64xf32>
    %38 = arith.addf %34, %37 : vector<16x64xf32>
    %cst_32 = arith.constant 0.000000e+00 : f32
    %39 = vector.broadcast %cst_32 : f32 to vector<16x64xf32>
    %40 = arith.maximumf %38, %39 : vector<16x64xf32>
    %c0_33 = arith.constant 0 : index
    %c0_34 = arith.constant 0 : index
    %c0_35 = arith.constant 0 : index
    %41 = vector.load %arg17[%c0_33, %c0_34, %c0_35] : memref<2x64x32xf32, #tpu.memory_space<vmem>>, vector<1x64x32xf32>
    %42 = vector.shape_cast %41 : vector<1x64x32xf32> to vector<64x32xf32>
    %cst_36 = arith.constant dense<0.000000e+00> : vector<16x32xf32>
    %43 = tpu.matmul %40, %42, %cst_36 {dimension_numbers = #tpu.dot_dimension_numbers<[1], [0], [0], [1], [0, 0, 1, 1], [], []>} : vector<16x64xf32>, vector<64x32xf32>, vector<16x32xf32> -> vector<16x32xf32>
    %c0_37 = arith.constant 0 : index
    %c0_38 = arith.constant 0 : index
    %c0_39 = arith.constant 0 : index
    %44 = vector.load %arg18[%c0_37, %c0_38, %c0_39] : memref<2x1x32xf32, #tpu.memory_space<vmem>>, vector<1x1x32xf32>
    %45 = vector.shape_cast %44 : vector<1x1x32xf32> to vector<1x32xf32>
    %46 = vector.broadcast %45 : vector<1x32xf32> to vector<16x32xf32>
    %47 = arith.addf %43, %46 : vector<16x32xf32>
    %48 = arith.addf %47, %25 : vector<16x32xf32>
    %49 = vector.extract_strided_slice %23 {offsets = [0, 0], sizes = [256, 128], strides = [1, 1]} : vector<256x256xf32> to vector<256x128xf32>
    %50 = vector.shape_cast %49 : vector<256x128xf32> to vector<16x16x128xf32>
    %c0_40 = arith.constant 0 : index
    %c0_41 = arith.constant 0 : index
    %c0_42 = arith.constant 0 : index
    %51 = vector.load %arg19[%c0_40, %c0_41, %c0_42] : memref<2x32x128xf32, #tpu.memory_space<vmem>>, vector<1x32x128xf32>
    %52 = vector.shape_cast %51 : vector<1x32x128xf32> to vector<32x128xf32>
    %cst_43 = arith.constant dense<0.000000e+00> : vector<16x128xf32>
    %53 = tpu.matmul %26, %52, %cst_43 {dimension_numbers = #tpu.dot_dimension_numbers<[1], [0], [0], [1], [0, 0, 1, 1], [], []>} : vector<16x32xf32>, vector<32x128xf32>, vector<16x128xf32> -> vector<16x128xf32>
    %54 = vector.shape_cast %53 : vector<16x128xf32> to vector<1x16x128xf32>
    %55 = vector.broadcast %54 : vector<1x16x128xf32> to vector<16x16x128xf32>
    %56 = arith.mulf %50, %55 : vector<16x16x128xf32>
    %cst_44 = arith.constant dense<0.000000e+00> : vector<16x128xf32>
    %57 = vector.multi_reduction <add>, %56, %cst_44 [1] : vector<16x16x128xf32> to vector<16x128xf32>
    %c0_45 = arith.constant 0 : index
    %c0_46 = arith.constant 0 : index
    %c0_47 = arith.constant 0 : index
    %58 = vector.load %arg20[%c0_45, %c0_46, %c0_47] : memref<2x128x32xf32, #tpu.memory_space<vmem>>, vector<1x128x32xf32>
    %59 = vector.shape_cast %58 : vector<1x128x32xf32> to vector<128x32xf32>
    %cst_48 = arith.constant dense<0.000000e+00> : vector<16x32xf32>
    %60 = tpu.matmul %57, %59, %cst_48 {dimension_numbers = #tpu.dot_dimension_numbers<[1], [0], [0], [1], [0, 0, 1, 1], [], []>} : vector<16x128xf32>, vector<128x32xf32>, vector<16x32xf32> -> vector<16x32xf32>
    %c0_49 = arith.constant 0 : index
    %c0_50 = arith.constant 0 : index
    %c0_51 = arith.constant 0 : index
    %61 = vector.load %arg21[%c0_49, %c0_50, %c0_51] : memref<2x1x32xf32, #tpu.memory_space<vmem>>, vector<1x1x32xf32>
    %62 = vector.shape_cast %61 : vector<1x1x32xf32> to vector<1x32xf32>
    %63 = vector.broadcast %62 : vector<1x32xf32> to vector<16x32xf32>
    %64 = arith.addf %60, %63 : vector<16x32xf32>
    %cst_52 = arith.constant 0.000000e+00 : f32
    %65 = vector.broadcast %cst_52 : f32 to vector<16x32xf32>
    %66 = arith.maximumf %64, %65 : vector<16x32xf32>
    %67 = math.absf %64 : vector<16x32xf32>
    %cst_53 = arith.constant 0.000000e+00 : f32
    %68 = vector.broadcast %cst_53 : f32 to vector<16x32xf32>
    %69 = arith.subf %68, %67 : vector<16x32xf32>
    %70 = math.exp %69 : vector<16x32xf32>
    %71 = math.log1p %70 : vector<16x32xf32>
    %72 = arith.addf %66, %71 : vector<16x32xf32>
    %cst_54 = arith.constant 0.693147182 : f32
    %73 = vector.broadcast %cst_54 : f32 to vector<16x32xf32>
    %74 = arith.subf %72, %73 : vector<16x32xf32>
    %c0_55 = arith.constant 0 : index
    %c0_56 = arith.constant 0 : index
    %c0_57 = arith.constant 0 : index
    %75 = vector.load %arg22[%c0_55, %c0_56, %c0_57] : memref<2x32x32xf32, #tpu.memory_space<vmem>>, vector<1x32x32xf32>
    %76 = vector.shape_cast %75 : vector<1x32x32xf32> to vector<32x32xf32>
    %cst_58 = arith.constant dense<0.000000e+00> : vector<16x32xf32>
    %77 = tpu.matmul %74, %76, %cst_58 {dimension_numbers = #tpu.dot_dimension_numbers<[1], [0], [0], [1], [0, 0, 1, 1], [], []>} : vector<16x32xf32>, vector<32x32xf32>, vector<16x32xf32> -> vector<16x32xf32>
    %c0_59 = arith.constant 0 : index
    %c0_60 = arith.constant 0 : index
    %c0_61 = arith.constant 0 : index
    %78 = vector.load %arg23[%c0_59, %c0_60, %c0_61] : memref<2x1x32xf32, #tpu.memory_space<vmem>>, vector<1x1x32xf32>
    %79 = vector.shape_cast %78 : vector<1x1x32xf32> to vector<1x32xf32>
    %80 = vector.broadcast %79 : vector<1x32xf32> to vector<16x32xf32>
    %81 = arith.addf %77, %80 : vector<16x32xf32>
    %82 = arith.addf %81, %26 : vector<16x32xf32>
    %c0_62 = arith.constant 0 : index
    %c0_63 = arith.constant 0 : index
    %c0_64 = arith.constant 0 : index
    %83 = vector.load %arg24[%c0_62, %c0_63, %c0_64] : memref<2x32x64xf32, #tpu.memory_space<vmem>>, vector<1x32x64xf32>
    %84 = vector.shape_cast %83 : vector<1x32x64xf32> to vector<32x64xf32>
    %cst_65 = arith.constant dense<0.000000e+00> : vector<16x64xf32>
    %85 = tpu.matmul %48, %84, %cst_65 {dimension_numbers = #tpu.dot_dimension_numbers<[1], [0], [0], [1], [0, 0, 1, 1], [], []>} : vector<16x32xf32>, vector<32x64xf32>, vector<16x64xf32> -> vector<16x64xf32>
    %c0_66 = arith.constant 0 : index
    %c0_67 = arith.constant 0 : index
    %c0_68 = arith.constant 0 : index
    %86 = vector.load %arg25[%c0_66, %c0_67, %c0_68] : memref<2x32x64xf32, #tpu.memory_space<vmem>>, vector<1x32x64xf32>
    %87 = vector.shape_cast %86 : vector<1x32x64xf32> to vector<32x64xf32>
    %cst_69 = arith.constant dense<0.000000e+00> : vector<16x64xf32>
    %88 = tpu.matmul %82, %87, %cst_69 {dimension_numbers = #tpu.dot_dimension_numbers<[1], [0], [0], [1], [0, 0, 1, 1], [], []>} : vector<16x32xf32>, vector<32x64xf32>, vector<16x64xf32> -> vector<16x64xf32>
    %89 = arith.addf %85, %88 : vector<16x64xf32>
    %c0_70 = arith.constant 0 : index
    %c0_71 = arith.constant 0 : index
    %c0_72 = arith.constant 0 : index
    %90 = vector.load %arg26[%c0_70, %c0_71, %c0_72] : memref<2x1x64xf32, #tpu.memory_space<vmem>>, vector<1x1x64xf32>
    %91 = vector.shape_cast %90 : vector<1x1x64xf32> to vector<1x64xf32>
    %92 = vector.broadcast %91 : vector<1x64xf32> to vector<16x64xf32>
    %93 = arith.addf %89, %92 : vector<16x64xf32>
    %cst_73 = arith.constant 0.000000e+00 : f32
    %94 = vector.broadcast %cst_73 : f32 to vector<16x64xf32>
    %95 = arith.maximumf %93, %94 : vector<16x64xf32>
    %c0_74 = arith.constant 0 : index
    %c0_75 = arith.constant 0 : index
    %c0_76 = arith.constant 0 : index
    %96 = vector.load %arg27[%c0_74, %c0_75, %c0_76] : memref<2x64x32xf32, #tpu.memory_space<vmem>>, vector<1x64x32xf32>
    %97 = vector.shape_cast %96 : vector<1x64x32xf32> to vector<64x32xf32>
    %cst_77 = arith.constant dense<0.000000e+00> : vector<16x32xf32>
    %98 = tpu.matmul %95, %97, %cst_77 {dimension_numbers = #tpu.dot_dimension_numbers<[1], [0], [0], [1], [0, 0, 1, 1], [], []>} : vector<16x64xf32>, vector<64x32xf32>, vector<16x32xf32> -> vector<16x32xf32>
    %c0_78 = arith.constant 0 : index
    %c0_79 = arith.constant 0 : index
    %c0_80 = arith.constant 0 : index
    %99 = vector.load %arg29[%c0_78, %c0_79, %c0_80] : memref<2x1x32xf32, #tpu.memory_space<vmem>>, vector<1x1x32xf32>
    %100 = vector.shape_cast %99 : vector<1x1x32xf32> to vector<1x32xf32>
    %101 = vector.broadcast %100 : vector<1x32xf32> to vector<16x32xf32>
    %102 = arith.addf %98, %101 : vector<16x32xf32>
    %c0_81 = arith.constant 0 : index
    %c0_82 = arith.constant 0 : index
    %c0_83 = arith.constant 0 : index
    %103 = vector.load %arg28[%c0_81, %c0_82, %c0_83] : memref<2x64x32xf32, #tpu.memory_space<vmem>>, vector<1x64x32xf32>
    %104 = vector.shape_cast %103 : vector<1x64x32xf32> to vector<64x32xf32>
    %cst_84 = arith.constant dense<0.000000e+00> : vector<16x32xf32>
    %105 = tpu.matmul %95, %104, %cst_84 {dimension_numbers = #tpu.dot_dimension_numbers<[1], [0], [0], [1], [0, 0, 1, 1], [], []>} : vector<16x64xf32>, vector<64x32xf32>, vector<16x32xf32> -> vector<16x32xf32>
    %c0_85 = arith.constant 0 : index
    %c0_86 = arith.constant 0 : index
    %c0_87 = arith.constant 0 : index
    %106 = vector.load %arg30[%c0_85, %c0_86, %c0_87] : memref<2x1x32xf32, #tpu.memory_space<vmem>>, vector<1x1x32xf32>
    %107 = vector.shape_cast %106 : vector<1x1x32xf32> to vector<1x32xf32>
    %108 = vector.broadcast %107 : vector<1x32xf32> to vector<16x32xf32>
    %109 = arith.addf %105, %108 : vector<16x32xf32>
    %cst_88 = arith.constant dense<0.000000e+00> : vector<16x32xf32>
    %110 = tpu.matmul %24, %102, %cst_88 {dimension_numbers = #tpu.dot_dimension_numbers<[1], [0], [0], [1], [0, 0, 1, 1], [], []>} : vector<16x16xf32>, vector<16x32xf32>, vector<16x32xf32> -> vector<16x32xf32>
    %111 = arith.addf %102, %110 : vector<16x32xf32>
    %c1 = arith.constant 1 : index
    %c0_89 = arith.constant 0 : index
    %c0_90 = arith.constant 0 : index
    %112 = vector.load %arg14[%c1, %c0_89, %c0_90] : memref<2x16x32xf32, #tpu.memory_space<vmem>>, vector<1x16x32xf32>
    %113 = vector.shape_cast %112 : vector<1x16x32xf32> to vector<16x32xf32>
    %114 = arith.addf %111, %113 : vector<16x32xf32>
    %c1_91 = arith.constant 1 : index
    %c0_92 = arith.constant 0 : index
    %c0_93 = arith.constant 0 : index
    %115 = vector.load %arg15[%c1_91, %c0_92, %c0_93] : memref<2x32x64xf32, #tpu.memory_space<vmem>>, vector<1x32x64xf32>
    %116 = vector.shape_cast %115 : vector<1x32x64xf32> to vector<32x64xf32>
    %cst_94 = arith.constant dense<0.000000e+00> : vector<16x64xf32>
    %117 = tpu.matmul %114, %116, %cst_94 {dimension_numbers = #tpu.dot_dimension_numbers<[1], [0], [0], [1], [0, 0, 1, 1], [], []>} : vector<16x32xf32>, vector<32x64xf32>, vector<16x64xf32> -> vector<16x64xf32>
    %c1_95 = arith.constant 1 : index
    %c0_96 = arith.constant 0 : index
    %c0_97 = arith.constant 0 : index
    %118 = vector.load %arg16[%c1_95, %c0_96, %c0_97] : memref<2x1x64xf32, #tpu.memory_space<vmem>>, vector<1x1x64xf32>
    %119 = vector.shape_cast %118 : vector<1x1x64xf32> to vector<1x64xf32>
    %120 = vector.broadcast %119 : vector<1x64xf32> to vector<16x64xf32>
    %121 = arith.addf %117, %120 : vector<16x64xf32>
    %cst_98 = arith.constant 0.000000e+00 : f32
    %122 = vector.broadcast %cst_98 : f32 to vector<16x64xf32>
    %123 = arith.maximumf %121, %122 : vector<16x64xf32>
    %c1_99 = arith.constant 1 : index
    %c0_100 = arith.constant 0 : index
    %c0_101 = arith.constant 0 : index
    %124 = vector.load %arg17[%c1_99, %c0_100, %c0_101] : memref<2x64x32xf32, #tpu.memory_space<vmem>>, vector<1x64x32xf32>
    %125 = vector.shape_cast %124 : vector<1x64x32xf32> to vector<64x32xf32>
    %cst_102 = arith.constant dense<0.000000e+00> : vector<16x32xf32>
    %126 = tpu.matmul %123, %125, %cst_102 {dimension_numbers = #tpu.dot_dimension_numbers<[1], [0], [0], [1], [0, 0, 1, 1], [], []>} : vector<16x64xf32>, vector<64x32xf32>, vector<16x32xf32> -> vector<16x32xf32>
    %c1_103 = arith.constant 1 : index
    %c0_104 = arith.constant 0 : index
    %c0_105 = arith.constant 0 : index
    %127 = vector.load %arg18[%c1_103, %c0_104, %c0_105] : memref<2x1x32xf32, #tpu.memory_space<vmem>>, vector<1x1x32xf32>
    %128 = vector.shape_cast %127 : vector<1x1x32xf32> to vector<1x32xf32>
    %129 = vector.broadcast %128 : vector<1x32xf32> to vector<16x32xf32>
    %130 = arith.addf %126, %129 : vector<16x32xf32>
    %131 = arith.addf %130, %48 : vector<16x32xf32>
    %132 = vector.extract_strided_slice %23 {offsets = [0, 128], sizes = [256, 128], strides = [1, 1]} : vector<256x256xf32> to vector<256x128xf32>
    %133 = vector.shape_cast %132 : vector<256x128xf32> to vector<16x16x128xf32>
    %c1_106 = arith.constant 1 : index
    %c0_107 = arith.constant 0 : index
    %c0_108 = arith.constant 0 : index
    %134 = vector.load %arg19[%c1_106, %c0_107, %c0_108] : memref<2x32x128xf32, #tpu.memory_space<vmem>>, vector<1x32x128xf32>
    %135 = vector.shape_cast %134 : vector<1x32x128xf32> to vector<32x128xf32>
    %cst_109 = arith.constant dense<0.000000e+00> : vector<16x128xf32>
    %136 = tpu.matmul %109, %135, %cst_109 {dimension_numbers = #tpu.dot_dimension_numbers<[1], [0], [0], [1], [0, 0, 1, 1], [], []>} : vector<16x32xf32>, vector<32x128xf32>, vector<16x128xf32> -> vector<16x128xf32>
    %137 = vector.shape_cast %136 : vector<16x128xf32> to vector<1x16x128xf32>
    %138 = vector.broadcast %137 : vector<1x16x128xf32> to vector<16x16x128xf32>
    %139 = arith.mulf %133, %138 : vector<16x16x128xf32>
    %cst_110 = arith.constant dense<0.000000e+00> : vector<16x128xf32>
    %140 = vector.multi_reduction <add>, %139, %cst_110 [1] : vector<16x16x128xf32> to vector<16x128xf32>
    %c1_111 = arith.constant 1 : index
    %c0_112 = arith.constant 0 : index
    %c0_113 = arith.constant 0 : index
    %141 = vector.load %arg20[%c1_111, %c0_112, %c0_113] : memref<2x128x32xf32, #tpu.memory_space<vmem>>, vector<1x128x32xf32>
    %142 = vector.shape_cast %141 : vector<1x128x32xf32> to vector<128x32xf32>
    %cst_114 = arith.constant dense<0.000000e+00> : vector<16x32xf32>
    %143 = tpu.matmul %140, %142, %cst_114 {dimension_numbers = #tpu.dot_dimension_numbers<[1], [0], [0], [1], [0, 0, 1, 1], [], []>} : vector<16x128xf32>, vector<128x32xf32>, vector<16x32xf32> -> vector<16x32xf32>
    %c1_115 = arith.constant 1 : index
    %c0_116 = arith.constant 0 : index
    %c0_117 = arith.constant 0 : index
    %144 = vector.load %arg21[%c1_115, %c0_116, %c0_117] : memref<2x1x32xf32, #tpu.memory_space<vmem>>, vector<1x1x32xf32>
    %145 = vector.shape_cast %144 : vector<1x1x32xf32> to vector<1x32xf32>
    %146 = vector.broadcast %145 : vector<1x32xf32> to vector<16x32xf32>
    %147 = arith.addf %143, %146 : vector<16x32xf32>
    %cst_118 = arith.constant 0.000000e+00 : f32
    %148 = vector.broadcast %cst_118 : f32 to vector<16x32xf32>
    %149 = arith.maximumf %147, %148 : vector<16x32xf32>
    %150 = math.absf %147 : vector<16x32xf32>
    %cst_119 = arith.constant 0.000000e+00 : f32
    %151 = vector.broadcast %cst_119 : f32 to vector<16x32xf32>
    %152 = arith.subf %151, %150 : vector<16x32xf32>
    %153 = math.exp %152 : vector<16x32xf32>
    %154 = math.log1p %153 : vector<16x32xf32>
    %155 = arith.addf %149, %154 : vector<16x32xf32>
    %cst_120 = arith.constant 0.693147182 : f32
    %156 = vector.broadcast %cst_120 : f32 to vector<16x32xf32>
    %157 = arith.subf %155, %156 : vector<16x32xf32>
    %c1_121 = arith.constant 1 : index
    %c0_122 = arith.constant 0 : index
    %c0_123 = arith.constant 0 : index
    %158 = vector.load %arg22[%c1_121, %c0_122, %c0_123] : memref<2x32x32xf32, #tpu.memory_space<vmem>>, vector<1x32x32xf32>
    %159 = vector.shape_cast %158 : vector<1x32x32xf32> to vector<32x32xf32>
    %cst_124 = arith.constant dense<0.000000e+00> : vector<16x32xf32>
    %160 = tpu.matmul %157, %159, %cst_124 {dimension_numbers = #tpu.dot_dimension_numbers<[1], [0], [0], [1], [0, 0, 1, 1], [], []>} : vector<16x32xf32>, vector<32x32xf32>, vector<16x32xf32> -> vector<16x32xf32>
    %c1_125 = arith.constant 1 : index
    %c0_126 = arith.constant 0 : index
    %c0_127 = arith.constant 0 : index
    %161 = vector.load %arg23[%c1_125, %c0_126, %c0_127] : memref<2x1x32xf32, #tpu.memory_space<vmem>>, vector<1x1x32xf32>
    %162 = vector.shape_cast %161 : vector<1x1x32xf32> to vector<1x32xf32>
    %163 = vector.broadcast %162 : vector<1x32xf32> to vector<16x32xf32>
    %164 = arith.addf %160, %163 : vector<16x32xf32>
    %165 = arith.addf %164, %82 : vector<16x32xf32>
    %c1_128 = arith.constant 1 : index
    %c0_129 = arith.constant 0 : index
    %c0_130 = arith.constant 0 : index
    %166 = vector.load %arg24[%c1_128, %c0_129, %c0_130] : memref<2x32x64xf32, #tpu.memory_space<vmem>>, vector<1x32x64xf32>
    %167 = vector.shape_cast %166 : vector<1x32x64xf32> to vector<32x64xf32>
    %cst_131 = arith.constant dense<0.000000e+00> : vector<16x64xf32>
    %168 = tpu.matmul %131, %167, %cst_131 {dimension_numbers = #tpu.dot_dimension_numbers<[1], [0], [0], [1], [0, 0, 1, 1], [], []>} : vector<16x32xf32>, vector<32x64xf32>, vector<16x64xf32> -> vector<16x64xf32>
    %c1_132 = arith.constant 1 : index
    %c0_133 = arith.constant 0 : index
    %c0_134 = arith.constant 0 : index
    %169 = vector.load %arg25[%c1_132, %c0_133, %c0_134] : memref<2x32x64xf32, #tpu.memory_space<vmem>>, vector<1x32x64xf32>
    %170 = vector.shape_cast %169 : vector<1x32x64xf32> to vector<32x64xf32>
    %cst_135 = arith.constant dense<0.000000e+00> : vector<16x64xf32>
    %171 = tpu.matmul %165, %170, %cst_135 {dimension_numbers = #tpu.dot_dimension_numbers<[1], [0], [0], [1], [0, 0, 1, 1], [], []>} : vector<16x32xf32>, vector<32x64xf32>, vector<16x64xf32> -> vector<16x64xf32>
    %172 = arith.addf %168, %171 : vector<16x64xf32>
    %c1_136 = arith.constant 1 : index
    %c0_137 = arith.constant 0 : index
    %c0_138 = arith.constant 0 : index
    %173 = vector.load %arg26[%c1_136, %c0_137, %c0_138] : memref<2x1x64xf32, #tpu.memory_space<vmem>>, vector<1x1x64xf32>
    %174 = vector.shape_cast %173 : vector<1x1x64xf32> to vector<1x64xf32>
    %175 = vector.broadcast %174 : vector<1x64xf32> to vector<16x64xf32>
    %176 = arith.addf %172, %175 : vector<16x64xf32>
    %cst_139 = arith.constant 0.000000e+00 : f32
    %177 = vector.broadcast %cst_139 : f32 to vector<16x64xf32>
    %178 = arith.maximumf %176, %177 : vector<16x64xf32>
    %c1_140 = arith.constant 1 : index
    %c0_141 = arith.constant 0 : index
    %c0_142 = arith.constant 0 : index
    %179 = vector.load %arg27[%c1_140, %c0_141, %c0_142] : memref<2x64x32xf32, #tpu.memory_space<vmem>>, vector<1x64x32xf32>
    %180 = vector.shape_cast %179 : vector<1x64x32xf32> to vector<64x32xf32>
    %cst_143 = arith.constant dense<0.000000e+00> : vector<16x32xf32>
    %181 = tpu.matmul %178, %180, %cst_143 {dimension_numbers = #tpu.dot_dimension_numbers<[1], [0], [0], [1], [0, 0, 1, 1], [], []>} : vector<16x64xf32>, vector<64x32xf32>, vector<16x32xf32> -> vector<16x32xf32>
    %c1_144 = arith.constant 1 : index
    %c0_145 = arith.constant 0 : index
    %c0_146 = arith.constant 0 : index
    %182 = vector.load %arg29[%c1_144, %c0_145, %c0_146] : memref<2x1x32xf32, #tpu.memory_space<vmem>>, vector<1x1x32xf32>
    %183 = vector.shape_cast %182 : vector<1x1x32xf32> to vector<1x32xf32>
    %184 = vector.broadcast %183 : vector<1x32xf32> to vector<16x32xf32>
    %185 = arith.addf %181, %184 : vector<16x32xf32>
    %c1_147 = arith.constant 1 : index
    %c0_148 = arith.constant 0 : index
    %c0_149 = arith.constant 0 : index
    %186 = vector.load %arg28[%c1_147, %c0_148, %c0_149] : memref<2x64x32xf32, #tpu.memory_space<vmem>>, vector<1x64x32xf32>
    %187 = vector.shape_cast %186 : vector<1x64x32xf32> to vector<64x32xf32>
    %cst_150 = arith.constant dense<0.000000e+00> : vector<16x32xf32>
    %188 = tpu.matmul %178, %187, %cst_150 {dimension_numbers = #tpu.dot_dimension_numbers<[1], [0], [0], [1], [0, 0, 1, 1], [], []>} : vector<16x64xf32>, vector<64x32xf32>, vector<16x32xf32> -> vector<16x32xf32>
    %c1_151 = arith.constant 1 : index
    %c0_152 = arith.constant 0 : index
    %c0_153 = arith.constant 0 : index
    %189 = vector.load %arg30[%c1_151, %c0_152, %c0_153] : memref<2x1x32xf32, #tpu.memory_space<vmem>>, vector<1x1x32xf32>
    %190 = vector.shape_cast %189 : vector<1x1x32xf32> to vector<1x32xf32>
    %191 = vector.broadcast %190 : vector<1x32xf32> to vector<16x32xf32>
    %192 = arith.addf %188, %191 : vector<16x32xf32>
    %c0_154 = arith.constant 0 : index
    %c0_155 = arith.constant 0 : index
    %193 = vector.load %arg6[%c0_154, %c0_155] : memref<32x32xf32, #tpu.memory_space<vmem>>, vector<32x32xf32>
    %cst_156 = arith.constant dense<0.000000e+00> : vector<16x32xf32>
    %194 = tpu.matmul %192, %193, %cst_156 {dimension_numbers = #tpu.dot_dimension_numbers<[1], [0], [0], [1], [0, 0, 1, 1], [], []>} : vector<16x32xf32>, vector<32x32xf32>, vector<16x32xf32> -> vector<16x32xf32>
    %c0_157 = arith.constant 0 : index
    %c0_158 = arith.constant 0 : index
    %195 = vector.load %arg7[%c0_157, %c0_158] : memref<1x32xf32, #tpu.memory_space<vmem>>, vector<1x32xf32>
    %196 = vector.broadcast %195 : vector<1x32xf32> to vector<16x32xf32>
    %197 = arith.addf %194, %196 : vector<16x32xf32>
    %cst_159 = arith.constant 0.000000e+00 : f32
    %198 = vector.broadcast %cst_159 : f32 to vector<16x32xf32>
    %199 = arith.maximumf %197, %198 : vector<16x32xf32>
    %200 = math.absf %197 : vector<16x32xf32>
    %cst_160 = arith.constant 0.000000e+00 : f32
    %201 = vector.broadcast %cst_160 : f32 to vector<16x32xf32>
    %202 = arith.subf %201, %200 : vector<16x32xf32>
    %203 = math.exp %202 : vector<16x32xf32>
    %204 = math.log1p %203 : vector<16x32xf32>
    %205 = arith.addf %199, %204 : vector<16x32xf32>
    %cst_161 = arith.constant 0.693147182 : f32
    %206 = vector.broadcast %cst_161 : f32 to vector<16x32xf32>
    %207 = arith.subf %205, %206 : vector<16x32xf32>
    %c0_162 = arith.constant 0 : index
    %c0_163 = arith.constant 0 : index
    %208 = vector.load %arg8[%c0_162, %c0_163] : memref<32x32xf32, #tpu.memory_space<vmem>>, vector<32x32xf32>
    %cst_164 = arith.constant dense<0.000000e+00> : vector<16x32xf32>
    %209 = tpu.matmul %207, %208, %cst_164 {dimension_numbers = #tpu.dot_dimension_numbers<[1], [0], [0], [1], [0, 0, 1, 1], [], []>} : vector<16x32xf32>, vector<32x32xf32>, vector<16x32xf32> -> vector<16x32xf32>
    %c0_165 = arith.constant 0 : index
    %c0_166 = arith.constant 0 : index
    %210 = vector.load %arg9[%c0_165, %c0_166] : memref<1x32xf32, #tpu.memory_space<vmem>>, vector<1x32xf32>
    %211 = vector.broadcast %210 : vector<1x32xf32> to vector<16x32xf32>
    %212 = arith.addf %209, %211 : vector<16x32xf32>
    %c0_167 = arith.constant 0 : index
    %c0_168 = arith.constant 0 : index
    %213 = vector.load %arg5[%c0_167, %c0_168] : memref<2x16xf32, #tpu.memory_space<vmem>>, vector<2x16xf32>
    %cst_169 = arith.constant dense<0.000000e+00> : vector<2x32xf32>
    %214 = tpu.matmul %213, %185, %cst_169 {dimension_numbers = #tpu.dot_dimension_numbers<[1], [0], [0], [1], [0, 0, 1, 1], [], []>} : vector<2x16xf32>, vector<16x32xf32>, vector<2x32xf32> -> vector<2x32xf32>
    %c0_170 = arith.constant 0 : index
    %c0_171 = arith.constant 0 : index
    %215 = vector.load %arg31[%c0_170, %c0_171] : memref<2x32xf32, #tpu.memory_space<vmem>>, vector<2x32xf32>
    tpu.vector_store %arg31[%c0_170, %c0_171], %214 {strides = array<i32>} : memref<2x32xf32, #tpu.memory_space<vmem>>, vector<2x32xf32>,
    %c0_172 = arith.constant 0 : index
    %c0_173 = arith.constant 0 : index
    %216 = vector.load %arg5[%c0_172, %c0_173] : memref<2x16xf32, #tpu.memory_space<vmem>>, vector<2x16xf32>
    %cst_174 = arith.constant dense<0.000000e+00> : vector<2x32xf32>
    %217 = tpu.matmul %216, %212, %cst_174 {dimension_numbers = #tpu.dot_dimension_numbers<[1], [0], [0], [1], [0, 0, 1, 1], [], []>} : vector<2x16xf32>, vector<16x32xf32>, vector<2x32xf32> -> vector<2x32xf32>
    %c0_175 = arith.constant 0 : index
    %c0_176 = arith.constant 0 : index
    %218 = vector.load %arg32[%c0_175, %c0_176] : memref<2x32xf32, #tpu.memory_space<vmem>>, vector<2x32xf32>
    tpu.vector_store %arg32[%c0_175, %c0_176], %217 {strides = array<i32>} : memref<2x32xf32, #tpu.memory_space<vmem>>, vector<2x32xf32>,
    return
  }
}

</mosaic_0001>

<llo_original>
// kernel: interactor_forward.1
$region0: #{interactor_forward.1}
  #allocation0 [shape = 'u32[]', space=smem, size = 0x4, offset = 0x4, fixed_abs, tag = 'smem constant byte address 0x4 - core index']
  #allocation1 [shape = 'u32[72,128]{1,0:T(1,128)}', space=vmem, size = 0x9000, scoped, tag = 'internal scratch']
  %s0 = inlined_call_operand.smem [shape: u32[33], index: -1, kind: input, shape index: {}]
  %s1 = sld [smem:[%s0]]
  %s2 = scalar_lea.smem %s0, 1
  %s3 = sld [smem:[%s2]]
  %s4 = scalar_lea.smem %s0, 2
  %s5 = sld [smem:[%s4]]
  %s6 = scalar_lea.smem %s0, 3
  %s7 = sld [smem:[%s6]]
  %s8 = scalar_lea.smem %s0, 4
  %s9 = sld [smem:[%s8]]
  %s10 = scalar_lea.smem %s0, 5
  %s11 = sld [smem:[%s10]]
  %s12 = scalar_lea.smem %s0, 6
  %s13 = sld [smem:[%s12]]
  %s14 = scalar_lea.smem %s0, 7
  %s15 = sld [smem:[%s14]]
  %s16 = scalar_lea.smem %s0, 8
  %s17 = sld [smem:[%s16]]
  %s18 = scalar_lea.smem %s0, 9
  %s19 = sld [smem:[%s18]]
  %s20 = scalar_lea.smem %s0, 10
  %s21 = sld [smem:[%s20]]
  %s22 = scalar_lea.smem %s0, 11
  %s23 = sld [smem:[%s22]]
  %s24 = scalar_lea.smem %s0, 12
  %s25 = sld [smem:[%s24]]
  %s26 = scalar_lea.smem %s0, 13
  %s27 = sld [smem:[%s26]]
  %s28 = scalar_lea.smem %s0, 14
  %s29 = sld [smem:[%s28]]
  %s30 = scalar_lea.smem %s0, 15
  %s31 = sld [smem:[%s30]]
  %s32 = scalar_lea.smem %s0, 16
  %s33 = sld [smem:[%s32]]
  %s34 = scalar_lea.smem %s0, 17
  %s35 = sld [smem:[%s34]]
  %s36 = scalar_lea.smem %s0, 18
  %s37 = sld [smem:[%s36]]
  %s38 = scalar_lea.smem %s0, 19
  %s39 = sld [smem:[%s38]]
  %s40 = scalar_lea.smem %s0, 20
  %s41 = sld [smem:[%s40]]
  %s42 = scalar_lea.smem %s0, 21
  %s43 = sld [smem:[%s42]]
  %s44 = scalar_lea.smem %s0, 22
  %s45 = sld [smem:[%s44]]
  %s46 = scalar_lea.smem %s0, 23
  %s47 = sld [smem:[%s46]]
  %s48 = scalar_lea.smem %s0, 24
  %s49 = sld [smem:[%s48]]
  %s50 = scalar_lea.smem %s0, 25
  %s51 = sld [smem:[%s50]]
  %s52 = scalar_lea.smem %s0, 26
  %s53 = sld [smem:[%s52]]
  %s54 = scalar_lea.smem %s0, 27
  %s55 = sld [smem:[%s54]]
  %s56 = scalar_lea.smem %s0, 28
  %s57 = sld [smem:[%s56]]
  %s58 = scalar_lea.smem %s0, 29
  %s59 = sld [smem:[%s58]]
  %s60 = scalar_lea.smem %s0, 30
  %s61 = sld [smem:[%s60]]
  %s62 = scalar_lea.smem %s0, 31
  %s63 = sld [smem:[%s62]]
  %s64 = scalar_lea.smem %s0, 32
  %s65 = sld [smem:[%s64]]
  %66 = xla_tuple %s63, %s65
  %s67 = sld [smem:[#allocation0]]
  $region142: #{interactor_forward.1} parent=0
    _
  %s69 = ssub.s32 1, %s67
  %s70 = scalar_select 0, %s69, %s67
  // Predicated region
  $region2: #{interactor_forward.1} parent=0 // pred_check
    _
  $region3: #{interactor_forward.1} parent=0 // pred_check_branch
    %72 = sbr.rel (0) target = $region5
  $region4: #{interactor_forward.1} parent=0 // pred_region
    _
  $region5: #{interactor_forward.1} parent=0 // pred_fallthru
    _
  // Predicated region
  $region6: #{interactor_forward.1} parent=0 // pred_check
    _
  $region7: #{interactor_forward.1} parent=0 // pred_check_branch
    %74 = sbr.rel (0) target = $region9
  $region8: #{interactor_forward.1} parent=0 // pred_region
    _
  $region9: #{interactor_forward.1} parent=0 // pred_fallthru
    _
  // Predicated region
  $region10: #{interactor_forward.1} parent=0 // pred_check
    _
  $region11: #{interactor_forward.1} parent=0 // pred_check_branch
    %76 = sbr.rel (0) target = $region13
  $region12: #{interactor_forward.1} parent=0 // pred_region
    _
  $region13: #{interactor_forward.1} parent=0 // pred_fallthru
    _
  // Predicated region
  $region14: #{interactor_forward.1} parent=0 // pred_check
    _
  $region15: #{interactor_forward.1} parent=0 // pred_check_branch
    %78 = sbr.rel (0) target = $region17
  $region16: #{interactor_forward.1} parent=0 // pred_region
    _
  $region17: #{interactor_forward.1} parent=0 // pred_fallthru
    _
  // Predicated region
  $region18: #{interactor_forward.1} parent=0 // pred_check
    _
  $region19: #{interactor_forward.1} parent=0 // pred_check_branch
    %80 = sbr.rel (0) target = $region21
  $region20: #{interactor_forward.1} parent=0 // pred_region
    _
  $region21: #{interactor_forward.1} parent=0 // pred_fallthru
    _
  // Predicated region
  $region22: #{interactor_forward.1} parent=0 // pred_check
    _
  $region23: #{interactor_forward.1} parent=0 // pred_check_branch
    %82 = sbr.rel (0) target = $region25
  $region24: #{interactor_forward.1} parent=0 // pred_region
    _
  $region25: #{interactor_forward.1} parent=0 // pred_fallthru
    _
  // Predicated region
  $region26: #{interactor_forward.1} parent=0 // pred_check
    _
  $region27: #{interactor_forward.1} parent=0 // pred_check_branch
    %84 = sbr.rel (0) target = $region29
  $region28: #{interactor_forward.1} parent=0 // pred_region
    _
  $region29: #{interactor_forward.1} parent=0 // pred_fallthru
    _
  // Predicated region
  $region30: #{interactor_forward.1} parent=0 // pred_check
    _
  $region31: #{interactor_forward.1} parent=0 // pred_check_branch
    %86 = sbr.rel (0) target = $region33
  $region32: #{interactor_forward.1} parent=0 // pred_region
    _
  $region33: #{interactor_forward.1} parent=0 // pred_fallthru
    _
  // Predicated region
  $region34: #{interactor_forward.1} parent=0 // pred_check
    _
  $region35: #{interactor_forward.1} parent=0 // pred_check_branch
    %88 = sbr.rel (0) target = $region37
  $region36: #{interactor_forward.1} parent=0 // pred_region
    _
  $region37: #{interactor_forward.1} parent=0 // pred_fallthru
    _
  // Predicated region
  $region38: #{interactor_forward.1} parent=0 // pred_check
    _
  $region39: #{interactor_forward.1} parent=0 // pred_check_branch
    %90 = sbr.rel (0) target = $region41
  $region40: #{interactor_forward.1} parent=0 // pred_region
    _
  $region41: #{interactor_forward.1} parent=0 // pred_fallthru
    _
  // Predicated region
  $region42: #{interactor_forward.1} parent=0 // pred_check
    _
  $region43: #{interactor_forward.1} parent=0 // pred_check_branch
    %92 = sbr.rel (0) target = $region45
  $region44: #{interactor_forward.1} parent=0 // pred_region
    _
  $region45: #{interactor_forward.1} parent=0 // pred_fallthru
    _
  // Predicated region
  $region46: #{interactor_forward.1} parent=0 // pred_check
    _
  $region47: #{interactor_forward.1} parent=0 // pred_check_branch
    %94 = sbr.rel (0) target = $region49
  $region48: #{interactor_forward.1} parent=0 // pred_region
    _
  $region49: #{interactor_forward.1} parent=0 // pred_fallthru
    _
  // Predicated region
  $region50: #{interactor_forward.1} parent=0 // pred_check
    _
  $region51: #{interactor_forward.1} parent=0 // pred_check_branch
    %96 = sbr.rel (0) target = $region53
  $region52: #{interactor_forward.1} parent=0 // pred_region
    _
  $region53: #{interactor_forward.1} parent=0 // pred_fallthru
    _
  // Predicated region
  $region54: #{interactor_forward.1} parent=0 // pred_check
    _
  $region55: #{interactor_forward.1} parent=0 // pred_check_branch
    %98 = sbr.rel (0) target = $region57
  $region56: #{interactor_forward.1} parent=0 // pred_region
    _
  $region57: #{interactor_forward.1} parent=0 // pred_fallthru
    _
  // Predicated region
  $region58: #{interactor_forward.1} parent=0 // pred_check
    _
  $region59: #{interactor_forward.1} parent=0 // pred_check_branch
    %100 = sbr.rel (0) target = $region61
  $region60: #{interactor_forward.1} parent=0 // pred_region
    _
  $region61: #{interactor_forward.1} parent=0 // pred_fallthru
    _
  // Predicated region
  $region62: #{interactor_forward.1} parent=0 // pred_check
    _
  $region63: #{interactor_forward.1} parent=0 // pred_check_branch
    %102 = sbr.rel (0) target = $region65
  $region64: #{interactor_forward.1} parent=0 // pred_region
    _
  $region65: #{interactor_forward.1} parent=0 // pred_fallthru
    _
  // Predicated region
  $region66: #{interactor_forward.1} parent=0 // pred_check
    _
  $region67: #{interactor_forward.1} parent=0 // pred_check_branch
    %104 = sbr.rel (0) target = $region69
  $region68: #{interactor_forward.1} parent=0 // pred_region
    _
  $region69: #{interactor_forward.1} parent=0 // pred_fallthru
    _
  // Predicated region
  $region70: #{interactor_forward.1} parent=0 // pred_check
    _
  $region71: #{interactor_forward.1} parent=0 // pred_check_branch
    %106 = sbr.rel (0) target = $region73
  $region72: #{interactor_forward.1} parent=0 // pred_region
    _
  $region73: #{interactor_forward.1} parent=0 // pred_fallthru
    _
  // Predicated region
  $region74: #{interactor_forward.1} parent=0 // pred_check
    _
  $region75: #{interactor_forward.1} parent=0 // pred_check_branch
    %108 = sbr.rel (0) target = $region77
  $region76: #{interactor_forward.1} parent=0 // pred_region
    _
  $region77: #{interactor_forward.1} parent=0 // pred_fallthru
    _
  // Predicated region
  $region78: #{interactor_forward.1} parent=0 // pred_check
    _
  $region79: #{interactor_forward.1} parent=0 // pred_check_branch
    %110 = sbr.rel (0) target = $region81
  $region80: #{interactor_forward.1} parent=0 // pred_region
    _
  $region81: #{interactor_forward.1} parent=0 // pred_fallthru
    _
  // Predicated region
  $region82: #{interactor_forward.1} parent=0 // pred_check
    _
  $region83: #{interactor_forward.1} parent=0 // pred_check_branch
    %112 = sbr.rel (0) target = $region85
  $region84: #{interactor_forward.1} parent=0 // pred_region
    _
  $region85: #{interactor_forward.1} parent=0 // pred_fallthru
    _
  // Predicated region
  $region86: #{interactor_forward.1} parent=0 // pred_check
    _
  $region87: #{interactor_forward.1} parent=0 // pred_check_branch
    %114 = sbr.rel (0) target = $region89
  $region88: #{interactor_forward.1} parent=0 // pred_region
    _
  $region89: #{interactor_forward.1} parent=0 // pred_fallthru
    _
  // Predicated region
  $region90: #{interactor_forward.1} parent=0 // pred_check
    _
  $region91: #{interactor_forward.1} parent=0 // pred_check_branch
    %116 = sbr.rel (0) target = $region93
  $region92: #{interactor_forward.1} parent=0 // pred_region
    _
  $region93: #{interactor_forward.1} parent=0 // pred_fallthru
    _
  // Predicated region
  $region94: #{interactor_forward.1} parent=0 // pred_check
    _
  $region95: #{interactor_forward.1} parent=0 // pred_check_branch
    %118 = sbr.rel (0) target = $region97
  $region96: #{interactor_forward.1} parent=0 // pred_region
    _
  $region97: #{interactor_forward.1} parent=0 // pred_fallthru
    _
  // Predicated region
  $region98: #{interactor_forward.1} parent=0 // pred_check
    _
  $region99: #{interactor_forward.1} parent=0 // pred_check_branch
    %120 = sbr.rel (0) target = $region101
  $region100: #{interactor_forward.1} parent=0 // pred_region
    _
  $region101: #{interactor_forward.1} parent=0 // pred_fallthru
    _
  // Predicated region
  $region102: #{interactor_forward.1} parent=0 // pred_check
    _
  $region103: #{interactor_forward.1} parent=0 // pred_check_branch
    %122 = sbr.rel (0) target = $region105
  $region104: #{interactor_forward.1} parent=0 // pred_region
    _
  $region105: #{interactor_forward.1} parent=0 // pred_fallthru
    _
  // Predicated region
  $region106: #{interactor_forward.1} parent=0 // pred_check
    _
  $region107: #{interactor_forward.1} parent=0 // pred_check_branch
    %124 = sbr.rel (0) target = $region109
  $region108: #{interactor_forward.1} parent=0 // pred_region
    _
  $region109: #{interactor_forward.1} parent=0 // pred_fallthru
    _
  // Predicated region
  $region110: #{interactor_forward.1} parent=0 // pred_check
    _
  $region111: #{interactor_forward.1} parent=0 // pred_check_branch
    %126 = sbr.rel (0) target = $region113
  $region112: #{interactor_forward.1} parent=0 // pred_region
    _
  $region113: #{interactor_forward.1} parent=0 // pred_fallthru
    _
  // Predicated region
  $region114: #{interactor_forward.1} parent=0 // pred_check
    _
  $region115: #{interactor_forward.1} parent=0 // pred_check_branch
    %128 = sbr.rel (0) target = $region117
  $region116: #{interactor_forward.1} parent=0 // pred_region
    _
  $region117: #{interactor_forward.1} parent=0 // pred_fallthru
    _
  // Predicated region
  $region118: #{interactor_forward.1} parent=0 // pred_check
    _
  $region119: #{interactor_forward.1} parent=0 // pred_check_branch
    %130 = sbr.rel (0) target = $region121
  $region120: #{interactor_forward.1} parent=0 // pred_region
    _
  $region121: #{interactor_forward.1} parent=0 // pred_fallthru
    _
  // Predicated region
  $region122: #{interactor_forward.1} parent=0 // pred_check
    _
  $region123: #{interactor_forward.1} parent=0 // pred_check_branch
    %132 = sbr.rel (0) target = $region125
  $region124: #{interactor_forward.1} parent=0 // pred_region
    _
  $region125: #{interactor_forward.1} parent=0 // pred_fallthru
    _
  %v134 = vld [vmem:[%s7] sm:$0xf]
  %v135 = vld [vmem:[%s7 + $0x4] sm:$0xf]
  %v136 = vld [vmem:[%s7 + $0x8] sm:$0xf]
  %v137 = vld [vmem:[%s7 + $0xc] sm:$0xf]
  %v138 = vld [vmem:[%s7 + $0x10] sm:$0xf]
  %v139 = vld [vmem:[%s7 + $0x14] sm:$0xf]
  %v140 = vld [vmem:[%s7 + $0x18] sm:$0xf]
  %v141 = vld [vmem:[%s7 + $0x1c] sm:$0xf]
  %v142 = vld [vmem:[%s7 + $0x20] sm:$0xf]
  %v143 = vld [vmem:[%s7 + $0x24] sm:$0xf]
  %v144 = vld [vmem:[%s7 + $0x28] sm:$0xf]
  %v145 = vld [vmem:[%s7 + $0x2c] sm:$0xf]
  %v146 = vld [vmem:[%s7 + $0x30] sm:$0xf]
  %v147 = vld [vmem:[%s7 + $0x34] sm:$0xf]
  %v148 = vld [vmem:[%s7 + $0x38] sm:$0xf]
  %v149 = vld [vmem:[%s7 + $0x3c] sm:$0xf]
  %v150 = vld [vmem:[%s7 + $0x40] sm:$0xf]
  %v151 = vld [vmem:[%s7 + $0x44] sm:$0xf]
  %v152 = vld [vmem:[%s7 + $0x48] sm:$0xf]
  %v153 = vld [vmem:[%s7 + $0x4c] sm:$0xf]
  %v154 = vld [vmem:[%s7 + $0x50] sm:$0xf]
  %v155 = vld [vmem:[%s7 + $0x54] sm:$0xf]
  %v156 = vld [vmem:[%s7 + $0x58] sm:$0xf]
  %v157 = vld [vmem:[%s7 + $0x5c] sm:$0xf]
  %v158 = vld [vmem:[%s7 + $0x60] sm:$0xf]
  %v159 = vld [vmem:[%s7 + $0x64] sm:$0xf]
  %v160 = vld [vmem:[%s7 + $0x68] sm:$0xf]
  %v161 = vld [vmem:[%s7 + $0x6c] sm:$0xf]
  %v162 = vld [vmem:[%s7 + $0x70] sm:$0xf]
  %v163 = vld [vmem:[%s7 + $0x74] sm:$0xf]
  %v164 = vld [vmem:[%s7 + $0x78] sm:$0xf]
  %v165 = vld [vmem:[%s7 + $0x7c] sm:$0xf]
  %v166 = vld [vmem:[%s21] sm:$0xff]
  %v167 = vld [vmem:[%s21 + $0x8] sm:$0xff]
  %v168 = vld [vmem:[%s21 + $0x10] sm:$0xff]
  %v169 = vld [vmem:[%s21 + $0x18] sm:$0xff]
  %v170 = vld [vmem:[%s21 + $0x20] sm:$0xff]
  %v171 = vld [vmem:[%s21 + $0x28] sm:$0xff]
  %v172 = vld [vmem:[%s21 + $0x30] sm:$0xff]
  %v173 = vld [vmem:[%s21 + $0x38] sm:$0xff]
  %v174 = vld [vmem:[%s23] sm:$0x3]
  %v176 = vperm.slane %v174, 0
  %v177 = vperm.slane %v174, 1
  %v212 = vunpack.c.l.b16 %v134
  %v213 = vunpack.c.l.b16 %v135
  %v214 = vunpack.c.l.b16 %v136
  %v215 = vunpack.c.l.b16 %v137
  %v216 = vunpack.c.l.b16 %v138
  %v217 = vunpack.c.l.b16 %v139
  %v218 = vunpack.c.l.b16 %v140
  %v219 = vunpack.c.l.b16 %v141
  %v220 = vunpack.c.l.b16 %v142
  %v221 = vunpack.c.l.b16 %v143
  %v222 = vunpack.c.l.b16 %v144
  %v223 = vunpack.c.l.b16 %v145
  %v224 = vunpack.c.l.b16 %v146
  %v225 = vunpack.c.l.b16 %v147
  %v226 = vunpack.c.l.b16 %v148
  %v227 = vunpack.c.l.b16 %v149
  %v228 = vunpack.c.l.b16 %v150
  %v229 = vunpack.c.l.b16 %v151
  %v230 = vunpack.c.l.b16 %v152
  %v231 = vunpack.c.l.b16 %v153
  %v232 = vunpack.c.l.b16 %v154
  %v233 = vunpack.c.l.b16 %v155
  %v234 = vunpack.c.l.b16 %v156
  %v235 = vunpack.c.l.b16 %v157
  %v236 = vunpack.c.l.b16 %v158
  %v237 = vunpack.c.l.b16 %v159
  %v238 = vunpack.c.l.b16 %v160
  %v239 = vunpack.c.l.b16 %v161
  %v240 = vunpack.c.l.b16 %v162
  %v241 = vunpack.c.l.b16 %v163
  %v242 = vunpack.c.l.b16 %v164
  %v243 = vunpack.c.l.b16 %v165
  %v244 = vpack.c.b16 %v213, %v212
  %v245 = vpack.c.b16 %v215, %v214
  %v246 = vpack.c.b16 %v217, %v216
  %v247 = vpack.c.b16 %v219, %v218
  %v248 = vpack.c.b16 %v221, %v220
  %v249 = vpack.c.b16 %v223, %v222
  %v250 = vpack.c.b16 %v225, %v224
  %v251 = vpack.c.b16 %v227, %v226
  %v252 = vpack.c.b16 %v229, %v228
  %v253 = vpack.c.b16 %v231, %v230
  %v254 = vpack.c.b16 %v233, %v232
  %v255 = vpack.c.b16 %v235, %v234
  %v256 = vpack.c.b16 %v237, %v236
  %v257 = vpack.c.b16 %v239, %v238
  %v258 = vpack.c.b16 %v241, %v240
  %v259 = vpack.c.b16 %v243, %v242
  %v268 = vunpack.c.l.b16 %v166
  %v269 = vunpack.c.h.b16 %v166
  %v270 = vunpack.c.l.b16 %v167
  %v271 = vunpack.c.h.b16 %v167
  %v272 = vunpack.c.l.b16 %v168
  %v273 = vunpack.c.h.b16 %v168
  %v274 = vunpack.c.l.b16 %v169
  %v275 = vunpack.c.h.b16 %v169
  %v276 = vunpack.c.l.b16 %v170
  %v277 = vunpack.c.h.b16 %v170
  %v278 = vunpack.c.l.b16 %v171
  %v279 = vunpack.c.h.b16 %v171
  %v280 = vunpack.c.l.b16 %v172
  %v281 = vunpack.c.h.b16 %v172
  %v282 = vunpack.c.l.b16 %v173
  %v283 = vunpack.c.h.b16 %v173
  %v284 = vpack.c.b16 %v270, %v268
  %v285 = vpack.c.b16 %v271, %v269
  %v286 = vpack.c.b16 %v274, %v272
  %v287 = vpack.c.b16 %v275, %v273
  %v288 = vpack.c.b16 %v278, %v276
  %v289 = vpack.c.b16 %v279, %v277
  %v290 = vpack.c.b16 %v282, %v280
  %v291 = vpack.c.b16 %v283, %v281
  %vm300 = vcmask 523264
  %v302 = vsel %vm300, %v244, 0
  %v305 = vsel %vm300, %v245, 0
  %v308 = vsel %vm300, %v246, 0
  %v311 = vsel %vm300, %v247, 0
  %v314 = vsel %vm300, %v248, 0
  %v317 = vsel %vm300, %v249, 0
  %v320 = vsel %vm300, %v250, 0
  %v323 = vsel %vm300, %v251, 0
  %v326 = vsel %vm300, %v252, 0
  %v329 = vsel %vm300, %v253, 0
  %v332 = vsel %vm300, %v254, 0
  %v335 = vsel %vm300, %v255, 0
  %v338 = vsel %vm300, %v256, 0
  %v341 = vsel %vm300, %v257, 0
  %v344 = vsel %vm300, %v258, 0
  %v347 = vsel %vm300, %v259, 0
  %349 = vmatpush.bf16.msra.mxu0 0
  %350 = vmatpush.bf16.msra.mxu0 0
  %351 = vmatpush.bf16.msra.mxu0 0
  %352 = vmatpush.bf16.msra.mxu0 0
  %353 = vmatpush.bf16.msra.mxu0 %v290
  %354 = vmatpush.bf16.msra.mxu0 %v288
  %355 = vmatpush.bf16.msra.mxu0 %v286
  %356 = vmatpush.bf16.msra.mxu0 %v284
  %357 = vmatmul.bf16.gmra.mxu0 %v302
  %v358 = vpop.f32.mrf.mxu0
  %v359 = vadd.f32 %v176, %v358
  %v360 = vpop.f32.mrf.mxu0
  %v361 = vadd.f32 %v176, %v360
  %362 = vmatmul.bf16.gmra.mxu0 %v305
  %v363 = vpop.f32.mrf.mxu0
  %v364 = vadd.f32 %v176, %v363
  %v365 = vpop.f32.mrf.mxu0
  %v366 = vadd.f32 %v176, %v365
  %367 = vmatmul.bf16.gmra.mxu0 %v308
  %v368 = vpop.f32.mrf.mxu0
  %v369 = vadd.f32 %v176, %v368
  %v370 = vpop.f32.mrf.mxu0
  %v371 = vadd.f32 %v176, %v370
  %372 = vmatmul.bf16.gmra.mxu0 %v311
  %v373 = vpop.f32.mrf.mxu0
  %v374 = vadd.f32 %v176, %v373
  %v375 = vpop.f32.mrf.mxu0
  %v376 = vadd.f32 %v176, %v375
  %377 = vmatmul.bf16.gmra.mxu0 %v314
  %v378 = vpop.f32.mrf.mxu0
  %v379 = vadd.f32 %v176, %v378
  %v380 = vpop.f32.mrf.mxu0
  %v381 = vadd.f32 %v176, %v380
  %382 = vmatmul.bf16.gmra.mxu0 %v317
  %v383 = vpop.f32.mrf.mxu0
  %v384 = vadd.f32 %v176, %v383
  %v385 = vpop.f32.mrf.mxu0
  %v386 = vadd.f32 %v176, %v385
  %387 = vmatmul.bf16.gmra.mxu0 %v320
  %v388 = vpop.f32.mrf.mxu0
  %v389 = vadd.f32 %v176, %v388
  %v390 = vpop.f32.mrf.mxu0
  %v391 = vadd.f32 %v176, %v390
  %392 = vmatmul.bf16.gmra.mxu0 %v323
  %v393 = vpop.f32.mrf.mxu0
  %v394 = vadd.f32 %v176, %v393
  %v395 = vpop.f32.mrf.mxu0
  %v396 = vadd.f32 %v176, %v395
  %397 = vmatmul.bf16.gmra.mxu0 %v326
  %v398 = vpop.f32.mrf.mxu0
  %v399 = vadd.f32 %v176, %v398
  %v400 = vpop.f32.mrf.mxu0
  %v401 = vadd.f32 %v176, %v400
  %402 = vmatmul.bf16.gmra.mxu0 %v329
  %v403 = vpop.f32.mrf.mxu0
  %v404 = vadd.f32 %v176, %v403
  %v405 = vpop.f32.mrf.mxu0
  %v406 = vadd.f32 %v176, %v405
  %407 = vmatmul.bf16.gmra.mxu0 %v332
  %v408 = vpop.f32.mrf.mxu0
  %v409 = vadd.f32 %v176, %v408
  %v410 = vpop.f32.mrf.mxu0
  %v411 = vadd.f32 %v176, %v410
  %412 = vmatmul.bf16.gmra.mxu0 %v335
  %v413 = vpop.f32.mrf.mxu0
  %v414 = vadd.f32 %v176, %v413
  %v415 = vpop.f32.mrf.mxu0
  %v416 = vadd.f32 %v176, %v415
  %417 = vmatmul.bf16.gmra.mxu0 %v338
  %v418 = vpop.f32.mrf.mxu0
  %v419 = vadd.f32 %v176, %v418
  %v420 = vpop.f32.mrf.mxu0
  %v421 = vadd.f32 %v176, %v420
  %422 = vmatmul.bf16.gmra.mxu0 %v341
  %v423 = vpop.f32.mrf.mxu0
  %v424 = vadd.f32 %v176, %v423
  %v425 = vpop.f32.mrf.mxu0
  %v426 = vadd.f32 %v176, %v425
  %427 = vmatmul.bf16.gmra.mxu0 %v344
  %v428 = vpop.f32.mrf.mxu0
  %v429 = vadd.f32 %v176, %v428
  %v430 = vpop.f32.mrf.mxu0
  %v431 = vadd.f32 %v176, %v430
  %432 = vmatmul.bf16.gmra.mxu0 %v347
  %v433 = vpop.f32.mrf.mxu0
  %v434 = vadd.f32 %v176, %v433
  %v435 = vpop.f32.mrf.mxu0
  %v436 = vadd.f32 %v176, %v435
  %437 = vdwg.mxu0
  %438 = vmatpush.bf16.msra.mxu0 0
  %439 = vmatpush.bf16.msra.mxu0 0
  %440 = vmatpush.bf16.msra.mxu0 0
  %441 = vmatpush.bf16.msra.mxu0 0
  %442 = vmatpush.bf16.msra.mxu0 %v291
  %443 = vmatpush.bf16.msra.mxu0 %v289
  %444 = vmatpush.bf16.msra.mxu0 %v287
  %445 = vmatpush.bf16.msra.mxu0 %v285
  %446 = vmatmul.bf16.gmra.mxu0 %v302
  %v447 = vpop.f32.mrf.mxu0
  %v448 = vadd.f32 %v177, %v447
  %v449 = vpop.f32.mrf.mxu0
  %v450 = vadd.f32 %v177, %v449
  %451 = vmatmul.bf16.gmra.mxu0 %v305
  %v452 = vpop.f32.mrf.mxu0
  %v453 = vadd.f32 %v177, %v452
  %v454 = vpop.f32.mrf.mxu0
  %v455 = vadd.f32 %v177, %v454
  %456 = vmatmul.bf16.gmra.mxu0 %v308
  %v457 = vpop.f32.mrf.mxu0
  %v458 = vadd.f32 %v177, %v457
  %v459 = vpop.f32.mrf.mxu0
  %v460 = vadd.f32 %v177, %v459
  %461 = vmatmul.bf16.gmra.mxu0 %v311
  %v462 = vpop.f32.mrf.mxu0
  %v463 = vadd.f32 %v177, %v462
  %v464 = vpop.f32.mrf.mxu0
  %v465 = vadd.f32 %v177, %v464
  %466 = vmatmul.bf16.gmra.mxu0 %v314
  %v467 = vpop.f32.mrf.mxu0
  %v468 = vadd.f32 %v177, %v467
  %v469 = vpop.f32.mrf.mxu0
  %v470 = vadd.f32 %v177, %v469
  %471 = vmatmul.bf16.gmra.mxu0 %v317
  %v472 = vpop.f32.mrf.mxu0
  %v473 = vadd.f32 %v177, %v472
  %v474 = vpop.f32.mrf.mxu0
  %v475 = vadd.f32 %v177, %v474
  %476 = vmatmul.bf16.gmra.mxu0 %v320
  %v477 = vpop.f32.mrf.mxu0
  %v478 = vadd.f32 %v177, %v477
  %v479 = vpop.f32.mrf.mxu0
  %v480 = vadd.f32 %v177, %v479
  %481 = vmatmul.bf16.gmra.mxu0 %v323
  %v482 = vpop.f32.mrf.mxu0
  %v483 = vadd.f32 %v177, %v482
  %v484 = vpop.f32.mrf.mxu0
  %v485 = vadd.f32 %v177, %v484
  %486 = vmatmul.bf16.gmra.mxu0 %v326
  %v487 = vpop.f32.mrf.mxu0
  %v488 = vadd.f32 %v177, %v487
  %v489 = vpop.f32.mrf.mxu0
  %v490 = vadd.f32 %v177, %v489
  %491 = vmatmul.bf16.gmra.mxu0 %v329
  %v492 = vpop.f32.mrf.mxu0
  %v493 = vadd.f32 %v177, %v492
  %v494 = vpop.f32.mrf.mxu0
  %v495 = vadd.f32 %v177, %v494
  %496 = vmatmul.bf16.gmra.mxu0 %v332
  %v497 = vpop.f32.mrf.mxu0
  %v498 = vadd.f32 %v177, %v497
  %v499 = vpop.f32.mrf.mxu0
  %v500 = vadd.f32 %v177, %v499
  %501 = vmatmul.bf16.gmra.mxu0 %v335
  %v502 = vpop.f32.mrf.mxu0
  %v503 = vadd.f32 %v177, %v502
  %v504 = vpop.f32.mrf.mxu0
  %v505 = vadd.f32 %v177, %v504
  %506 = vmatmul.bf16.gmra.mxu0 %v338
  %v507 = vpop.f32.mrf.mxu0
  %v508 = vadd.f32 %v177, %v507
  %v509 = vpop.f32.mrf.mxu0
  %v510 = vadd.f32 %v177, %v509
  %511 = vmatmul.bf16.gmra.mxu0 %v341
  %v512 = vpop.f32.mrf.mxu0
  %v513 = vadd.f32 %v177, %v512
  %v514 = vpop.f32.mrf.mxu0
  %v515 = vadd.f32 %v177, %v514
  %516 = vmatmul.bf16.gmra.mxu0 %v344
  %v517 = vpop.f32.mrf.mxu0
  %v518 = vadd.f32 %v177, %v517
  %v519 = vpop.f32.mrf.mxu0
  %v520 = vadd.f32 %v177, %v519
  %521 = vmatmul.bf16.gmra.mxu0 %v347
  %v522 = vpop.f32.mrf.mxu0
  %v523 = vadd.f32 %v177, %v522
  %v524 = vpop.f32.mrf.mxu0
  %v525 = vadd.f32 %v177, %v524
  %526 = vdwg.mxu0
  %v527 = vmax.f32 %v359, 0.0
  %v528 = vmax.f32 %v448, 0.0
  %v529 = vmax.f32 %v361, 0.0
  %v530 = vmax.f32 %v450, 0.0
  %v531 = vmax.f32 %v364, 0.0
  %v532 = vmax.f32 %v453, 0.0
  %v533 = vmax.f32 %v366, 0.0
  %v534 = vmax.f32 %v455, 0.0
  %v535 = vmax.f32 %v369, 0.0
  %v536 = vmax.f32 %v458, 0.0
  %v537 = vmax.f32 %v371, 0.0
  %v538 = vmax.f32 %v460, 0.0
  %v539 = vmax.f32 %v374, 0.0
  %v540 = vmax.f32 %v463, 0.0
  %v541 = vmax.f32 %v376, 0.0
  %v542 = vmax.f32 %v465, 0.0
  %v543 = vmax.f32 %v379, 0.0
  %v544 = vmax.f32 %v468, 0.0
  %v545 = vmax.f32 %v381, 0.0
  %v546 = vmax.f32 %v470, 0.0
  %v547 = vmax.f32 %v384, 0.0
  %v548 = vmax.f32 %v473, 0.0
  %v549 = vmax.f32 %v386, 0.0
  %v550 = vmax.f32 %v475, 0.0
  %v551 = vmax.f32 %v389, 0.0
  %v552 = vmax.f32 %v478, 0.0
  %v553 = vmax.f32 %v391, 0.0
  %v554 = vmax.f32 %v480, 0.0
  %v555 = vmax.f32 %v394, 0.0
  %v556 = vmax.f32 %v483, 0.0
  %v557 = vmax.f32 %v396, 0.0
  %v558 = vmax.f32 %v485, 0.0
  %v559 = vmax.f32 %v399, 0.0
  %v560 = vmax.f32 %v488, 0.0
  %v561 = vmax.f32 %v401, 0.0
  %v562 = vmax.f32 %v490, 0.0
  %v563 = vmax.f32 %v404, 0.0
  %v564 = vmax.f32 %v493, 0.0
  %v565 = vmax.f32 %v406, 0.0
  %v566 = vmax.f32 %v495, 0.0
  %v567 = vmax.f32 %v409, 0.0
  %v568 = vmax.f32 %v498, 0.0
  %v569 = vmax.f32 %v411, 0.0
  %v570 = vmax.f32 %v500, 0.0
  %v571 = vmax.f32 %v414, 0.0
  %v572 = vmax.f32 %v503, 0.0
  %v573 = vmax.f32 %v416, 0.0
  %v574 = vmax.f32 %v505, 0.0
  %v575 = vmax.f32 %v419, 0.0
  %v576 = vmax.f32 %v508, 0.0
  %v577 = vmax.f32 %v421, 0.0
  %v578 = vmax.f32 %v510, 0.0
  %v579 = vmax.f32 %v424, 0.0
  %v580 = vmax.f32 %v513, 0.0
  %v581 = vmax.f32 %v426, 0.0
  %v582 = vmax.f32 %v515, 0.0
  %v583 = vmax.f32 %v429, 0.0
  %v584 = vmax.f32 %v518, 0.0
  %v585 = vmax.f32 %v431, 0.0
  %v586 = vmax.f32 %v520, 0.0
  %v587 = vmax.f32 %v434, 0.0
  %v588 = vmax.f32 %v523, 0.0
  %v589 = vmax.f32 %v436, 0.0
  %v590 = vmax.f32 %v525, 0.0
  %v591 = vand.u32 2147483647, %v359
  %v592 = vand.u32 2147483647, %v448
  %v593 = vand.u32 2147483647, %v361
  %v594 = vand.u32 2147483647, %v450
  %v595 = vand.u32 2147483647, %v364
  %v596 = vand.u32 2147483647, %v453
  %v597 = vand.u32 2147483647, %v366
  %v598 = vand.u32 2147483647, %v455
  %v599 = vand.u32 2147483647, %v369
  %v600 = vand.u32 2147483647, %v458
  %v601 = vand.u32 2147483647, %v371
  %v602 = vand.u32 2147483647, %v460
  %v603 = vand.u32 2147483647, %v374
  %v604 = vand.u32 2147483647, %v463
  %v605 = vand.u32 2147483647, %v376
  %v606 = vand.u32 2147483647, %v465
  %v607 = vand.u32 2147483647, %v379
  %v608 = vand.u32 2147483647, %v468
  %v609 = vand.u32 2147483647, %v381
  %v610 = vand.u32 2147483647, %v470
  %v611 = vand.u32 2147483647, %v384
  %v612 = vand.u32 2147483647, %v473
  %v613 = vand.u32 2147483647, %v386
  %v614 = vand.u32 2147483647, %v475
  %v615 = vand.u32 2147483647, %v389
  %v616 = vand.u32 2147483647, %v478
  %v617 = vand.u32 2147483647, %v391
  %v618 = vand.u32 2147483647, %v480
  %v619 = vand.u32 2147483647, %v394
  %v620 = vand.u32 2147483647, %v483
  %v621 = vand.u32 2147483647, %v396
  %v622 = vand.u32 2147483647, %v485
  %v623 = vand.u32 2147483647, %v399
  %v624 = vand.u32 2147483647, %v488
  %v625 = vand.u32 2147483647, %v401
  %v626 = vand.u32 2147483647, %v490
  %v627 = vand.u32 2147483647, %v404
  %v628 = vand.u32 2147483647, %v493
  %v629 = vand.u32 2147483647, %v406
  %v630 = vand.u32 2147483647, %v495
  %v631 = vand.u32 2147483647, %v409
  %v632 = vand.u32 2147483647, %v498
  %v633 = vand.u32 2147483647, %v411
  %v634 = vand.u32 2147483647, %v500
  %v635 = vand.u32 2147483647, %v414
  %v636 = vand.u32 2147483647, %v503
  %v637 = vand.u32 2147483647, %v416
  %v638 = vand.u32 2147483647, %v505
  %v639 = vand.u32 2147483647, %v419
  %v640 = vand.u32 2147483647, %v508
  %v641 = vand.u32 2147483647, %v421
  %v642 = vand.u32 2147483647, %v510
  %v643 = vand.u32 2147483647, %v424
  %v644 = vand.u32 2147483647, %v513
  %v645 = vand.u32 2147483647, %v426
  %v646 = vand.u32 2147483647, %v515
  %v647 = vand.u32 2147483647, %v429
  %v648 = vand.u32 2147483647, %v518
  %v649 = vand.u32 2147483647, %v431
  %v650 = vand.u32 2147483647, %v520
  %v651 = vand.u32 2147483647, %v434
  %v652 = vand.u32 2147483647, %v523
  %v653 = vand.u32 2147483647, %v436
  %v654 = vand.u32 2147483647, %v525
  %v655 = vsub.f32 0.0, %v591
  %v656 = vsub.f32 0.0, %v592
  %v657 = vsub.f32 0.0, %v593
  %v658 = vsub.f32 0.0, %v594
  %v659 = vsub.f32 0.0, %v595
  %v660 = vsub.f32 0.0, %v596
  %v661 = vsub.f32 0.0, %v597
  %v662 = vsub.f32 0.0, %v598
  %v663 = vsub.f32 0.0, %v599
  %v664 = vsub.f32 0.0, %v600
  %v665 = vsub.f32 0.0, %v601
  %v666 = vsub.f32 0.0, %v602
  %v667 = vsub.f32 0.0, %v603
  %v668 = vsub.f32 0.0, %v604
  %v669 = vsub.f32 0.0, %v605
  %v670 = vsub.f32 0.0, %v606
  %v671 = vsub.f32 0.0, %v607
  %v672 = vsub.f32 0.0, %v608
  %v673 = vsub.f32 0.0, %v609
  %v674 = vsub.f32 0.0, %v610
  %v675 = vsub.f32 0.0, %v611
  %v676 = vsub.f32 0.0, %v612
  %v677 = vsub.f32 0.0, %v613
  %v678 = vsub.f32 0.0, %v614
  %v679 = vsub.f32 0.0, %v615
  %v680 = vsub.f32 0.0, %v616
  %v681 = vsub.f32 0.0, %v617
  %v682 = vsub.f32 0.0, %v618
  %v683 = vsub.f32 0.0, %v619
  %v684 = vsub.f32 0.0, %v620
  %v685 = vsub.f32 0.0, %v621
  %v686 = vsub.f32 0.0, %v622
  %v687 = vsub.f32 0.0, %v623
  %v688 = vsub.f32 0.0, %v624
  %v689 = vsub.f32 0.0, %v625
  %v690 = vsub.f32 0.0, %v626
  %v691 = vsub.f32 0.0, %v627
  %v692 = vsub.f32 0.0, %v628
  %v693 = vsub.f32 0.0, %v629
  %v694 = vsub.f32 0.0, %v630
  %v695 = vsub.f32 0.0, %v631
  %v696 = vsub.f32 0.0, %v632
  %v697 = vsub.f32 0.0, %v633
  %v698 = vsub.f32 0.0, %v634
  %v699 = vsub.f32 0.0, %v635
  %v700 = vsub.f32 0.0, %v636
  %v701 = vsub.f32 0.0, %v637
  %v702 = vsub.f32 0.0, %v638
  %v703 = vsub.f32 0.0, %v639
  %v704 = vsub.f32 0.0, %v640
  %v705 = vsub.f32 0.0, %v641
  %v706 = vsub.f32 0.0, %v642
  %v707 = vsub.f32 0.0, %v643
  %v708 = vsub.f32 0.0, %v644
  %v709 = vsub.f32 0.0, %v645
  %v710 = vsub.f32 0.0, %v646
  %v711 = vsub.f32 0.0, %v647
  %v712 = vsub.f32 0.0, %v648
  %v713 = vsub.f32 0.0, %v649
  %v714 = vsub.f32 0.0, %v650
  %v715 = vsub.f32 0.0, %v651
  %v716 = vsub.f32 0.0, %v652
  %v717 = vsub.f32 0.0, %v653
  %v718 = vsub.f32 0.0, %v654
  %v719 = vmul.f32 %v655, 1.442695
  %v720 = vpow.pop %v719
  %v721 = vmul.f32 %v656, 1.442695
  %v722 = vpow.pop %v721
  %v723 = vmul.f32 %v657, 1.442695
  %v724 = vpow.pop %v723
  %v725 = vmul.f32 %v658, 1.442695
  %v726 = vpow.pop %v725
  %v727 = vmul.f32 %v659, 1.442695
  %v728 = vpow.pop %v727
  %v729 = vmul.f32 %v660, 1.442695
  %v730 = vpow.pop %v729
  %v731 = vmul.f32 %v661, 1.442695
  %v732 = vpow.pop %v731
  %v733 = vmul.f32 %v662, 1.442695
  %v734 = vpow.pop %v733
  %v735 = vmul.f32 %v663, 1.442695
  %v736 = vpow.pop %v735
  %v737 = vmul.f32 %v664, 1.442695
  %v738 = vpow.pop %v737
  %v739 = vmul.f32 %v665, 1.442695
  %v740 = vpow.pop %v739
  %v741 = vmul.f32 %v666, 1.442695
  %v742 = vpow.pop %v741
  %v743 = vmul.f32 %v667, 1.442695
  %v744 = vpow.pop %v743
  %v745 = vmul.f32 %v668, 1.442695
  %v746 = vpow.pop %v745
  %v747 = vmul.f32 %v669, 1.442695
  %v748 = vpow.pop %v747
  %v749 = vmul.f32 %v670, 1.442695
  %v750 = vpow.pop %v749
  %v751 = vmul.f32 %v671, 1.442695
  %v752 = vpow.pop %v751
  %v753 = vmul.f32 %v672, 1.442695
  %v754 = vpow.pop %v753
  %v755 = vmul.f32 %v673, 1.442695
  %v756 = vpow.pop %v755
  %v757 = vmul.f32 %v674, 1.442695
  %v758 = vpow.pop %v757
  %v759 = vmul.f32 %v675, 1.442695
  %v760 = vpow.pop %v759
  %v761 = vmul.f32 %v676, 1.442695
  %v762 = vpow.pop %v761
  %v763 = vmul.f32 %v677, 1.442695
  %v764 = vpow.pop %v763
  %v765 = vmul.f32 %v678, 1.442695
  %v766 = vpow.pop %v765
  %v767 = vmul.f32 %v679, 1.442695
  %v768 = vpow.pop %v767
  %v769 = vmul.f32 %v680, 1.442695
  %v770 = vpow.pop %v769
  %v771 = vmul.f32 %v681, 1.442695
  %v772 = vpow.pop %v771
  %v773 = vmul.f32 %v682, 1.442695
  %v774 = vpow.pop %v773
  %v775 = vmul.f32 %v683, 1.442695
  %v776 = vpow.pop %v775
  %v777 = vmul.f32 %v684, 1.442695
  %v778 = vpow.pop %v777
  %v779 = vmul.f32 %v685, 1.442695
  %v780 = vpow.pop %v779
  %v781 = vmul.f32 %v686, 1.442695
  %v782 = vpow.pop %v781
  %v783 = vmul.f32 %v687, 1.442695
  %v784 = vpow.pop %v783
  %v785 = vmul.f32 %v688, 1.442695
  %v786 = vpow.pop %v785
  %v787 = vmul.f32 %v689, 1.442695
  %v788 = vpow.pop %v787
  %v789 = vmul.f32 %v690, 1.442695
  %v790 = vpow.pop %v789
  %v791 = vmul.f32 %v691, 1.442695
  %v792 = vpow.pop %v791
  %v793 = vmul.f32 %v692, 1.442695
  %v794 = vpow.pop %v793
  %v795 = vmul.f32 %v693, 1.442695
  %v796 = vpow.pop %v795
  %v797 = vmul.f32 %v694, 1.442695
  %v798 = vpow.pop %v797
  %v799 = vmul.f32 %v695, 1.442695
  %v800 = vpow.pop %v799
  %v801 = vmul.f32 %v696, 1.442695
  %v802 = vpow.pop %v801
  %v803 = vmul.f32 %v697, 1.442695
  %v804 = vpow.pop %v803
  %v805 = vmul.f32 %v698, 1.442695
  %v806 = vpow.pop %v805
  %v807 = vmul.f32 %v699, 1.442695
  %v808 = vpow.pop %v807
  %v809 = vmul.f32 %v700, 1.442695
  %v810 = vpow.pop %v809
  %v811 = vmul.f32 %v701, 1.442695
  %v812 = vpow.pop %v811
  %v813 = vmul.f32 %v702, 1.442695
  %v814 = vpow.pop %v813
  %v815 = vmul.f32 %v703, 1.442695
  %v816 = vpow.pop %v815
  %v817 = vmul.f32 %v704, 1.442695
  %v818 = vpow.pop %v817
  %v819 = vmul.f32 %v705, 1.442695
  %v820 = vpow.pop %v819
  %v821 = vmul.f32 %v706, 1.442695
  %v822 = vpow.pop %v821
  %v823 = vmul.f32 %v707, 1.442695
  %v824 = vpow.pop %v823
  %v825 = vmul.f32 %v708, 1.442695
  %v826 = vpow.pop %v825
  %v827 = vmul.f32 %v709, 1.442695
  %v828 = vpow.pop %v827
  %v829 = vmul.f32 %v710, 1.442695
  %v830 = vpow.pop %v829
  %v831 = vmul.f32 %v711, 1.442695
  %v832 = vpow.pop %v831
  %v833 = vmul.f32 %v712, 1.442695
  %v834 = vpow.pop %v833
  %v835 = vmul.f32 %v713, 1.442695
  %v836 = vpow.pop %v835
  %v837 = vmul.f32 %v714, 1.442695
  %v838 = vpow.pop %v837
  %v839 = vmul.f32 %v715, 1.442695
  %v840 = vpow.pop %v839
  %v841 = vmul.f32 %v716, 1.442695
  %v842 = vpow.pop %v841
  %v843 = vmul.f32 %v717, 1.442695
  %v844 = vpow.pop %v843
  %v845 = vmul.f32 %v718, 1.442695
  %v846 = vpow.pop %v845
  %v847 = vadd.f32 %v720, 1.0
  %v848 = vlog2.pop %v847
  %v849 = vmul.f32 %v848, 0.6931472
  %v850 = vmul.f32 -0.5, %v720
  %v851 = vadd.f32 %v850, 1.0
  %v852 = vmul.f32 %v851, %v720
  %v853 = vand.u32 2147483647, %v720
  %vm854 = vcmp.lt.f32.partialorder %v853, 0.0004427343
  %v855 = vsel %vm854, %v852, %v849
  %v856 = vadd.f32 %v722, 1.0
  %v857 = vlog2.pop %v856
  %v858 = vmul.f32 %v857, 0.6931472
  %v859 = vmul.f32 -0.5, %v722
  %v860 = vadd.f32 %v859, 1.0
  %v861 = vmul.f32 %v860, %v722
  %v862 = vand.u32 2147483647, %v722
  %vm863 = vcmp.lt.f32.partialorder %v862, 0.0004427343
  %v864 = vsel %vm863, %v861, %v858
  %v865 = vadd.f32 %v724, 1.0
  %v866 = vlog2.pop %v865
  %v867 = vmul.f32 %v866, 0.6931472
  %v868 = vmul.f32 -0.5, %v724
  %v869 = vadd.f32 %v868, 1.0
  %v870 = vmul.f32 %v869, %v724
  %v871 = vand.u32 2147483647, %v724
  %vm872 = vcmp.lt.f32.partialorder %v871, 0.0004427343
  %v873 = vsel %vm872, %v870, %v867
  %v874 = vadd.f32 %v726, 1.0
  %v875 = vlog2.pop %v874
  %v876 = vmul.f32 %v875, 0.6931472
  %v877 = vmul.f32 -0.5, %v726
  %v878 = vadd.f32 %v877, 1.0
  %v879 = vmul.f32 %v878, %v726
  %v880 = vand.u32 2147483647, %v726
  %vm881 = vcmp.lt.f32.partialorder %v880, 0.0004427343
  %v882 = vsel %vm881, %v879, %v876
  %v883 = vadd.f32 %v728, 1.0
  %v884 = vlog2.pop %v883
  %v885 = vmul.f32 %v884, 0.6931472
  %v886 = vmul.f32 -0.5, %v728
  %v887 = vadd.f32 %v886, 1.0
  %v888 = vmul.f32 %v887, %v728
  %v889 = vand.u32 2147483647, %v728
  %vm890 = vcmp.lt.f32.partialorder %v889, 0.0004427343
  %v891 = vsel %vm890, %v888, %v885
  %v892 = vadd.f32 %v730, 1.0
  %v893 = vlog2.pop %v892
  %v894 = vmul.f32 %v893, 0.6931472
  %v895 = vmul.f32 -0.5, %v730
  %v896 = vadd.f32 %v895, 1.0
  %v897 = vmul.f32 %v896, %v730
  %v898 = vand.u32 2147483647, %v730
  %vm899 = vcmp.lt.f32.partialorder %v898, 0.0004427343
  %v900 = vsel %vm899, %v897, %v894
  %v901 = vadd.f32 %v732, 1.0
  %v902 = vlog2.pop %v901
  %v903 = vmul.f32 %v902, 0.6931472
  %v904 = vmul.f32 -0.5, %v732
  %v905 = vadd.f32 %v904, 1.0
  %v906 = vmul.f32 %v905, %v732
  %v907 = vand.u32 2147483647, %v732
  %vm908 = vcmp.lt.f32.partialorder %v907, 0.0004427343
  %v909 = vsel %vm908, %v906, %v903
  %v910 = vadd.f32 %v734, 1.0
  %v911 = vlog2.pop %v910
  %v912 = vmul.f32 %v911, 0.6931472
  %v913 = vmul.f32 -0.5, %v734
  %v914 = vadd.f32 %v913, 1.0
  %v915 = vmul.f32 %v914, %v734
  %v916 = vand.u32 2147483647, %v734
  %vm917 = vcmp.lt.f32.partialorder %v916, 0.0004427343
  %v918 = vsel %vm917, %v915, %v912
  %v919 = vadd.f32 %v736, 1.0
  %v920 = vlog2.pop %v919
  %v921 = vmul.f32 %v920, 0.6931472
  %v922 = vmul.f32 -0.5, %v736
  %v923 = vadd.f32 %v922, 1.0
  %v924 = vmul.f32 %v923, %v736
  %v925 = vand.u32 2147483647, %v736
  %vm926 = vcmp.lt.f32.partialorder %v925, 0.0004427343
  %v927 = vsel %vm926, %v924, %v921
  %v928 = vadd.f32 %v738, 1.0
  %v929 = vlog2.pop %v928
  %v930 = vmul.f32 %v929, 0.6931472
  %v931 = vmul.f32 -0.5, %v738
  %v932 = vadd.f32 %v931, 1.0
  %v933 = vmul.f32 %v932, %v738
  %v934 = vand.u32 2147483647, %v738
  %vm935 = vcmp.lt.f32.partialorder %v934, 0.0004427343
  %v936 = vsel %vm935, %v933, %v930
  %v937 = vadd.f32 %v740, 1.0
  %v938 = vlog2.pop %v937
  %v939 = vmul.f32 %v938, 0.6931472
  %v940 = vmul.f32 -0.5, %v740
  %v941 = vadd.f32 %v940, 1.0
  %v942 = vmul.f32 %v941, %v740
  %v943 = vand.u32 2147483647, %v740
  %vm944 = vcmp.lt.f32.partialorder %v943, 0.0004427343
  %v945 = vsel %vm944, %v942, %v939
  %v946 = vadd.f32 %v742, 1.0
  %v947 = vlog2.pop %v946
  %v948 = vmul.f32 %v947, 0.6931472
  %v949 = vmul.f32 -0.5, %v742
  %v950 = vadd.f32 %v949, 1.0
  %v951 = vmul.f32 %v950, %v742
  %v952 = vand.u32 2147483647, %v742
  %vm953 = vcmp.lt.f32.partialorder %v952, 0.0004427343
  %v954 = vsel %vm953, %v951, %v948
  %v955 = vadd.f32 %v744, 1.0
  %v956 = vlog2.pop %v955
  %v957 = vmul.f32 %v956, 0.6931472
  %v958 = vmul.f32 -0.5, %v744
  %v959 = vadd.f32 %v958, 1.0
  %v960 = vmul.f32 %v959, %v744
  %v961 = vand.u32 2147483647, %v744
  %vm962 = vcmp.lt.f32.partialorder %v961, 0.0004427343
  %v963 = vsel %vm962, %v960, %v957
  %v964 = vadd.f32 %v746, 1.0
  %v965 = vlog2.pop %v964
  %v966 = vmul.f32 %v965, 0.6931472
  %v967 = vmul.f32 -0.5, %v746
  %v968 = vadd.f32 %v967, 1.0
  %v969 = vmul.f32 %v968, %v746
  %v970 = vand.u32 2147483647, %v746
  %vm971 = vcmp.lt.f32.partialorder %v970, 0.0004427343
  %v972 = vsel %vm971, %v969, %v966
  %v973 = vadd.f32 %v748, 1.0
  %v974 = vlog2.pop %v973
  %v975 = vmul.f32 %v974, 0.6931472
  %v976 = vmul.f32 -0.5, %v748
  %v977 = vadd.f32 %v976, 1.0
  %v978 = vmul.f32 %v977, %v748
  %v979 = vand.u32 2147483647, %v748
  %vm980 = vcmp.lt.f32.partialorder %v979, 0.0004427343
  %v981 = vsel %vm980, %v978, %v975
  %v982 = vadd.f32 %v750, 1.0
  %v983 = vlog2.pop %v982
  %v984 = vmul.f32 %v983, 0.6931472
  %v985 = vmul.f32 -0.5, %v750
  %v986 = vadd.f32 %v985, 1.0
  %v987 = vmul.f32 %v986, %v750
  %v988 = vand.u32 2147483647, %v750
  %vm989 = vcmp.lt.f32.partialorder %v988, 0.0004427343
  %v990 = vsel %vm989, %v987, %v984
  %v991 = vadd.f32 %v752, 1.0
  %v992 = vlog2.pop %v991
  %v993 = vmul.f32 %v992, 0.6931472
  %v994 = vmul.f32 -0.5, %v752
  %v995 = vadd.f32 %v994, 1.0
  %v996 = vmul.f32 %v995, %v752
  %v997 = vand.u32 2147483647, %v752
  %vm998 = vcmp.lt.f32.partialorder %v997, 0.0004427343
  %v999 = vsel %vm998, %v996, %v993
  %v1000 = vadd.f32 %v754, 1.0
  %v1001 = vlog2.pop %v1000
  %v1002 = vmul.f32 %v1001, 0.6931472
  %v1003 = vmul.f32 -0.5, %v754
  %v1004 = vadd.f32 %v1003, 1.0
  %v1005 = vmul.f32 %v1004, %v754
  %v1006 = vand.u32 2147483647, %v754
  %vm1007 = vcmp.lt.f32.partialorder %v1006, 0.0004427343
  %v1008 = vsel %vm1007, %v1005, %v1002
  %v1009 = vadd.f32 %v756, 1.0
  %v1010 = vlog2.pop %v1009
  %v1011 = vmul.f32 %v1010, 0.6931472
  %v1012 = vmul.f32 -0.5, %v756
  %v1013 = vadd.f32 %v1012, 1.0
  %v1014 = vmul.f32 %v1013, %v756
  %v1015 = vand.u32 2147483647, %v756
  %vm1016 = vcmp.lt.f32.partialorder %v1015, 0.0004427343
  %v1017 = vsel %vm1016, %v1014, %v1011
  %v1018 = vadd.f32 %v758, 1.0
  %v1019 = vlog2.pop %v1018
  %v1020 = vmul.f32 %v1019, 0.6931472
  %v1021 = vmul.f32 -0.5, %v758
  %v1022 = vadd.f32 %v1021, 1.0
  %v1023 = vmul.f32 %v1022, %v758
  %v1024 = vand.u32 2147483647, %v758
  %vm1025 = vcmp.lt.f32.partialorder %v1024, 0.0004427343
  %v1026 = vsel %vm1025, %v1023, %v1020
  %v1027 = vadd.f32 %v760, 1.0
  %v1028 = vlog2.pop %v1027
  %v1029 = vmul.f32 %v1028, 0.6931472
  %v1030 = vmul.f32 -0.5, %v760
  %v1031 = vadd.f32 %v1030, 1.0
  %v1032 = vmul.f32 %v1031, %v760
  %v1033 = vand.u32 2147483647, %v760
  %vm1034 = vcmp.lt.f32.partialorder %v1033, 0.0004427343
  %v1035 = vsel %vm1034, %v1032, %v1029
  %v1036 = vadd.f32 %v762, 1.0
  %v1037 = vlog2.pop %v1036
  %v1038 = vmul.f32 %v1037, 0.6931472
  %v1039 = vmul.f32 -0.5, %v762
  %v1040 = vadd.f32 %v1039, 1.0
  %v1041 = vmul.f32 %v1040, %v762
  %v1042 = vand.u32 2147483647, %v762
  %vm1043 = vcmp.lt.f32.partialorder %v1042, 0.0004427343
  %v1044 = vsel %vm1043, %v1041, %v1038
  %v1045 = vadd.f32 %v764, 1.0
  %v1046 = vlog2.pop %v1045
  %v1047 = vmul.f32 %v1046, 0.6931472
  %v1048 = vmul.f32 -0.5, %v764
  %v1049 = vadd.f32 %v1048, 1.0
  %v1050 = vmul.f32 %v1049, %v764
  %v1051 = vand.u32 2147483647, %v764
  %vm1052 = vcmp.lt.f32.partialorder %v1051, 0.0004427343
  %v1053 = vsel %vm1052, %v1050, %v1047
  %v1054 = vadd.f32 %v766, 1.0
  %v1055 = vlog2.pop %v1054
  %v1056 = vmul.f32 %v1055, 0.6931472
  %v1057 = vmul.f32 -0.5, %v766
  %v1058 = vadd.f32 %v1057, 1.0
  %v1059 = vmul.f32 %v1058, %v766
  %v1060 = vand.u32 2147483647, %v766
  %vm1061 = vcmp.lt.f32.partialorder %v1060, 0.0004427343
  %v1062 = vsel %vm1061, %v1059, %v1056
  %v1063 = vadd.f32 %v768, 1.0
  %v1064 = vlog2.pop %v1063
  %v1065 = vmul.f32 %v1064, 0.6931472
  %v1066 = vmul.f32 -0.5, %v768
  %v1067 = vadd.f32 %v1066, 1.0
  %v1068 = vmul.f32 %v1067, %v768
  %v1069 = vand.u32 2147483647, %v768
  %vm1070 = vcmp.lt.f32.partialorder %v1069, 0.0004427343
  %v1071 = vsel %vm1070, %v1068, %v1065
  %v1072 = vadd.f32 %v770, 1.0
  %v1073 = vlog2.pop %v1072
  %v1074 = vmul.f32 %v1073, 0.6931472
  %v1075 = vmul.f32 -0.5, %v770
  %v1076 = vadd.f32 %v1075, 1.0
  %v1077 = vmul.f32 %v1076, %v770
  %v1078 = vand.u32 2147483647, %v770
  %vm1079 = vcmp.lt.f32.partialorder %v1078, 0.0004427343
  %v1080 = vsel %vm1079, %v1077, %v1074
  %v1081 = vadd.f32 %v772, 1.0
  %v1082 = vlog2.pop %v1081
  %v1083 = vmul.f32 %v1082, 0.6931472
  %v1084 = vmul.f32 -0.5, %v772
  %v1085 = vadd.f32 %v1084, 1.0
  %v1086 = vmul.f32 %v1085, %v772
  %v1087 = vand.u32 2147483647, %v772
  %vm1088 = vcmp.lt.f32.partialorder %v1087, 0.0004427343
  %v1089 = vsel %vm1088, %v1086, %v1083
  %v1090 = vadd.f32 %v774, 1.0
  %v1091 = vlog2.pop %v1090
  %v1092 = vmul.f32 %v1091, 0.6931472
  %v1093 = vmul.f32 -0.5, %v774
  %v1094 = vadd.f32 %v1093, 1.0
  %v1095 = vmul.f32 %v1094, %v774
  %v1096 = vand.u32 2147483647, %v774
  %vm1097 = vcmp.lt.f32.partialorder %v1096, 0.0004427343
  %v1098 = vsel %vm1097, %v1095, %v1092
  %v1099 = vadd.f32 %v776, 1.0
  %v1100 = vlog2.pop %v1099
  %v1101 = vmul.f32 %v1100, 0.6931472
  %v1102 = vmul.f32 -0.5, %v776
  %v1103 = vadd.f32 %v1102, 1.0
  %v1104 = vmul.f32 %v1103, %v776
  %v1105 = vand.u32 2147483647, %v776
  %vm1106 = vcmp.lt.f32.partialorder %v1105, 0.0004427343
  %v1107 = vsel %vm1106, %v1104, %v1101
  %v1108 = vadd.f32 %v778, 1.0
  %v1109 = vlog2.pop %v1108
  %v1110 = vmul.f32 %v1109, 0.6931472
  %v1111 = vmul.f32 -0.5, %v778
  %v1112 = vadd.f32 %v1111, 1.0
  %v1113 = vmul.f32 %v1112, %v778
  %v1114 = vand.u32 2147483647, %v778
  %vm1115 = vcmp.lt.f32.partialorder %v1114, 0.0004427343
  %v1116 = vsel %vm1115, %v1113, %v1110
  %v1117 = vadd.f32 %v780, 1.0
  %v1118 = vlog2.pop %v1117
  %v1119 = vmul.f32 %v1118, 0.6931472
  %v1120 = vmul.f32 -0.5, %v780
  %v1121 = vadd.f32 %v1120, 1.0
  %v1122 = vmul.f32 %v1121, %v780
  %v1123 = vand.u32 2147483647, %v780
  %vm1124 = vcmp.lt.f32.partialorder %v1123, 0.0004427343
  %v1125 = vsel %vm1124, %v1122, %v1119
  %v1126 = vadd.f32 %v782, 1.0
  %v1127 = vlog2.pop %v1126
  %v1128 = vmul.f32 %v1127, 0.6931472
  %v1129 = vmul.f32 -0.5, %v782
  %v1130 = vadd.f32 %v1129, 1.0
  %v1131 = vmul.f32 %v1130, %v782
  %v1132 = vand.u32 2147483647, %v782
  %vm1133 = vcmp.lt.f32.partialorder %v1132, 0.0004427343
  %v1134 = vsel %vm1133, %v1131, %v1128
  %v1135 = vadd.f32 %v784, 1.0
  %v1136 = vlog2.pop %v1135
  %v1137 = vmul.f32 %v1136, 0.6931472
  %v1138 = vmul.f32 -0.5, %v784
  %v1139 = vadd.f32 %v1138, 1.0
  %v1140 = vmul.f32 %v1139, %v784
  %v1141 = vand.u32 2147483647, %v784
  %vm1142 = vcmp.lt.f32.partialorder %v1141, 0.0004427343
  %v1143 = vsel %vm1142, %v1140, %v1137
  %v1144 = vadd.f32 %v786, 1.0
  %v1145 = vlog2.pop %v1144
  %v1146 = vmul.f32 %v1145, 0.6931472
  %v1147 = vmul.f32 -0.5, %v786
  %v1148 = vadd.f32 %v1147, 1.0
  %v1149 = vmul.f32 %v1148, %v786
  %v1150 = vand.u32 2147483647, %v786
  %vm1151 = vcmp.lt.f32.partialorder %v1150, 0.0004427343
  %v1152 = vsel %vm1151, %v1149, %v1146
  %v1153 = vadd.f32 %v788, 1.0
  %v1154 = vlog2.pop %v1153
  %v1155 = vmul.f32 %v1154, 0.6931472
  %v1156 = vmul.f32 -0.5, %v788
  %v1157 = vadd.f32 %v1156, 1.0
  %v1158 = vmul.f32 %v1157, %v788
  %v1159 = vand.u32 2147483647, %v788
  %vm1160 = vcmp.lt.f32.partialorder %v1159, 0.0004427343
  %v1161 = vsel %vm1160, %v1158, %v1155
  %v1162 = vadd.f32 %v790, 1.0
  %v1163 = vlog2.pop %v1162
  %v1164 = vmul.f32 %v1163, 0.6931472
  %v1165 = vmul.f32 -0.5, %v790
  %v1166 = vadd.f32 %v1165, 1.0
  %v1167 = vmul.f32 %v1166, %v790
  %v1168 = vand.u32 2147483647, %v790
  %vm1169 = vcmp.lt.f32.partialorder %v1168, 0.0004427343
  %v1170 = vsel %vm1169, %v1167, %v1164
  %v1171 = vadd.f32 %v792, 1.0
  %v1172 = vlog2.pop %v1171
  %v1173 = vmul.f32 %v1172, 0.6931472
  %v1174 = vmul.f32 -0.5, %v792
  %v1175 = vadd.f32 %v1174, 1.0
  %v1176 = vmul.f32 %v1175, %v792
  %v1177 = vand.u32 2147483647, %v792
  %vm1178 = vcmp.lt.f32.partialorder %v1177, 0.0004427343
  %v1179 = vsel %vm1178, %v1176, %v1173
  %v1180 = vadd.f32 %v794, 1.0
  %v1181 = vlog2.pop %v1180
  %v1182 = vmul.f32 %v1181, 0.6931472
  %v1183 = vmul.f32 -0.5, %v794
  %v1184 = vadd.f32 %v1183, 1.0
  %v1185 = vmul.f32 %v1184, %v794
  %v1186 = vand.u32 2147483647, %v794
  %vm1187 = vcmp.lt.f32.partialorder %v1186, 0.0004427343
  %v1188 = vsel %vm1187, %v1185, %v1182
  %v1189 = vadd.f32 %v796, 1.0
  %v1190 = vlog2.pop %v1189
  %v1191 = vmul.f32 %v1190, 0.6931472
  %v1192 = vmul.f32 -0.5, %v796
  %v1193 = vadd.f32 %v1192, 1.0
  %v1194 = vmul.f32 %v1193, %v796
  %v1195 = vand.u32 2147483647, %v796
  %vm1196 = vcmp.lt.f32.partialorder %v1195, 0.0004427343
  %v1197 = vsel %vm1196, %v1194, %v1191
  %v1198 = vadd.f32 %v798, 1.0
  %v1199 = vlog2.pop %v1198
  %v1200 = vmul.f32 %v1199, 0.6931472
  %v1201 = vmul.f32 -0.5, %v798
  %v1202 = vadd.f32 %v1201, 1.0
  %v1203 = vmul.f32 %v1202, %v798
  %v1204 = vand.u32 2147483647, %v798
  %vm1205 = vcmp.lt.f32.partialorder %v1204, 0.0004427343
  %v1206 = vsel %vm1205, %v1203, %v1200
  %v1207 = vadd.f32 %v800, 1.0
  %v1208 = vlog2.pop %v1207
  %v1209 = vmul.f32 %v1208, 0.6931472
  %v1210 = vmul.f32 -0.5, %v800
  %v1211 = vadd.f32 %v1210, 1.0
  %v1212 = vmul.f32 %v1211, %v800
  %v1213 = vand.u32 2147483647, %v800
  %vm1214 = vcmp.lt.f32.partialorder %v1213, 0.0004427343
  %v1215 = vsel %vm1214, %v1212, %v1209
  %v1216 = vadd.f32 %v802, 1.0
  %v1217 = vlog2.pop %v1216
  %v1218 = vmul.f32 %v1217, 0.6931472
  %v1219 = vmul.f32 -0.5, %v802
  %v1220 = vadd.f32 %v1219, 1.0
  %v1221 = vmul.f32 %v1220, %v802
  %v1222 = vand.u32 2147483647, %v802
  %vm1223 = vcmp.lt.f32.partialorder %v1222, 0.0004427343
  %v1224 = vsel %vm1223, %v1221, %v1218
  %v1225 = vadd.f32 %v804, 1.0
  %v1226 = vlog2.pop %v1225
  %v1227 = vmul.f32 %v1226, 0.6931472
  %v1228 = vmul.f32 -0.5, %v804
  %v1229 = vadd.f32 %v1228, 1.0
  %v1230 = vmul.f32 %v1229, %v804
  %v1231 = vand.u32 2147483647, %v804
  %vm1232 = vcmp.lt.f32.partialorder %v1231, 0.0004427343
  %v1233 = vsel %vm1232, %v1230, %v1227
  %v1234 = vadd.f32 %v806, 1.0
  %v1235 = vlog2.pop %v1234
  %v1236 = vmul.f32 %v1235, 0.6931472
  %v1237 = vmul.f32 -0.5, %v806
  %v1238 = vadd.f32 %v1237, 1.0
  %v1239 = vmul.f32 %v1238, %v806
  %v1240 = vand.u32 2147483647, %v806
  %vm1241 = vcmp.lt.f32.partialorder %v1240, 0.0004427343
  %v1242 = vsel %vm1241, %v1239, %v1236
  %v1243 = vadd.f32 %v808, 1.0
  %v1244 = vlog2.pop %v1243
  %v1245 = vmul.f32 %v1244, 0.6931472
  %v1246 = vmul.f32 -0.5, %v808
  %v1247 = vadd.f32 %v1246, 1.0
  %v1248 = vmul.f32 %v1247, %v808
  %v1249 = vand.u32 2147483647, %v808
  %vm1250 = vcmp.lt.f32.partialorder %v1249, 0.0004427343
  %v1251 = vsel %vm1250, %v1248, %v1245
  %v1252 = vadd.f32 %v810, 1.0
  %v1253 = vlog2.pop %v1252
  %v1254 = vmul.f32 %v1253, 0.6931472
  %v1255 = vmul.f32 -0.5, %v810
  %v1256 = vadd.f32 %v1255, 1.0
  %v1257 = vmul.f32 %v1256, %v810
  %v1258 = vand.u32 2147483647, %v810
  %vm1259 = vcmp.lt.f32.partialorder %v1258, 0.0004427343
  %v1260 = vsel %vm1259, %v1257, %v1254
  %v1261 = vadd.f32 %v812, 1.0
  %v1262 = vlog2.pop %v1261
  %v1263 = vmul.f32 %v1262, 0.6931472
  %v1264 = vmul.f32 -0.5, %v812
  %v1265 = vadd.f32 %v1264, 1.0
  %v1266 = vmul.f32 %v1265, %v812
  %v1267 = vand.u32 2147483647, %v812
  %vm1268 = vcmp.lt.f32.partialorder %v1267, 0.0004427343
  %v1269 = vsel %vm1268, %v1266, %v1263
  %v1270 = vadd.f32 %v814, 1.0
  %v1271 = vlog2.pop %v1270
  %v1272 = vmul.f32 %v1271, 0.6931472
  %v1273 = vmul.f32 -0.5, %v814
  %v1274 = vadd.f32 %v1273, 1.0
  %v1275 = vmul.f32 %v1274, %v814
  %v1276 = vand.u32 2147483647, %v814
  %vm1277 = vcmp.lt.f32.partialorder %v1276, 0.0004427343
  %v1278 = vsel %vm1277, %v1275, %v1272
  %v1279 = vadd.f32 %v816, 1.0
  %v1280 = vlog2.pop %v1279
  %v1281 = vmul.f32 %v1280, 0.6931472
  %v1282 = vmul.f32 -0.5, %v816
  %v1283 = vadd.f32 %v1282, 1.0
  %v1284 = vmul.f32 %v1283, %v816
  %v1285 = vand.u32 2147483647, %v816
  %vm1286 = vcmp.lt.f32.partialorder %v1285, 0.0004427343
  %v1287 = vsel %vm1286, %v1284, %v1281
  %v1288 = vadd.f32 %v818, 1.0
  %v1289 = vlog2.pop %v1288
  %v1290 = vmul.f32 %v1289, 0.6931472
  %v1291 = vmul.f32 -0.5, %v818
  %v1292 = vadd.f32 %v1291, 1.0
  %v1293 = vmul.f32 %v1292, %v818
  %v1294 = vand.u32 2147483647, %v818
  %vm1295 = vcmp.lt.f32.partialorder %v1294, 0.0004427343
  %v1296 = vsel %vm1295, %v1293, %v1290
  %v1297 = vadd.f32 %v820, 1.0
  %v1298 = vlog2.pop %v1297
  %v1299 = vmul.f32 %v1298, 0.6931472
  %v1300 = vmul.f32 -0.5, %v820
  %v1301 = vadd.f32 %v1300, 1.0
  %v1302 = vmul.f32 %v1301, %v820
  %v1303 = vand.u32 2147483647, %v820
  %vm1304 = vcmp.lt.f32.partialorder %v1303, 0.0004427343
  %v1305 = vsel %vm1304, %v1302, %v1299
  %v1306 = vadd.f32 %v822, 1.0
  %v1307 = vlog2.pop %v1306
  %v1308 = vmul.f32 %v1307, 0.6931472
  %v1309 = vmul.f32 -0.5, %v822
  %v1310 = vadd.f32 %v1309, 1.0
  %v1311 = vmul.f32 %v1310, %v822
  %v1312 = vand.u32 2147483647, %v822
  %vm1313 = vcmp.lt.f32.partialorder %v1312, 0.0004427343
  %v1314 = vsel %vm1313, %v1311, %v1308
  %v1315 = vadd.f32 %v824, 1.0
  %v1316 = vlog2.pop %v1315
  %v1317 = vmul.f32 %v1316, 0.6931472
  %v1318 = vmul.f32 -0.5, %v824
  %v1319 = vadd.f32 %v1318, 1.0
  %v1320 = vmul.f32 %v1319, %v824
  %v1321 = vand.u32 2147483647, %v824
  %vm1322 = vcmp.lt.f32.partialorder %v1321, 0.0004427343
  %v1323 = vsel %vm1322, %v1320, %v1317
  %v1324 = vadd.f32 %v826, 1.0
  %v1325 = vlog2.pop %v1324
  %v1326 = vmul.f32 %v1325, 0.6931472
  %v1327 = vmul.f32 -0.5, %v826
  %v1328 = vadd.f32 %v1327, 1.0
  %v1329 = vmul.f32 %v1328, %v826
  %v1330 = vand.u32 2147483647, %v826
  %vm1331 = vcmp.lt.f32.partialorder %v1330, 0.0004427343
  %v1332 = vsel %vm1331, %v1329, %v1326
  %v1333 = vadd.f32 %v828, 1.0
  %v1334 = vlog2.pop %v1333
  %v1335 = vmul.f32 %v1334, 0.6931472
  %v1336 = vmul.f32 -0.5, %v828
  %v1337 = vadd.f32 %v1336, 1.0
  %v1338 = vmul.f32 %v1337, %v828
  %v1339 = vand.u32 2147483647, %v828
  %vm1340 = vcmp.lt.f32.partialorder %v1339, 0.0004427343
  %v1341 = vsel %vm1340, %v1338, %v1335
  %v1342 = vadd.f32 %v830, 1.0
  %v1343 = vlog2.pop %v1342
  %v1344 = vmul.f32 %v1343, 0.6931472
  %v1345 = vmul.f32 -0.5, %v830
  %v1346 = vadd.f32 %v1345, 1.0
  %v1347 = vmul.f32 %v1346, %v830
  %v1348 = vand.u32 2147483647, %v830
  %vm1349 = vcmp.lt.f32.partialorder %v1348, 0.0004427343
  %v1350 = vsel %vm1349, %v1347, %v1344
  %v1351 = vadd.f32 %v832, 1.0
  %v1352 = vlog2.pop %v1351
  %v1353 = vmul.f32 %v1352, 0.6931472
  %v1354 = vmul.f32 -0.5, %v832
  %v1355 = vadd.f32 %v1354, 1.0
  %v1356 = vmul.f32 %v1355, %v832
  %v1357 = vand.u32 2147483647, %v832
  %vm1358 = vcmp.lt.f32.partialorder %v1357, 0.0004427343
  %v1359 = vsel %vm1358, %v1356, %v1353
  %v1360 = vadd.f32 %v834, 1.0
  %v1361 = vlog2.pop %v1360
  %v1362 = vmul.f32 %v1361, 0.6931472
  %v1363 = vmul.f32 -0.5, %v834
  %v1364 = vadd.f32 %v1363, 1.0
  %v1365 = vmul.f32 %v1364, %v834
  %v1366 = vand.u32 2147483647, %v834
  %vm1367 = vcmp.lt.f32.partialorder %v1366, 0.0004427343
  %v1368 = vsel %vm1367, %v1365, %v1362
  %v1369 = vadd.f32 %v836, 1.0
  %v1370 = vlog2.pop %v1369
  %v1371 = vmul.f32 %v1370, 0.6931472
  %v1372 = vmul.f32 -0.5, %v836
  %v1373 = vadd.f32 %v1372, 1.0
  %v1374 = vmul.f32 %v1373, %v836
  %v1375 = vand.u32 2147483647, %v836
  %vm1376 = vcmp.lt.f32.partialorder %v1375, 0.0004427343
  %v1377 = vsel %vm1376, %v1374, %v1371
  %v1378 = vadd.f32 %v838, 1.0
  %v1379 = vlog2.pop %v1378
  %v1380 = vmul.f32 %v1379, 0.6931472
  %v1381 = vmul.f32 -0.5, %v838
  %v1382 = vadd.f32 %v1381, 1.0
  %v1383 = vmul.f32 %v1382, %v838
  %v1384 = vand.u32 2147483647, %v838
  %vm1385 = vcmp.lt.f32.partialorder %v1384, 0.0004427343
  %v1386 = vsel %vm1385, %v1383, %v1380
  %v1387 = vadd.f32 %v840, 1.0
  %v1388 = vlog2.pop %v1387
  %v1389 = vmul.f32 %v1388, 0.6931472
  %v1390 = vmul.f32 -0.5, %v840
  %v1391 = vadd.f32 %v1390, 1.0
  %v1392 = vmul.f32 %v1391, %v840
  %v1393 = vand.u32 2147483647, %v840
  %vm1394 = vcmp.lt.f32.partialorder %v1393, 0.0004427343
  %v1395 = vsel %vm1394, %v1392, %v1389
  %v1396 = vadd.f32 %v842, 1.0
  %v1397 = vlog2.pop %v1396
  %v1398 = vmul.f32 %v1397, 0.6931472
  %v1399 = vmul.f32 -0.5, %v842
  %v1400 = vadd.f32 %v1399, 1.0
  %v1401 = vmul.f32 %v1400, %v842
  %v1402 = vand.u32 2147483647, %v842
  %vm1403 = vcmp.lt.f32.partialorder %v1402, 0.0004427343
  %v1404 = vsel %vm1403, %v1401, %v1398
  %v1405 = vadd.f32 %v844, 1.0
  %v1406 = vlog2.pop %v1405
  %v1407 = vmul.f32 %v1406, 0.6931472
  %v1408 = vmul.f32 -0.5, %v844
  %v1409 = vadd.f32 %v1408, 1.0
  %v1410 = vmul.f32 %v1409, %v844
  %v1411 = vand.u32 2147483647, %v844
  %vm1412 = vcmp.lt.f32.partialorder %v1411, 0.0004427343
  %v1413 = vsel %vm1412, %v1410, %v1407
  %v1414 = vadd.f32 %v846, 1.0
  %v1415 = vlog2.pop %v1414
  %v1416 = vmul.f32 %v1415, 0.6931472
  %v1417 = vmul.f32 -0.5, %v846
  %v1418 = vadd.f32 %v1417, 1.0
  %v1419 = vmul.f32 %v1418, %v846
  %v1420 = vand.u32 2147483647, %v846
  %vm1421 = vcmp.lt.f32.partialorder %v1420, 0.0004427343
  %v1422 = vsel %vm1421, %v1419, %v1416
  %v1423 = vadd.f32 %v527, %v855
  %v1424 = vadd.f32 %v528, %v864
  %v1425 = vadd.f32 %v529, %v873
  %v1426 = vadd.f32 %v530, %v882
  %v1427 = vadd.f32 %v531, %v891
  %v1428 = vadd.f32 %v532, %v900
  %v1429 = vadd.f32 %v533, %v909
  %v1430 = vadd.f32 %v534, %v918
  %v1431 = vadd.f32 %v535, %v927
  %v1432 = vadd.f32 %v536, %v936
  %v1433 = vadd.f32 %v537, %v945
  %v1434 = vadd.f32 %v538, %v954
  %v1435 = vadd.f32 %v539, %v963
  %v1436 = vadd.f32 %v540, %v972
  %v1437 = vadd.f32 %v541, %v981
  %v1438 = vadd.f32 %v542, %v990
  %v1439 = vadd.f32 %v543, %v999
  %v1440 = vadd.f32 %v544, %v1008
  %v1441 = vadd.f32 %v545, %v1017
  %v1442 = vadd.f32 %v546, %v1026
  %v1443 = vadd.f32 %v547, %v1035
  %v1444 = vadd.f32 %v548, %v1044
  %v1445 = vadd.f32 %v549, %v1053
  %v1446 = vadd.f32 %v550, %v1062
  %v1447 = vadd.f32 %v551, %v1071
  %v1448 = vadd.f32 %v552, %v1080
  %v1449 = vadd.f32 %v553, %v1089
  %v1450 = vadd.f32 %v554, %v1098
  %v1451 = vadd.f32 %v555, %v1107
  %v1452 = vadd.f32 %v556, %v1116
  %v1453 = vadd.f32 %v557, %v1125
  %v1454 = vadd.f32 %v558, %v1134
  %v1455 = vadd.f32 %v559, %v1143
  %v1456 = vadd.f32 %v560, %v1152
  %v1457 = vadd.f32 %v561, %v1161
  %v1458 = vadd.f32 %v562, %v1170
  %v1459 = vadd.f32 %v563, %v1179
  %v1460 = vadd.f32 %v564, %v1188
  %v1461 = vadd.f32 %v565, %v1197
  %v1462 = vadd.f32 %v566, %v1206
  %v1463 = vadd.f32 %v567, %v1215
  %v1464 = vadd.f32 %v568, %v1224
  %v1465 = vadd.f32 %v569, %v1233
  %v1466 = vadd.f32 %v570, %v1242
  %v1467 = vadd.f32 %v571, %v1251
  %v1468 = vadd.f32 %v572, %v1260
  %v1469 = vadd.f32 %v573, %v1269
  %v1470 = vadd.f32 %v574, %v1278
  %v1471 = vadd.f32 %v575, %v1287
  %v1472 = vadd.f32 %v576, %v1296
  %v1473 = vadd.f32 %v577, %v1305
  %v1474 = vadd.f32 %v578, %v1314
  %v1475 = vadd.f32 %v579, %v1323
  %v1476 = vadd.f32 %v580, %v1332
  %v1477 = vadd.f32 %v581, %v1341
  %v1478 = vadd.f32 %v582, %v1350
  %v1479 = vadd.f32 %v583, %v1359
  %v1480 = vadd.f32 %v584, %v1368
  %v1481 = vadd.f32 %v585, %v1377
  %v1482 = vadd.f32 %v586, %v1386
  %v1483 = vadd.f32 %v587, %v1395
  %v1484 = vadd.f32 %v588, %v1404
  %v1485 = vadd.f32 %v589, %v1413
  %v1486 = vadd.f32 %v590, %v1422
  %v1487 = vsub.f32 %v1423, 0.6931472
  %v1488 = vsub.f32 %v1424, 0.6931472
  %v1489 = vsub.f32 %v1425, 0.6931472
  %v1490 = vsub.f32 %v1426, 0.6931472
  %v1491 = vsub.f32 %v1427, 0.6931472
  %v1492 = vsub.f32 %v1428, 0.6931472
  %v1493 = vsub.f32 %v1429, 0.6931472
  %v1494 = vsub.f32 %v1430, 0.6931472
  %v1495 = vsub.f32 %v1431, 0.6931472
  %v1496 = vsub.f32 %v1432, 0.6931472
  %v1497 = vsub.f32 %v1433, 0.6931472
  %v1498 = vsub.f32 %v1434, 0.6931472
  %v1499 = vsub.f32 %v1435, 0.6931472
  %v1500 = vsub.f32 %v1436, 0.6931472
  %v1501 = vsub.f32 %v1437, 0.6931472
  %v1502 = vsub.f32 %v1438, 0.6931472
  %v1503 = vsub.f32 %v1439, 0.6931472
  %v1504 = vsub.f32 %v1440, 0.6931472
  %v1505 = vsub.f32 %v1441, 0.6931472
  %v1506 = vsub.f32 %v1442, 0.6931472
  %v1507 = vsub.f32 %v1443, 0.6931472
  %v1508 = vsub.f32 %v1444, 0.6931472
  %v1509 = vsub.f32 %v1445, 0.6931472
  %v1510 = vsub.f32 %v1446, 0.6931472
  %v1511 = vsub.f32 %v1447, 0.6931472
  %v1512 = vsub.f32 %v1448, 0.6931472
  %v1513 = vsub.f32 %v1449, 0.6931472
  %v1514 = vsub.f32 %v1450, 0.6931472
  %v1515 = vsub.f32 %v1451, 0.6931472
  %v1516 = vsub.f32 %v1452, 0.6931472
  %v1517 = vsub.f32 %v1453, 0.6931472
  %v1518 = vsub.f32 %v1454, 0.6931472
  %v1519 = vsub.f32 %v1455, 0.6931472
  %v1520 = vsub.f32 %v1456, 0.6931472
  %v1521 = vsub.f32 %v1457, 0.6931472
  %v1522 = vsub.f32 %v1458, 0.6931472
  %v1523 = vsub.f32 %v1459, 0.6931472
  %v1524 = vsub.f32 %v1460, 0.6931472
  %v1525 = vsub.f32 %v1461, 0.6931472
  %v1526 = vsub.f32 %v1462, 0.6931472
  %v1527 = vsub.f32 %v1463, 0.6931472
  %v1528 = vsub.f32 %v1464, 0.6931472
  %v1529 = vsub.f32 %v1465, 0.6931472
  %v1530 = vsub.f32 %v1466, 0.6931472
  %v1531 = vsub.f32 %v1467, 0.6931472
  %v1532 = vsub.f32 %v1468, 0.6931472
  %v1533 = vsub.f32 %v1469, 0.6931472
  %v1534 = vsub.f32 %v1470, 0.6931472
  %v1535 = vsub.f32 %v1471, 0.6931472
  %v1536 = vsub.f32 %v1472, 0.6931472
  %v1537 = vsub.f32 %v1473, 0.6931472
  %v1538 = vsub.f32 %v1474, 0.6931472
  %v1539 = vsub.f32 %v1475, 0.6931472
  %v1540 = vsub.f32 %v1476, 0.6931472
  %v1541 = vsub.f32 %v1477, 0.6931472
  %v1542 = vsub.f32 %v1478, 0.6931472
  %v1543 = vsub.f32 %v1479, 0.6931472
  %v1544 = vsub.f32 %v1480, 0.6931472
  %v1545 = vsub.f32 %v1481, 0.6931472
  %v1546 = vsub.f32 %v1482, 0.6931472
  %v1547 = vsub.f32 %v1483, 0.6931472
  %v1548 = vsub.f32 %v1484, 0.6931472
  %v1549 = vsub.f32 %v1485, 0.6931472
  %v1550 = vsub.f32 %v1486, 0.6931472
  %v1551 = vpack.c.bf16 %v1489, %v1487
  %v1552 = vpack.c.bf16 %v1490, %v1488
  %v1553 = vpack.c.bf16 %v1493, %v1491
  %v1554 = vpack.c.bf16 %v1494, %v1492
  %v1555 = vpack.c.bf16 %v1497, %v1495
  %v1556 = vpack.c.bf16 %v1498, %v1496
  %v1557 = vpack.c.bf16 %v1501, %v1499
  %v1558 = vpack.c.bf16 %v1502, %v1500
  %v1559 = vpack.c.bf16 %v1505, %v1503
  %v1560 = vpack.c.bf16 %v1506, %v1504
  %v1561 = vpack.c.bf16 %v1509, %v1507
  %v1562 = vpack.c.bf16 %v1510, %v1508
  %v1563 = vpack.c.bf16 %v1513, %v1511
  %v1564 = vpack.c.bf16 %v1514, %v1512
  %v1565 = vpack.c.bf16 %v1517, %v1515
  %v1566 = vpack.c.bf16 %v1518, %v1516
  %v1567 = vpack.c.bf16 %v1521, %v1519
  %v1568 = vpack.c.bf16 %v1522, %v1520
  %v1569 = vpack.c.bf16 %v1525, %v1523
  %v1570 = vpack.c.bf16 %v1526, %v1524
  %v1571 = vpack.c.bf16 %v1529, %v1527
  %v1572 = vpack.c.bf16 %v1530, %v1528
  %v1573 = vpack.c.bf16 %v1533, %v1531
  %v1574 = vpack.c.bf16 %v1534, %v1532
  %v1575 = vpack.c.bf16 %v1537, %v1535
  %v1576 = vpack.c.bf16 %v1538, %v1536
  %v1577 = vpack.c.bf16 %v1541, %v1539
  %v1578 = vpack.c.bf16 %v1542, %v1540
  %v1579 = vpack.c.bf16 %v1545, %v1543
  %v1580 = vpack.c.bf16 %v1546, %v1544
  %v1581 = vpack.c.bf16 %v1549, %v1547
  %v1582 = vpack.c.bf16 %v1550, %v1548
  %v1583 = vld [vmem:[%s25] sm:$0xff]
  %v1584 = vld [vmem:[%s25 + $0x8] sm:$0xff]
  %v1585 = vld [vmem:[%s25 + $0x10] sm:$0xff]
  %v1586 = vld [vmem:[%s25 + $0x18] sm:$0xff]
  %v1587 = vld [vmem:[%s25 + $0x20] sm:$0xff]
  %v1588 = vld [vmem:[%s25 + $0x28] sm:$0xff]
  %v1589 = vld [vmem:[%s25 + $0x30] sm:$0xff]
  %v1590 = vld [vmem:[%s25 + $0x38] sm:$0xff]
  %v1591 = vld [vmem:[%s25 + $0x40] sm:$0xff]
  %v1592 = vld [vmem:[%s25 + $0x48] sm:$0xff]
  %v1593 = vld [vmem:[%s25 + $0x50] sm:$0xff]
  %v1594 = vld [vmem:[%s25 + $0x58] sm:$0xff]
  %v1595 = vld [vmem:[%s25 + $0x60] sm:$0xff]
  %v1596 = vld [vmem:[%s25 + $0x68] sm:$0xff]
  %v1597 = vld [vmem:[%s25 + $0x70] sm:$0xff]
  %v1598 = vld [vmem:[%s25 + $0x78] sm:$0xff]
  %v1599 = vld [vmem:[%s25 + $0x80] sm:$0xff]
  %v1600 = vld [vmem:[%s25 + $0x88] sm:$0xff]
  %v1601 = vld [vmem:[%s25 + $0x90] sm:$0xff]
  %v1602 = vld [vmem:[%s25 + $0x98] sm:$0xff]
  %v1603 = vld [vmem:[%s25 + $0xa0] sm:$0xff]
  %v1604 = vld [vmem:[%s25 + $0xa8] sm:$0xff]
  %v1605 = vld [vmem:[%s25 + $0xb0] sm:$0xff]
  %v1606 = vld [vmem:[%s25 + $0xb8] sm:$0xff]
  %v1607 = vld [vmem:[%s25 + $0xc0] sm:$0xff]
  %v1608 = vld [vmem:[%s25 + $0xc8] sm:$0xff]
  %v1609 = vld [vmem:[%s25 + $0xd0] sm:$0xff]
  %v1610 = vld [vmem:[%s25 + $0xd8] sm:$0xff]
  %v1611 = vld [vmem:[%s25 + $0xe0] sm:$0xff]
  %v1612 = vld [vmem:[%s25 + $0xe8] sm:$0xff]
  %v1613 = vld [vmem:[%s25 + $0xf0] sm:$0xff]
  %v1614 = vld [vmem:[%s25 + $0xf8] sm:$0xff]
  %v1615 = vld [vmem:[%s27] sm:$0x3]
  %v1617 = vperm.slane %v1615, 0
  %v1618 = vperm.slane %v1615, 1
  %v1653 = vunpack.c.l.b16 %v1583
  %v1654 = vunpack.c.h.b16 %v1583
  %v1655 = vunpack.c.l.b16 %v1584
  %v1656 = vunpack.c.h.b16 %v1584
  %v1657 = vunpack.c.l.b16 %v1585
  %v1658 = vunpack.c.h.b16 %v1585
  %v1659 = vunpack.c.l.b16 %v1586
  %v1660 = vunpack.c.h.b16 %v1586
  %v1661 = vunpack.c.l.b16 %v1587
  %v1662 = vunpack.c.h.b16 %v1587
  %v1663 = vunpack.c.l.b16 %v1588
  %v1664 = vunpack.c.h.b16 %v1588
  %v1665 = vunpack.c.l.b16 %v1589
  %v1666 = vunpack.c.h.b16 %v1589
  %v1667 = vunpack.c.l.b16 %v1590
  %v1668 = vunpack.c.h.b16 %v1590
  %v1669 = vunpack.c.l.b16 %v1591
  %v1670 = vunpack.c.h.b16 %v1591
  %v1671 = vunpack.c.l.b16 %v1592
  %v1672 = vunpack.c.h.b16 %v1592
  %v1673 = vunpack.c.l.b16 %v1593
  %v1674 = vunpack.c.h.b16 %v1593
  %v1675 = vunpack.c.l.b16 %v1594
  %v1676 = vunpack.c.h.b16 %v1594
  %v1677 = vunpack.c.l.b16 %v1595
  %v1678 = vunpack.c.h.b16 %v1595
  %v1679 = vunpack.c.l.b16 %v1596
  %v1680 = vunpack.c.h.b16 %v1596
  %v1681 = vunpack.c.l.b16 %v1597
  %v1682 = vunpack.c.h.b16 %v1597
  %v1683 = vunpack.c.l.b16 %v1598
  %v1684 = vunpack.c.h.b16 %v1598
  %v1685 = vunpack.c.l.b16 %v1599
  %v1686 = vunpack.c.h.b16 %v1599
  %v1687 = vunpack.c.l.b16 %v1600
  %v1688 = vunpack.c.h.b16 %v1600
  %v1689 = vunpack.c.l.b16 %v1601
  %v1690 = vunpack.c.h.b16 %v1601
  %v1691 = vunpack.c.l.b16 %v1602
  %v1692 = vunpack.c.h.b16 %v1602
  %v1693 = vunpack.c.l.b16 %v1603
  %v1694 = vunpack.c.h.b16 %v1603
  %v1695 = vunpack.c.l.b16 %v1604
  %v1696 = vunpack.c.h.b16 %v1604
  %v1697 = vunpack.c.l.b16 %v1605
  %v1698 = vunpack.c.h.b16 %v1605
  %v1699 = vunpack.c.l.b16 %v1606
  %v1700 = vunpack.c.h.b16 %v1606
  %v1701 = vunpack.c.l.b16 %v1607
  %v1702 = vunpack.c.h.b16 %v1607
  %v1703 = vunpack.c.l.b16 %v1608
  %v1704 = vunpack.c.h.b16 %v1608
  %v1705 = vunpack.c.l.b16 %v1609
  %v1706 = vunpack.c.h.b16 %v1609
  %v1707 = vunpack.c.l.b16 %v1610
  %v1708 = vunpack.c.h.b16 %v1610
  %v1709 = vunpack.c.l.b16 %v1611
  %v1710 = vunpack.c.h.b16 %v1611
  %v1711 = vunpack.c.l.b16 %v1612
  %v1712 = vunpack.c.h.b16 %v1612
  %v1713 = vunpack.c.l.b16 %v1613
  %v1714 = vunpack.c.h.b16 %v1613
  %v1715 = vunpack.c.l.b16 %v1614
  %v1716 = vunpack.c.h.b16 %v1614
  %v1717 = vpack.c.b16 %v1655, %v1653
  %v1718 = vpack.c.b16 %v1656, %v1654
  %v1719 = vpack.c.b16 %v1659, %v1657
  %v1720 = vpack.c.b16 %v1660, %v1658
  %v1721 = vpack.c.b16 %v1663, %v1661
  %v1722 = vpack.c.b16 %v1664, %v1662
  %v1723 = vpack.c.b16 %v1667, %v1665
  %v1724 = vpack.c.b16 %v1668, %v1666
  %v1725 = vpack.c.b16 %v1671, %v1669
  %v1726 = vpack.c.b16 %v1672, %v1670
  %v1727 = vpack.c.b16 %v1675, %v1673
  %v1728 = vpack.c.b16 %v1676, %v1674
  %v1729 = vpack.c.b16 %v1679, %v1677
  %v1730 = vpack.c.b16 %v1680, %v1678
  %v1731 = vpack.c.b16 %v1683, %v1681
  %v1732 = vpack.c.b16 %v1684, %v1682
  %v1733 = vpack.c.b16 %v1687, %v1685
  %v1734 = vpack.c.b16 %v1688, %v1686
  %v1735 = vpack.c.b16 %v1691, %v1689
  %v1736 = vpack.c.b16 %v1692, %v1690
  %v1737 = vpack.c.b16 %v1695, %v1693
  %v1738 = vpack.c.b16 %v1696, %v1694
  %v1739 = vpack.c.b16 %v1699, %v1697
  %v1740 = vpack.c.b16 %v1700, %v1698
  %v1741 = vpack.c.b16 %v1703, %v1701
  %v1742 = vpack.c.b16 %v1704, %v1702
  %v1743 = vpack.c.b16 %v1707, %v1705
  %v1744 = vpack.c.b16 %v1708, %v1706
  %v1745 = vpack.c.b16 %v1711, %v1709
  %v1746 = vpack.c.b16 %v1712, %v1710
  %v1747 = vpack.c.b16 %v1715, %v1713
  %v1748 = vpack.c.b16 %v1716, %v1714
  %1781 = vmatpush.bf16.msra.mxu0 %v1731
  %1782 = vmatpush.bf16.msra.mxu0 %v1729
  %1783 = vmatpush.bf16.msra.mxu0 %v1727
  %1784 = vmatpush.bf16.msra.mxu0 %v1725
  %1785 = vmatpush.bf16.msra.mxu0 %v1723
  %1786 = vmatpush.bf16.msra.mxu0 %v1721
  %1787 = vmatpush.bf16.msra.mxu0 %v1719
  %1788 = vmatpush.bf16.msra.mxu0 %v1717
  %1789 = vmatmul.bf16.gmra.mxu0 %v1551
  %v1790 = vpop.f32.mrf.mxu0
  %v1791 = vadd.f32 %v1617, %v1790
  %v1792 = vpop.f32.mrf.mxu0
  %v1793 = vadd.f32 %v1617, %v1792
  %1794 = vmatmul.bf16.gmra.mxu0 %v1553
  %v1795 = vpop.f32.mrf.mxu0
  %v1796 = vadd.f32 %v1617, %v1795
  %v1797 = vpop.f32.mrf.mxu0
  %v1798 = vadd.f32 %v1617, %v1797
  %1799 = vmatmul.bf16.gmra.mxu0 %v1555
  %v1800 = vpop.f32.mrf.mxu0
  %v1801 = vadd.f32 %v1617, %v1800
  %v1802 = vpop.f32.mrf.mxu0
  %v1803 = vadd.f32 %v1617, %v1802
  %1804 = vmatmul.bf16.gmra.mxu0 %v1557
  %v1805 = vpop.f32.mrf.mxu0
  %v1806 = vadd.f32 %v1617, %v1805
  %v1807 = vpop.f32.mrf.mxu0
  %v1808 = vadd.f32 %v1617, %v1807
  %1809 = vmatmul.bf16.gmra.mxu0 %v1559
  %v1810 = vpop.f32.mrf.mxu0
  %v1811 = vadd.f32 %v1617, %v1810
  %v1812 = vpop.f32.mrf.mxu0
  %v1813 = vadd.f32 %v1617, %v1812
  %1814 = vmatmul.bf16.gmra.mxu0 %v1561
  %v1815 = vpop.f32.mrf.mxu0
  %v1816 = vadd.f32 %v1617, %v1815
  %v1817 = vpop.f32.mrf.mxu0
  %v1818 = vadd.f32 %v1617, %v1817
  %1819 = vmatmul.bf16.gmra.mxu0 %v1563
  %v1820 = vpop.f32.mrf.mxu0
  %v1821 = vadd.f32 %v1617, %v1820
  %v1822 = vpop.f32.mrf.mxu0
  %v1823 = vadd.f32 %v1617, %v1822
  %1824 = vmatmul.bf16.gmra.mxu0 %v1565
  %v1825 = vpop.f32.mrf.mxu0
  %v1826 = vadd.f32 %v1617, %v1825
  %v1827 = vpop.f32.mrf.mxu0
  %v1828 = vadd.f32 %v1617, %v1827
  %1829 = vmatmul.bf16.gmra.mxu0 %v1567
  %v1830 = vpop.f32.mrf.mxu0
  %v1831 = vadd.f32 %v1617, %v1830
  %v1832 = vpop.f32.mrf.mxu0
  %v1833 = vadd.f32 %v1617, %v1832
  %1834 = vmatmul.bf16.gmra.mxu0 %v1569
  %v1835 = vpop.f32.mrf.mxu0
  %v1836 = vadd.f32 %v1617, %v1835
  %v1837 = vpop.f32.mrf.mxu0
  %v1838 = vadd.f32 %v1617, %v1837
  %1839 = vmatmul.bf16.gmra.mxu0 %v1571
  %v1840 = vpop.f32.mrf.mxu0
  %v1841 = vadd.f32 %v1617, %v1840
  %v1842 = vpop.f32.mrf.mxu0
  %v1843 = vadd.f32 %v1617, %v1842
  %1844 = vmatmul.bf16.gmra.mxu0 %v1573
  %v1845 = vpop.f32.mrf.mxu0
  %v1846 = vadd.f32 %v1617, %v1845
  %v1847 = vpop.f32.mrf.mxu0
  %v1848 = vadd.f32 %v1617, %v1847
  %1849 = vmatmul.bf16.gmra.mxu0 %v1575
  %v1850 = vpop.f32.mrf.mxu0
  %v1851 = vadd.f32 %v1617, %v1850
  %v1852 = vpop.f32.mrf.mxu0
  %v1853 = vadd.f32 %v1617, %v1852
  %1854 = vmatmul.bf16.gmra.mxu0 %v1577
  %v1855 = vpop.f32.mrf.mxu0
  %v1856 = vadd.f32 %v1617, %v1855
  %v1857 = vpop.f32.mrf.mxu0
  %v1858 = vadd.f32 %v1617, %v1857
  %1859 = vmatmul.bf16.gmra.mxu0 %v1579
  %v1860 = vpop.f32.mrf.mxu0
  %v1861 = vadd.f32 %v1617, %v1860
  %v1862 = vpop.f32.mrf.mxu0
  %v1863 = vadd.f32 %v1617, %v1862
  %1864 = vmatmul.bf16.gmra.mxu0 %v1581
  %v1865 = vpop.f32.mrf.mxu0
  %v1866 = vadd.f32 %v1617, %v1865
  %v1867 = vpop.f32.mrf.mxu0
  %v1868 = vadd.f32 %v1617, %v1867
  %1869 = vdwg.mxu0
  %1870 = vmatpush.bf16.msra.mxu0 %v1747
  %1871 = vmatpush.bf16.msra.mxu0 %v1745
  %1872 = vmatpush.bf16.msra.mxu0 %v1743
  %1873 = vmatpush.bf16.msra.mxu0 %v1741
  %1874 = vmatpush.bf16.msra.mxu0 %v1739
  %1875 = vmatpush.bf16.msra.mxu0 %v1737
  %1876 = vmatpush.bf16.msra.mxu0 %v1735
  %1877 = vmatpush.bf16.msra.mxu0 %v1733
  %1878 = vmatmul.bf16.gmra.mxu0 %v1552
  %v1879 = vpop.f32.mrf.mxu0
  %v1880 = vadd.f32 %v1791, %v1879
  %v1881 = vpop.f32.mrf.mxu0
  %v1882 = vadd.f32 %v1793, %v1881
  %1883 = vmatmul.bf16.gmra.mxu0 %v1554
  %v1884 = vpop.f32.mrf.mxu0
  %v1885 = vadd.f32 %v1796, %v1884
  %v1886 = vpop.f32.mrf.mxu0
  %v1887 = vadd.f32 %v1798, %v1886
  %1888 = vmatmul.bf16.gmra.mxu0 %v1556
  %v1889 = vpop.f32.mrf.mxu0
  %v1890 = vadd.f32 %v1801, %v1889
  %v1891 = vpop.f32.mrf.mxu0
  %v1892 = vadd.f32 %v1803, %v1891
  %1893 = vmatmul.bf16.gmra.mxu0 %v1558
  %v1894 = vpop.f32.mrf.mxu0
  %v1895 = vadd.f32 %v1806, %v1894
  %v1896 = vpop.f32.mrf.mxu0
  %v1897 = vadd.f32 %v1808, %v1896
  %1898 = vmatmul.bf16.gmra.mxu0 %v1560
  %v1899 = vpop.f32.mrf.mxu0
  %v1900 = vadd.f32 %v1811, %v1899
  %v1901 = vpop.f32.mrf.mxu0
  %v1902 = vadd.f32 %v1813, %v1901
  %1903 = vmatmul.bf16.gmra.mxu0 %v1562
  %v1904 = vpop.f32.mrf.mxu0
  %v1905 = vadd.f32 %v1816, %v1904
  %v1906 = vpop.f32.mrf.mxu0
  %v1907 = vadd.f32 %v1818, %v1906
  %1908 = vmatmul.bf16.gmra.mxu0 %v1564
  %v1909 = vpop.f32.mrf.mxu0
  %v1910 = vadd.f32 %v1821, %v1909
  %v1911 = vpop.f32.mrf.mxu0
  %v1912 = vadd.f32 %v1823, %v1911
  %1913 = vmatmul.bf16.gmra.mxu0 %v1566
  %v1914 = vpop.f32.mrf.mxu0
  %v1915 = vadd.f32 %v1826, %v1914
  %v1916 = vpop.f32.mrf.mxu0
  %v1917 = vadd.f32 %v1828, %v1916
  %1918 = vmatmul.bf16.gmra.mxu0 %v1568
  %v1919 = vpop.f32.mrf.mxu0
  %v1920 = vadd.f32 %v1831, %v1919
  %v1921 = vpop.f32.mrf.mxu0
  %v1922 = vadd.f32 %v1833, %v1921
  %1923 = vmatmul.bf16.gmra.mxu0 %v1570
  %v1924 = vpop.f32.mrf.mxu0
  %v1925 = vadd.f32 %v1836, %v1924
  %v1926 = vpop.f32.mrf.mxu0
  %v1927 = vadd.f32 %v1838, %v1926
  %1928 = vmatmul.bf16.gmra.mxu0 %v1572
  %v1929 = vpop.f32.mrf.mxu0
  %v1930 = vadd.f32 %v1841, %v1929
  %v1931 = vpop.f32.mrf.mxu0
  %v1932 = vadd.f32 %v1843, %v1931
  %1933 = vmatmul.bf16.gmra.mxu0 %v1574
  %v1934 = vpop.f32.mrf.mxu0
  %v1935 = vadd.f32 %v1846, %v1934
  %v1936 = vpop.f32.mrf.mxu0
  %v1937 = vadd.f32 %v1848, %v1936
  %1938 = vmatmul.bf16.gmra.mxu0 %v1576
  %v1939 = vpop.f32.mrf.mxu0
  %v1940 = vadd.f32 %v1851, %v1939
  %v1941 = vpop.f32.mrf.mxu0
  %v1942 = vadd.f32 %v1853, %v1941
  %1943 = vmatmul.bf16.gmra.mxu0 %v1578
  %v1944 = vpop.f32.mrf.mxu0
  %v1945 = vadd.f32 %v1856, %v1944
  %v1946 = vpop.f32.mrf.mxu0
  %v1947 = vadd.f32 %v1858, %v1946
  %1948 = vmatmul.bf16.gmra.mxu0 %v1580
  %v1949 = vpop.f32.mrf.mxu0
  %v1950 = vadd.f32 %v1861, %v1949
  %v1951 = vpop.f32.mrf.mxu0
  %v1952 = vadd.f32 %v1863, %v1951
  %1953 = vmatmul.bf16.gmra.mxu0 %v1582
  %v1954 = vpop.f32.mrf.mxu0
  %v1955 = vadd.f32 %v1866, %v1954
  %v1956 = vpop.f32.mrf.mxu0
  %v1957 = vadd.f32 %v1868, %v1956
  %1958 = vdwg.mxu0
  %1959 = vmatpush.bf16.msra.mxu0 %v1732
  %1960 = vmatpush.bf16.msra.mxu0 %v1730
  %1961 = vmatpush.bf16.msra.mxu0 %v1728
  %1962 = vmatpush.bf16.msra.mxu0 %v1726
  %1963 = vmatpush.bf16.msra.mxu0 %v1724
  %1964 = vmatpush.bf16.msra.mxu0 %v1722
  %1965 = vmatpush.bf16.msra.mxu0 %v1720
  %1966 = vmatpush.bf16.msra.mxu0 %v1718
  %1967 = vmatmul.bf16.gmra.mxu0 %v1551
  %v1968 = vpop.f32.mrf.mxu0
  %v1969 = vadd.f32 %v1618, %v1968
  %v1970 = vpop.f32.mrf.mxu0
  %v1971 = vadd.f32 %v1618, %v1970
  %1972 = vmatmul.bf16.gmra.mxu0 %v1553
  %v1973 = vpop.f32.mrf.mxu0
  %v1974 = vadd.f32 %v1618, %v1973
  %v1975 = vpop.f32.mrf.mxu0
  %v1976 = vadd.f32 %v1618, %v1975
  %1977 = vmatmul.bf16.gmra.mxu0 %v1555
  %v1978 = vpop.f32.mrf.mxu0
  %v1979 = vadd.f32 %v1618, %v1978
  %v1980 = vpop.f32.mrf.mxu0
  %v1981 = vadd.f32 %v1618, %v1980
  %1982 = vmatmul.bf16.gmra.mxu0 %v1557
  %v1983 = vpop.f32.mrf.mxu0
  %v1984 = vadd.f32 %v1618, %v1983
  %v1985 = vpop.f32.mrf.mxu0
  %v1986 = vadd.f32 %v1618, %v1985
  %1987 = vmatmul.bf16.gmra.mxu0 %v1559
  %v1988 = vpop.f32.mrf.mxu0
  %v1989 = vadd.f32 %v1618, %v1988
  %v1990 = vpop.f32.mrf.mxu0
  %v1991 = vadd.f32 %v1618, %v1990
  %1992 = vmatmul.bf16.gmra.mxu0 %v1561
  %v1993 = vpop.f32.mrf.mxu0
  %v1994 = vadd.f32 %v1618, %v1993
  %v1995 = vpop.f32.mrf.mxu0
  %v1996 = vadd.f32 %v1618, %v1995
  %1997 = vmatmul.bf16.gmra.mxu0 %v1563
  %v1998 = vpop.f32.mrf.mxu0
  %v1999 = vadd.f32 %v1618, %v1998
  %v2000 = vpop.f32.mrf.mxu0
  %v2001 = vadd.f32 %v1618, %v2000
  %2002 = vmatmul.bf16.gmra.mxu0 %v1565
  %v2003 = vpop.f32.mrf.mxu0
  %v2004 = vadd.f32 %v1618, %v2003
  %v2005 = vpop.f32.mrf.mxu0
  %v2006 = vadd.f32 %v1618, %v2005
  %2007 = vmatmul.bf16.gmra.mxu0 %v1567
  %v2008 = vpop.f32.mrf.mxu0
  %v2009 = vadd.f32 %v1618, %v2008
  %v2010 = vpop.f32.mrf.mxu0
  %v2011 = vadd.f32 %v1618, %v2010
  %2012 = vmatmul.bf16.gmra.mxu0 %v1569
  %v2013 = vpop.f32.mrf.mxu0
  %v2014 = vadd.f32 %v1618, %v2013
  %v2015 = vpop.f32.mrf.mxu0
  %v2016 = vadd.f32 %v1618, %v2015
  %2017 = vmatmul.bf16.gmra.mxu0 %v1571
  %v2018 = vpop.f32.mrf.mxu0
  %v2019 = vadd.f32 %v1618, %v2018
  %v2020 = vpop.f32.mrf.mxu0
  %v2021 = vadd.f32 %v1618, %v2020
  %2022 = vmatmul.bf16.gmra.mxu0 %v1573
  %v2023 = vpop.f32.mrf.mxu0
  %v2024 = vadd.f32 %v1618, %v2023
  %v2025 = vpop.f32.mrf.mxu0
  %v2026 = vadd.f32 %v1618, %v2025
  %2027 = vmatmul.bf16.gmra.mxu0 %v1575
  %v2028 = vpop.f32.mrf.mxu0
  %v2029 = vadd.f32 %v1618, %v2028
  %v2030 = vpop.f32.mrf.mxu0
  %v2031 = vadd.f32 %v1618, %v2030
  %2032 = vmatmul.bf16.gmra.mxu0 %v1577
  %v2033 = vpop.f32.mrf.mxu0
  %v2034 = vadd.f32 %v1618, %v2033
  %v2035 = vpop.f32.mrf.mxu0
  %v2036 = vadd.f32 %v1618, %v2035
  %2037 = vmatmul.bf16.gmra.mxu0 %v1579
  %v2038 = vpop.f32.mrf.mxu0
  %v2039 = vadd.f32 %v1618, %v2038
  %v2040 = vpop.f32.mrf.mxu0
  %v2041 = vadd.f32 %v1618, %v2040
  %2042 = vmatmul.bf16.gmra.mxu0 %v1581
  %v2043 = vpop.f32.mrf.mxu0
  %v2044 = vadd.f32 %v1618, %v2043
  %v2045 = vpop.f32.mrf.mxu0
  %v2046 = vadd.f32 %v1618, %v2045
  %2047 = vdwg.mxu0
  %2048 = vmatpush.bf16.msra.mxu0 %v1748
  %2049 = vmatpush.bf16.msra.mxu0 %v1746
  %2050 = vmatpush.bf16.msra.mxu0 %v1744
  %2051 = vmatpush.bf16.msra.mxu0 %v1742
  %2052 = vmatpush.bf16.msra.mxu0 %v1740
  %2053 = vmatpush.bf16.msra.mxu0 %v1738
  %2054 = vmatpush.bf16.msra.mxu0 %v1736
  %2055 = vmatpush.bf16.msra.mxu0 %v1734
  %2056 = vmatmul.bf16.gmra.mxu0 %v1552
  %v2057 = vpop.f32.mrf.mxu0
  %v2058 = vadd.f32 %v1969, %v2057
  %v2059 = vpop.f32.mrf.mxu0
  %v2060 = vadd.f32 %v1971, %v2059
  %2061 = vmatmul.bf16.gmra.mxu0 %v1554
  %v2062 = vpop.f32.mrf.mxu0
  %v2063 = vadd.f32 %v1974, %v2062
  %v2064 = vpop.f32.mrf.mxu0
  %v2065 = vadd.f32 %v1976, %v2064
  %2066 = vmatmul.bf16.gmra.mxu0 %v1556
  %v2067 = vpop.f32.mrf.mxu0
  %v2068 = vadd.f32 %v1979, %v2067
  %v2069 = vpop.f32.mrf.mxu0
  %v2070 = vadd.f32 %v1981, %v2069
  %2071 = vmatmul.bf16.gmra.mxu0 %v1558
  %v2072 = vpop.f32.mrf.mxu0
  %v2073 = vadd.f32 %v1984, %v2072
  %v2074 = vpop.f32.mrf.mxu0
  %v2075 = vadd.f32 %v1986, %v2074
  %2076 = vmatmul.bf16.gmra.mxu0 %v1560
  %v2077 = vpop.f32.mrf.mxu0
  %v2078 = vadd.f32 %v1989, %v2077
  %v2079 = vpop.f32.mrf.mxu0
  %v2080 = vadd.f32 %v1991, %v2079
  %2081 = vmatmul.bf16.gmra.mxu0 %v1562
  %v2082 = vpop.f32.mrf.mxu0
  %v2083 = vadd.f32 %v1994, %v2082
  %v2084 = vpop.f32.mrf.mxu0
  %v2085 = vadd.f32 %v1996, %v2084
  %2086 = vmatmul.bf16.gmra.mxu0 %v1564
  %v2087 = vpop.f32.mrf.mxu0
  %v2088 = vadd.f32 %v1999, %v2087
  %v2089 = vpop.f32.mrf.mxu0
  %v2090 = vadd.f32 %v2001, %v2089
  %2091 = vmatmul.bf16.gmra.mxu0 %v1566
  %v2092 = vpop.f32.mrf.mxu0
  %v2093 = vadd.f32 %v2004, %v2092
  %v2094 = vpop.f32.mrf.mxu0
  %v2095 = vadd.f32 %v2006, %v2094
  %2096 = vmatmul.bf16.gmra.mxu0 %v1568
  %v2097 = vpop.f32.mrf.mxu0
  %v2098 = vadd.f32 %v2009, %v2097
  %v2099 = vpop.f32.mrf.mxu0
  %v2100 = vadd.f32 %v2011, %v2099
  %2101 = vmatmul.bf16.gmra.mxu0 %v1570
  %v2102 = vpop.f32.mrf.mxu0
  %v2103 = vadd.f32 %v2014, %v2102
  %v2104 = vpop.f32.mrf.mxu0
  %v2105 = vadd.f32 %v2016, %v2104
  %2106 = vmatmul.bf16.gmra.mxu0 %v1572
  %v2107 = vpop.f32.mrf.mxu0
  %v2108 = vadd.f32 %v2019, %v2107
  %v2109 = vpop.f32.mrf.mxu0
  %v2110 = vadd.f32 %v2021, %v2109
  %2111 = vmatmul.bf16.gmra.mxu0 %v1574
  %v2112 = vpop.f32.mrf.mxu0
  %v2113 = vadd.f32 %v2024, %v2112
  %v2114 = vpop.f32.mrf.mxu0
  %v2115 = vadd.f32 %v2026, %v2114
  %2116 = vmatmul.bf16.gmra.mxu0 %v1576
  %v2117 = vpop.f32.mrf.mxu0
  %v2118 = vadd.f32 %v2029, %v2117
  %v2119 = vpop.f32.mrf.mxu0
  %v2120 = vadd.f32 %v2031, %v2119
  %2121 = vmatmul.bf16.gmra.mxu0 %v1578
  %v2122 = vpop.f32.mrf.mxu0
  %v2123 = vadd.f32 %v2034, %v2122
  %v2124 = vpop.f32.mrf.mxu0
  %v2125 = vadd.f32 %v2036, %v2124
  %2126 = vmatmul.bf16.gmra.mxu0 %v1580
  %v2127 = vpop.f32.mrf.mxu0
  %v2128 = vadd.f32 %v2039, %v2127
  %v2129 = vpop.f32.mrf.mxu0
  %v2130 = vadd.f32 %v2041, %v2129
  %2131 = vmatmul.bf16.gmra.mxu0 %v1582
  %v2132 = vpop.f32.mrf.mxu0
  %v2133 = vadd.f32 %v2044, %v2132
  %v2134 = vpop.f32.mrf.mxu0
  %v2135 = vadd.f32 %v2046, %v2134
  %2136 = vdwg.mxu0
  %v2137 = vld [vmem:[%s9] sm:$0xff]
  %v2138 = vld [vmem:[%s9 + $0x8] sm:$0xff]
  %v2139 = vld [vmem:[%s9 + $0x10] sm:$0xff]
  %v2140 = vld [vmem:[%s9 + $0x18] sm:$0xff]
  %v2141 = vld [vmem:[%s9 + $0x20] sm:$0xff]
  %v2142 = vld [vmem:[%s9 + $0x28] sm:$0xff]
  %v2143 = vld [vmem:[%s9 + $0x30] sm:$0xff]
  %v2144 = vld [vmem:[%s9 + $0x38] sm:$0xff]
  %v2145 = vld [vmem:[%s9 + $0x40] sm:$0xff]
  %v2146 = vld [vmem:[%s9 + $0x48] sm:$0xff]
  %v2147 = vld [vmem:[%s9 + $0x50] sm:$0xff]
  %v2148 = vld [vmem:[%s9 + $0x58] sm:$0xff]
  %v2149 = vld [vmem:[%s9 + $0x60] sm:$0xff]
  %v2150 = vld [vmem:[%s9 + $0x68] sm:$0xff]
  %v2151 = vld [vmem:[%s9 + $0x70] sm:$0xff]
  %v2152 = vld [vmem:[%s9 + $0x78] sm:$0xff]
  %v2153 = vld [vmem:[%s9 + $0x80] sm:$0xff]
  %v2154 = vld [vmem:[%s9 + $0x88] sm:$0xff]
  %v2155 = vld [vmem:[%s9 + $0x90] sm:$0xff]
  %v2156 = vld [vmem:[%s9 + $0x98] sm:$0xff]
  %v2157 = vld [vmem:[%s9 + $0xa0] sm:$0xff]
  %v2158 = vld [vmem:[%s9 + $0xa8] sm:$0xff]
  %v2159 = vld [vmem:[%s9 + $0xb0] sm:$0xff]
  %v2160 = vld [vmem:[%s9 + $0xb8] sm:$0xff]
  %v2161 = vld [vmem:[%s9 + $0xc0] sm:$0xff]
  %v2162 = vld [vmem:[%s9 + $0xc8] sm:$0xff]
  %v2163 = vld [vmem:[%s9 + $0xd0] sm:$0xff]
  %v2164 = vld [vmem:[%s9 + $0xd8] sm:$0xff]
  %v2165 = vld [vmem:[%s9 + $0xe0] sm:$0xff]
  %v2166 = vld [vmem:[%s9 + $0xe8] sm:$0xff]
  %v2167 = vld [vmem:[%s9 + $0xf0] sm:$0xff]
  %v2168 = vld [vmem:[%s9 + $0xf8] sm:$0xff]
  %v2169 = vld [vmem:[%s9 + $0x100] sm:$0xff]
  %v2170 = vld [vmem:[%s9 + $0x108] sm:$0xff]
  %v2171 = vld [vmem:[%s9 + $0x110] sm:$0xff]
  %v2172 = vld [vmem:[%s9 + $0x118] sm:$0xff]
  %v2173 = vld [vmem:[%s9 + $0x120] sm:$0xff]
  %v2174 = vld [vmem:[%s9 + $0x128] sm:$0xff]
  %v2175 = vld [vmem:[%s9 + $0x130] sm:$0xff]
  %v2176 = vld [vmem:[%s9 + $0x138] sm:$0xff]
  %v2177 = vld [vmem:[%s9 + $0x140] sm:$0xff]
  %v2178 = vld [vmem:[%s9 + $0x148] sm:$0xff]
  %v2179 = vld [vmem:[%s9 + $0x150] sm:$0xff]
  %v2180 = vld [vmem:[%s9 + $0x158] sm:$0xff]
  %v2181 = vld [vmem:[%s9 + $0x160] sm:$0xff]
  %v2182 = vld [vmem:[%s9 + $0x168] sm:$0xff]
  %v2183 = vld [vmem:[%s9 + $0x170] sm:$0xff]
  %v2184 = vld [vmem:[%s9 + $0x178] sm:$0xff]
  %v2185 = vld [vmem:[%s9 + $0x180] sm:$0xff]
  %v2186 = vld [vmem:[%s9 + $0x188] sm:$0xff]
  %v2187 = vld [vmem:[%s9 + $0x190] sm:$0xff]
  %v2188 = vld [vmem:[%s9 + $0x198] sm:$0xff]
  %v2189 = vld [vmem:[%s9 + $0x1a0] sm:$0xff]
  %v2190 = vld [vmem:[%s9 + $0x1a8] sm:$0xff]
  %v2191 = vld [vmem:[%s9 + $0x1b0] sm:$0xff]
  %v2192 = vld [vmem:[%s9 + $0x1b8] sm:$0xff]
  %v2193 = vld [vmem:[%s9 + $0x1c0] sm:$0xff]
  %v2194 = vld [vmem:[%s9 + $0x1c8] sm:$0xff]
  %v2195 = vld [vmem:[%s9 + $0x1d0] sm:$0xff]
  %v2196 = vld [vmem:[%s9 + $0x1d8] sm:$0xff]
  %v2197 = vld [vmem:[%s9 + $0x1e0] sm:$0xff]
  %v2198 = vld [vmem:[%s9 + $0x1e8] sm:$0xff]
  %v2199 = vld [vmem:[%s9 + $0x1f0] sm:$0xff]
  %v2200 = vld [vmem:[%s9 + $0x1f8] sm:$0xff]
  %v2201 = vmul.f32 %v1880, %v2137
  %v2202 = vmul.f32 %v2058, %v2138
  %v2203 = vmul.f32 %v1882, %v2139
  %v2204 = vmul.f32 %v2060, %v2140
  %v2205 = vmul.f32 %v1885, %v2141
  %v2206 = vmul.f32 %v2063, %v2142
  %v2207 = vmul.f32 %v1887, %v2143
  %v2208 = vmul.f32 %v2065, %v2144
  %v2209 = vmul.f32 %v1890, %v2145
  %v2210 = vmul.f32 %v2068, %v2146
  %v2211 = vmul.f32 %v1892, %v2147
  %v2212 = vmul.f32 %v2070, %v2148
  %v2213 = vmul.f32 %v1895, %v2149
  %v2214 = vmul.f32 %v2073, %v2150
  %v2215 = vmul.f32 %v1897, %v2151
  %v2216 = vmul.f32 %v2075, %v2152
  %v2217 = vmul.f32 %v1900, %v2153
  %v2218 = vmul.f32 %v2078, %v2154
  %v2219 = vmul.f32 %v1902, %v2155
  %v2220 = vmul.f32 %v2080, %v2156
  %v2221 = vmul.f32 %v1905, %v2157
  %v2222 = vmul.f32 %v2083, %v2158
  %v2223 = vmul.f32 %v1907, %v2159
  %v2224 = vmul.f32 %v2085, %v2160
  %v2225 = vmul.f32 %v1910, %v2161
  %v2226 = vmul.f32 %v2088, %v2162
  %v2227 = vmul.f32 %v1912, %v2163
  %v2228 = vmul.f32 %v2090, %v2164
  %v2229 = vmul.f32 %v1915, %v2165
  %v2230 = vmul.f32 %v2093, %v2166
  %v2231 = vmul.f32 %v1917, %v2167
  %v2232 = vmul.f32 %v2095, %v2168
  %v2233 = vmul.f32 %v1920, %v2169
  %v2234 = vmul.f32 %v2098, %v2170
  %v2235 = vmul.f32 %v1922, %v2171
  %v2236 = vmul.f32 %v2100, %v2172
  %v2237 = vmul.f32 %v1925, %v2173
  %v2238 = vmul.f32 %v2103, %v2174
  %v2239 = vmul.f32 %v1927, %v2175
  %v2240 = vmul.f32 %v2105, %v2176
  %v2241 = vmul.f32 %v1930, %v2177
  %v2242 = vmul.f32 %v2108, %v2178
  %v2243 = vmul.f32 %v1932, %v2179
  %v2244 = vmul.f32 %v2110, %v2180
  %v2245 = vmul.f32 %v1935, %v2181
  %v2246 = vmul.f32 %v2113, %v2182
  %v2247 = vmul.f32 %v1937, %v2183
  %v2248 = vmul.f32 %v2115, %v2184
  %v2249 = vmul.f32 %v1940, %v2185
  %v2250 = vmul.f32 %v2118, %v2186
  %v2251 = vmul.f32 %v1942, %v2187
  %v2252 = vmul.f32 %v2120, %v2188
  %v2253 = vmul.f32 %v1945, %v2189
  %v2254 = vmul.f32 %v2123, %v2190
  %v2255 = vmul.f32 %v1947, %v2191
  %v2256 = vmul.f32 %v2125, %v2192
  %v2257 = vmul.f32 %v1950, %v2193
  %v2258 = vmul.f32 %v2128, %v2194
  %v2259 = vmul.f32 %v1952, %v2195
  %v2260 = vmul.f32 %v2130, %v2196
  %v2261 = vmul.f32 %v1955, %v2197
  %v2262 = vmul.f32 %v2133, %v2198
  %v2263 = vmul.f32 %v1957, %v2199
  %v2264 = vmul.f32 %v2135, %v2200
  %v2265 = vld [vmem:[%s1] sm:$0xff]
  %v2266 = vld [vmem:[%s1 + $0x8] sm:$0xff]
  %v2267 = vld [vmem:[%s3] sm:$0xff]
  %v2268 = vld [vmem:[%s3 + $0x8] sm:$0xff]
  %v2269 = vld [vmem:[%s5] sm:$0xff]
  %v2270 = vld [vmem:[%s5 + $0x8] sm:$0xff]
  %vm2271 = vcmask 130048
  %v2273 = vsel %vm2271, %v2265, 0
  %v2276 = vsel %vm2271, %v2266, 0
  %2278 = vmatpush.msra.mxu0 0.0
  %2279 = vmatpush.msra.mxu0 0.0
  %2280 = vmatpush.msra.mxu0 0.0
  %2281 = vmatpush.msra.mxu0 0.0
  %2282 = vmatpush.msra.mxu0 0.0
  %2283 = vmatpush.msra.mxu0 0.0
  %2284 = vmatpush.msra.mxu0 0.0
  %2285 = vmatpush.msra.mxu0 0.0
  %2286 = vmatpush.msra.mxu0 0.0
  %2287 = vmatpush.msra.mxu0 0.0
  %2288 = vmatpush.msra.mxu0 0.0
  %2289 = vmatpush.msra.mxu0 0.0
  %2290 = vmatpush.msra.mxu0 0.0
  %2291 = vmatpush.msra.mxu0 0.0
  %2292 = vmatpush.msra.mxu0 %v2268
  %2293 = vmatpush.msra.mxu0 %v2267
  %2294 = vmatmul.f32.gmra.mxu0 %v2273
  %v2295 = vpop.f32.mrf.mxu0
  %v2296 = vadd.f32 0.0, %v2295
  %2297 = vmatmul.f32.gmra.mxu0 %v2276
  %v2298 = vpop.f32.mrf.mxu0
  %v2299 = vadd.f32 0.0, %v2298
  %2300 = vdwg.mxu0
  %v2301 = vadd.f32 %v2267, %v2296
  %v2302 = vadd.f32 %v2268, %v2299
  %v2303 = vld [vmem:[%s29] sm:$0xff]
  %v2304 = vld [vmem:[%s29 + $0x8] sm:$0xff]
  %v2305 = vadd.f32 %v2301, %v2303
  %v2306 = vadd.f32 %v2302, %v2304
  %v2307 = vld [vmem:[%s31] sm:$0xff]
  %v2308 = vld [vmem:[%s31 + $0x8] sm:$0xff]
  %v2309 = vld [vmem:[%s31 + $0x10] sm:$0xff]
  %v2310 = vld [vmem:[%s31 + $0x18] sm:$0xff]
  %v2311 = vld [vmem:[%s33] sm:$0x1]
  %v2313 = vperm.slane %v2311, 0
  %vm2315 = vcmask 261120
  %v2317 = vsel %vm2315, %v2305, 0
  %v2320 = vsel %vm2315, %v2306, 0
  %2322 = vmatpush.msra.mxu0 0.0
  %2323 = vmatpush.msra.mxu0 0.0
  %2324 = vmatpush.msra.mxu0 0.0
  %2325 = vmatpush.msra.mxu0 0.0
  %2326 = vmatpush.msra.mxu0 0.0
  %2327 = vmatpush.msra.mxu0 0.0
  %2328 = vmatpush.msra.mxu0 0.0
  %2329 = vmatpush.msra.mxu0 0.0
  %2330 = vmatpush.msra.mxu0 0.0
  %2331 = vmatpush.msra.mxu0 0.0
  %2332 = vmatpush.msra.mxu0 0.0
  %2333 = vmatpush.msra.mxu0 0.0
  %2334 = vmatpush.msra.mxu0 %v2310
  %2335 = vmatpush.msra.mxu0 %v2309
  %2336 = vmatpush.msra.mxu0 %v2308
  %2337 = vmatpush.msra.mxu0 %v2307
  %2338 = vmatmul.f32.gmra.mxu0 %v2317
  %v2339 = vpop.f32.mrf.mxu0
  %v2340 = vadd.f32 %v2313, %v2339
  %2341 = vmatmul.f32.gmra.mxu0 %v2320
  %v2342 = vpop.f32.mrf.mxu0
  %v2343 = vadd.f32 %v2313, %v2342
  %2344 = vdwg.mxu0
  %v2345 = vmax.f32 %v2340, 0.0
  %v2346 = vmax.f32 %v2343, 0.0
  %v2347 = vld [vmem:[%s35] sm:$0xff]
  %v2348 = vld [vmem:[%s35 + $0x8] sm:$0xff]
  %v2349 = vld [vmem:[%s35 + $0x10] sm:$0xff]
  %v2350 = vld [vmem:[%s35 + $0x18] sm:$0xff]
  %v2351 = vld [vmem:[%s35 + $0x20] sm:$0xff]
  %v2352 = vld [vmem:[%s35 + $0x28] sm:$0xff]
  %v2353 = vld [vmem:[%s35 + $0x30] sm:$0xff]
  %v2354 = vld [vmem:[%s35 + $0x38] sm:$0xff]
  %v2355 = vld [vmem:[%s37] sm:$0x1]
  %v2357 = vperm.slane %v2355, 0
  %v2360 = vsel %vm300, %v2345, 0
  %v2363 = vsel %vm300, %v2346, 0
  %2365 = vmatpush.msra.mxu0 0.0
  %2366 = vmatpush.msra.mxu0 0.0
  %2367 = vmatpush.msra.mxu0 0.0
  %2368 = vmatpush.msra.mxu0 0.0
  %2369 = vmatpush.msra.mxu0 0.0
  %2370 = vmatpush.msra.mxu0 0.0
  %2371 = vmatpush.msra.mxu0 0.0
  %2372 = vmatpush.msra.mxu0 0.0
  %2373 = vmatpush.msra.mxu0 %v2354
  %2374 = vmatpush.msra.mxu0 %v2353
  %2375 = vmatpush.msra.mxu0 %v2352
  %2376 = vmatpush.msra.mxu0 %v2351
  %2377 = vmatpush.msra.mxu0 %v2350
  %2378 = vmatpush.msra.mxu0 %v2349
  %2379 = vmatpush.msra.mxu0 %v2348
  %2380 = vmatpush.msra.mxu0 %v2347
  %2381 = vmatmul.f32.gmra.mxu0 %v2360
  %v2382 = vpop.f32.mrf.mxu0
  %v2383 = vadd.f32 %v2357, %v2382
  %2384 = vmatmul.f32.gmra.mxu0 %v2363
  %v2385 = vpop.f32.mrf.mxu0
  %v2386 = vadd.f32 %v2357, %v2385
  %2387 = vdwg.mxu0
  %v2388 = vadd.f32 %v2383, %v2267
  %v2389 = vadd.f32 %v2386, %v2268
  %v2390 = vld [vmem:[%s39] sm:$0xff]
  %v2391 = vld [vmem:[%s39 + $0x8] sm:$0xff]
  %v2392 = vld [vmem:[%s39 + $0x10] sm:$0xff]
  %v2393 = vld [vmem:[%s39 + $0x18] sm:$0xff]
  %v2395 = vsel %vm2315, %v2269, 0
  %v2398 = vsel %vm2315, %v2270, 0
  %2400 = vmatpush.msra.mxu0 0.0
  %2401 = vmatpush.msra.mxu0 0.0
  %2402 = vmatpush.msra.mxu0 0.0
  %2403 = vmatpush.msra.mxu0 0.0
  %2404 = vmatpush.msra.mxu0 0.0
  %2405 = vmatpush.msra.mxu0 0.0
  %2406 = vmatpush.msra.mxu0 0.0
  %2407 = vmatpush.msra.mxu0 0.0
  %2408 = vmatpush.msra.mxu0 0.0
  %2409 = vmatpush.msra.mxu0 0.0
  %2410 = vmatpush.msra.mxu0 0.0
  %2411 = vmatpush.msra.mxu0 0.0
  %2412 = vmatpush.msra.mxu0 %v2393
  %2413 = vmatpush.msra.mxu0 %v2392
  %2414 = vmatpush.msra.mxu0 %v2391
  %2415 = vmatpush.msra.mxu0 %v2390
  %2416 = vmatmul.f32.gmra.mxu0 %v2395
  %v2417 = vpop.f32.mrf.mxu0
  %v2418 = vadd.f32 0.0, %v2417
  %2419 = vmatmul.f32.gmra.mxu0 %v2398
  %v2420 = vpop.f32.mrf.mxu0
  %v2421 = vadd.f32 0.0, %v2420
  %2422 = vdwg.mxu0
  %v2423 = vmul.f32 %v2201, %v2418
  %v2424 = vmul.f32 %v2203, %v2421
  %v2425 = vmul.f32 %v2205, %v2418
  %v2426 = vmul.f32 %v2207, %v2421
  %v2427 = vmul.f32 %v2209, %v2418
  %v2428 = vmul.f32 %v2211, %v2421
  %v2429 = vmul.f32 %v2213, %v2418
  %v2430 = vmul.f32 %v2215, %v2421
  %v2431 = vmul.f32 %v2217, %v2418
  %v2432 = vmul.f32 %v2219, %v2421
  %v2433 = vmul.f32 %v2221, %v2418
  %v2434 = vmul.f32 %v2223, %v2421
  %v2435 = vmul.f32 %v2225, %v2418
  %v2436 = vmul.f32 %v2227, %v2421
  %v2437 = vmul.f32 %v2229, %v2418
  %v2438 = vmul.f32 %v2231, %v2421
  %v2439 = vmul.f32 %v2233, %v2418
  %v2440 = vmul.f32 %v2235, %v2421
  %v2441 = vmul.f32 %v2237, %v2418
  %v2442 = vmul.f32 %v2239, %v2421
  %v2443 = vmul.f32 %v2241, %v2418
  %v2444 = vmul.f32 %v2243, %v2421
  %v2445 = vmul.f32 %v2245, %v2418
  %v2446 = vmul.f32 %v2247, %v2421
  %v2447 = vmul.f32 %v2249, %v2418
  %v2448 = vmul.f32 %v2251, %v2421
  %v2449 = vmul.f32 %v2253, %v2418
  %v2450 = vmul.f32 %v2255, %v2421
  %v2451 = vmul.f32 %v2257, %v2418
  %v2452 = vmul.f32 %v2259, %v2421
  %v2453 = vmul.f32 %v2261, %v2418
  %v2454 = vmul.f32 %v2263, %v2421
  %v2455 = vadd.f32 %v2423, %v2424
  %v2456 = vrot.slane %v2455, 4
  %v2457 = vadd.f32 %v2455, %v2456
  %v2458 = vrot.slane %v2457, 2
  %v2459 = vadd.f32 %v2457, %v2458
  %v2460 = vrot.slane %v2459, 1
  %v2461 = vadd.f32 %v2459, %v2460
  %v2462 = vadd.f32 %v2425, %v2426
  %v2463 = vrot.slane %v2462, 4
  %v2464 = vadd.f32 %v2462, %v2463
  %v2465 = vrot.slane %v2464, 2
  %v2466 = vadd.f32 %v2464, %v2465
  %v2467 = vrot.slane %v2466, 1
  %v2468 = vadd.f32 %v2466, %v2467
  %v2469 = vadd.f32 %v2427, %v2428
  %v2470 = vrot.slane %v2469, 4
  %v2471 = vadd.f32 %v2469, %v2470
  %v2472 = vrot.slane %v2471, 2
  %v2473 = vadd.f32 %v2471, %v2472
  %v2474 = vrot.slane %v2473, 1
  %v2475 = vadd.f32 %v2473, %v2474
  %v2476 = vadd.f32 %v2429, %v2430
  %v2477 = vrot.slane %v2476, 4
  %v2478 = vadd.f32 %v2476, %v2477
  %v2479 = vrot.slane %v2478, 2
  %v2480 = vadd.f32 %v2478, %v2479
  %v2481 = vrot.slane %v2480, 1
  %v2482 = vadd.f32 %v2480, %v2481
  %v2483 = vadd.f32 %v2431, %v2432
  %v2484 = vrot.slane %v2483, 4
  %v2485 = vadd.f32 %v2483, %v2484
  %v2486 = vrot.slane %v2485, 2
  %v2487 = vadd.f32 %v2485, %v2486
  %v2488 = vrot.slane %v2487, 1
  %v2489 = vadd.f32 %v2487, %v2488
  %v2490 = vadd.f32 %v2433, %v2434
  %v2491 = vrot.slane %v2490, 4
  %v2492 = vadd.f32 %v2490, %v2491
  %v2493 = vrot.slane %v2492, 2
  %v2494 = vadd.f32 %v2492, %v2493
  %v2495 = vrot.slane %v2494, 1
  %v2496 = vadd.f32 %v2494, %v2495
  %v2497 = vadd.f32 %v2435, %v2436
  %v2498 = vrot.slane %v2497, 4
  %v2499 = vadd.f32 %v2497, %v2498
  %v2500 = vrot.slane %v2499, 2
  %v2501 = vadd.f32 %v2499, %v2500
  %v2502 = vrot.slane %v2501, 1
  %v2503 = vadd.f32 %v2501, %v2502
  %v2504 = vadd.f32 %v2437, %v2438
  %v2505 = vrot.slane %v2504, 4
  %v2506 = vadd.f32 %v2504, %v2505
  %v2507 = vrot.slane %v2506, 2
  %v2508 = vadd.f32 %v2506, %v2507
  %v2509 = vrot.slane %v2508, 1
  %v2510 = vadd.f32 %v2508, %v2509
  %v2511 = vadd.f32 %v2439, %v2440
  %v2512 = vrot.slane %v2511, 4
  %v2513 = vadd.f32 %v2511, %v2512
  %v2514 = vrot.slane %v2513, 2
  %v2515 = vadd.f32 %v2513, %v2514
  %v2516 = vrot.slane %v2515, 1
  %v2517 = vadd.f32 %v2515, %v2516
  %v2518 = vadd.f32 %v2441, %v2442
  %v2519 = vrot.slane %v2518, 4
  %v2520 = vadd.f32 %v2518, %v2519
  %v2521 = vrot.slane %v2520, 2
  %v2522 = vadd.f32 %v2520, %v2521
  %v2523 = vrot.slane %v2522, 1
  %v2524 = vadd.f32 %v2522, %v2523
  %v2525 = vadd.f32 %v2443, %v2444
  %v2526 = vrot.slane %v2525, 4
  %v2527 = vadd.f32 %v2525, %v2526
  %v2528 = vrot.slane %v2527, 2
  %v2529 = vadd.f32 %v2527, %v2528
  %v2530 = vrot.slane %v2529, 1
  %v2531 = vadd.f32 %v2529, %v2530
  %v2532 = vadd.f32 %v2445, %v2446
  %v2533 = vrot.slane %v2532, 4
  %v2534 = vadd.f32 %v2532, %v2533
  %v2535 = vrot.slane %v2534, 2
  %v2536 = vadd.f32 %v2534, %v2535
  %v2537 = vrot.slane %v2536, 1
  %v2538 = vadd.f32 %v2536, %v2537
  %v2539 = vadd.f32 %v2447, %v2448
  %v2540 = vrot.slane %v2539, 4
  %v2541 = vadd.f32 %v2539, %v2540
  %v2542 = vrot.slane %v2541, 2
  %v2543 = vadd.f32 %v2541, %v2542
  %v2544 = vrot.slane %v2543, 1
  %v2545 = vadd.f32 %v2543, %v2544
  %v2546 = vadd.f32 %v2449, %v2450
  %v2547 = vrot.slane %v2546, 4
  %v2548 = vadd.f32 %v2546, %v2547
  %v2549 = vrot.slane %v2548, 2
  %v2550 = vadd.f32 %v2548, %v2549
  %v2551 = vrot.slane %v2550, 1
  %v2552 = vadd.f32 %v2550, %v2551
  %v2553 = vadd.f32 %v2451, %v2452
  %v2554 = vrot.slane %v2553, 4
  %v2555 = vadd.f32 %v2553, %v2554
  %v2556 = vrot.slane %v2555, 2
  %v2557 = vadd.f32 %v2555, %v2556
  %v2558 = vrot.slane %v2557, 1
  %v2559 = vadd.f32 %v2557, %v2558
  %v2560 = vadd.f32 %v2453, %v2454
  %v2561 = vrot.slane %v2560, 4
  %v2562 = vadd.f32 %v2560, %v2561
  %v2563 = vrot.slane %v2562, 2
  %v2564 = vadd.f32 %v2562, %v2563
  %v2565 = vrot.slane %v2564, 1
  %v2566 = vadd.f32 %v2564, %v2565
  %v2567 = vld [vmem:[%s41] sm:$0xff]
  %v2568 = vld [vmem:[%s41 + $0x8] sm:$0xff]
  %v2569 = vld [vmem:[%s41 + $0x10] sm:$0xff]
  %v2570 = vld [vmem:[%s41 + $0x18] sm:$0xff]
  %v2571 = vld [vmem:[%s41 + $0x20] sm:$0xff]
  %v2572 = vld [vmem:[%s41 + $0x28] sm:$0xff]
  %v2573 = vld [vmem:[%s41 + $0x30] sm:$0xff]
  %v2574 = vld [vmem:[%s41 + $0x38] sm:$0xff]
  %v2575 = vld [vmem:[%s41 + $0x40] sm:$0xff]
  %v2576 = vld [vmem:[%s41 + $0x48] sm:$0xff]
  %v2577 = vld [vmem:[%s41 + $0x50] sm:$0xff]
  %v2578 = vld [vmem:[%s41 + $0x58] sm:$0xff]
  %v2579 = vld [vmem:[%s41 + $0x60] sm:$0xff]
  %v2580 = vld [vmem:[%s41 + $0x68] sm:$0xff]
  %v2581 = vld [vmem:[%s41 + $0x70] sm:$0xff]
  %v2582 = vld [vmem:[%s41 + $0x78] sm:$0xff]
  %v2583 = vld [vmem:[%s43] sm:$0x1]
  %v2585 = vperm.slane %v2583, 0
  %vm2603 = vcmask 1041409
  %v2604 = vsel %vm2603, %v2468, %v2461
  %vm2605 = vcmask 1042434
  %v2606 = vsel %vm2605, %v2475, %v2604
  %vm2607 = vcmask 1043459
  %v2608 = vsel %vm2607, %v2482, %v2606
  %vm2609 = vcmask 1044484
  %v2610 = vsel %vm2609, %v2489, %v2608
  %vm2611 = vcmask 1045509
  %v2612 = vsel %vm2611, %v2496, %v2610
  %vm2613 = vcmask 1046534
  %v2614 = vsel %vm2613, %v2503, %v2612
  %vm2615 = vcmask 1047559
  %v2616 = vsel %vm2615, %v2510, %v2614
  %v2617 = vsel %vm2603, %v2524, %v2517
  %v2618 = vsel %vm2605, %v2531, %v2617
  %v2619 = vsel %vm2607, %v2538, %v2618
  %v2620 = vsel %vm2609, %v2545, %v2619
  %v2621 = vsel %vm2611, %v2552, %v2620
  %v2622 = vsel %vm2613, %v2559, %v2621
  %v2623 = vsel %vm2615, %v2566, %v2622
  %2626 = vmatpush.msra.mxu0 %v2582
  %2627 = vmatpush.msra.mxu0 %v2581
  %2628 = vmatpush.msra.mxu0 %v2580
  %2629 = vmatpush.msra.mxu0 %v2579
  %2630 = vmatpush.msra.mxu0 %v2578
  %2631 = vmatpush.msra.mxu0 %v2577
  %2632 = vmatpush.msra.mxu0 %v2576
  %2633 = vmatpush.msra.mxu0 %v2575
  %2634 = vmatpush.msra.mxu0 %v2574
  %2635 = vmatpush.msra.mxu0 %v2573
  %2636 = vmatpush.msra.mxu0 %v2572
  %2637 = vmatpush.msra.mxu0 %v2571
  %2638 = vmatpush.msra.mxu0 %v2570
  %2639 = vmatpush.msra.mxu0 %v2569
  %2640 = vmatpush.msra.mxu0 %v2568
  %2641 = vmatpush.msra.mxu0 %v2567
  %2642 = vmatmul.f32.gmra.mxu0 %v2616
  %v2643 = vpop.f32.mrf.mxu0
  %v2644 = vadd.f32 %v2585, %v2643
  %2645 = vmatmul.f32.gmra.mxu0 %v2623
  %v2646 = vpop.f32.mrf.mxu0
  %v2647 = vadd.f32 %v2585, %v2646
  %2648 = vdwg.mxu0
  %v2649 = vmax.f32 %v2644, 0.0
  %v2650 = vmax.f32 %v2647, 0.0
  %v2651 = vand.u32 2147483647, %v2644
  %v2652 = vand.u32 2147483647, %v2647
  %v2653 = vsub.f32 0.0, %v2651
  %v2654 = vsub.f32 0.0, %v2652
  %v2655 = vmul.f32 %v2653, 1.442695
  %v2656 = vpow.pop %v2655
  %v2657 = vmul.f32 %v2654, 1.442695
  %v2658 = vpow.pop %v2657
  %v2659 = vadd.f32 %v2656, 1.0
  %v2660 = vlog2.pop %v2659
  %v2661 = vmul.f32 %v2660, 0.6931472
  %v2662 = vmul.f32 -0.5, %v2656
  %v2663 = vadd.f32 %v2662, 1.0
  %v2664 = vmul.f32 %v2663, %v2656
  %v2665 = vand.u32 2147483647, %v2656
  %vm2666 = vcmp.lt.f32.partialorder %v2665, 0.0004427343
  %v2667 = vsel %vm2666, %v2664, %v2661
  %v2668 = vadd.f32 %v2658, 1.0
  %v2669 = vlog2.pop %v2668
  %v2670 = vmul.f32 %v2669, 0.6931472
  %v2671 = vmul.f32 -0.5, %v2658
  %v2672 = vadd.f32 %v2671, 1.0
  %v2673 = vmul.f32 %v2672, %v2658
  %v2674 = vand.u32 2147483647, %v2658
  %vm2675 = vcmp.lt.f32.partialorder %v2674, 0.0004427343
  %v2676 = vsel %vm2675, %v2673, %v2670
  %v2677 = vadd.f32 %v2649, %v2667
  %v2678 = vadd.f32 %v2650, %v2676
  %v2679 = vsub.f32 %v2677, 0.6931472
  %v2680 = vsub.f32 %v2678, 0.6931472
  %v2681 = vld [vmem:[%s45] sm:$0xff]
  %v2682 = vld [vmem:[%s45 + $0x8] sm:$0xff]
  %v2683 = vld [vmem:[%s45 + $0x10] sm:$0xff]
  %v2684 = vld [vmem:[%s45 + $0x18] sm:$0xff]
  %v2685 = vld [vmem:[%s47] sm:$0x1]
  %v2687 = vperm.slane %v2685, 0
  %v2690 = vsel %vm2315, %v2679, 0
  %v2693 = vsel %vm2315, %v2680, 0
  %2695 = vmatpush.msra.mxu0 0.0
  %2696 = vmatpush.msra.mxu0 0.0
  %2697 = vmatpush.msra.mxu0 0.0
  %2698 = vmatpush.msra.mxu0 0.0
  %2699 = vmatpush.msra.mxu0 0.0
  %2700 = vmatpush.msra.mxu0 0.0
  %2701 = vmatpush.msra.mxu0 0.0
  %2702 = vmatpush.msra.mxu0 0.0
  %2703 = vmatpush.msra.mxu0 0.0
  %2704 = vmatpush.msra.mxu0 0.0
  %2705 = vmatpush.msra.mxu0 0.0
  %2706 = vmatpush.msra.mxu0 0.0
  %2707 = vmatpush.msra.mxu0 %v2684
  %2708 = vmatpush.msra.mxu0 %v2683
  %2709 = vmatpush.msra.mxu0 %v2682
  %2710 = vmatpush.msra.mxu0 %v2681
  %2711 = vmatmul.f32.gmra.mxu0 %v2690
  %v2712 = vpop.f32.mrf.mxu0
  %v2713 = vadd.f32 %v2687, %v2712
  %2714 = vmatmul.f32.gmra.mxu0 %v2693
  %v2715 = vpop.f32.mrf.mxu0
  %v2716 = vadd.f32 %v2687, %v2715
  %2717 = vdwg.mxu0
  %v2718 = vadd.f32 %v2713, %v2269
  %v2719 = vadd.f32 %v2716, %v2270
  %v2720 = vld [vmem:[%s49] sm:$0xff]
  %v2721 = vld [vmem:[%s49 + $0x8] sm:$0xff]
  %v2722 = vld [vmem:[%s49 + $0x10] sm:$0xff]
  %v2723 = vld [vmem:[%s49 + $0x18] sm:$0xff]
  %v2724 = vld [vmem:[%s51] sm:$0xff]
  %v2725 = vld [vmem:[%s51 + $0x8] sm:$0xff]
  %v2726 = vld [vmem:[%s51 + $0x10] sm:$0xff]
  %v2727 = vld [vmem:[%s51 + $0x18] sm:$0xff]
  %v2729 = vsel %vm2315, %v2718, 0
  %v2732 = vsel %vm2315, %v2719, 0
  %2734 = vmatpush.msra.mxu0 0.0
  %2735 = vmatpush.msra.mxu0 0.0
  %2736 = vmatpush.msra.mxu0 0.0
  %2737 = vmatpush.msra.mxu0 0.0
  %2738 = vmatpush.msra.mxu0 0.0
  %2739 = vmatpush.msra.mxu0 0.0
  %2740 = vmatpush.msra.mxu0 0.0
  %2741 = vmatpush.msra.mxu0 0.0
  %2742 = vmatpush.msra.mxu0 0.0
  %2743 = vmatpush.msra.mxu0 0.0
  %2744 = vmatpush.msra.mxu0 0.0
  %2745 = vmatpush.msra.mxu0 0.0
  %2746 = vmatpush.msra.mxu0 %v2727
  %2747 = vmatpush.msra.mxu0 %v2726
  %2748 = vmatpush.msra.mxu0 %v2725
  %2749 = vmatpush.msra.mxu0 %v2724
  %2750 = vmatmul.f32.gmra.mxu0 %v2729
  %v2751 = vpop.f32.mrf.mxu0
  %v2752 = vadd.f32 0.0, %v2751
  %2753 = vmatmul.f32.gmra.mxu0 %v2732
  %v2754 = vpop.f32.mrf.mxu0
  %v2755 = vadd.f32 0.0, %v2754
  %2756 = vdwg.mxu0
  %v2758 = vsel %vm2315, %v2388, 0
  %v2761 = vsel %vm2315, %v2389, 0
  %2763 = vmatpush.msra.mxu0 0.0
  %2764 = vmatpush.msra.mxu0 0.0
  %2765 = vmatpush.msra.mxu0 0.0
  %2766 = vmatpush.msra.mxu0 0.0
  %2767 = vmatpush.msra.mxu0 0.0
  %2768 = vmatpush.msra.mxu0 0.0
  %2769 = vmatpush.msra.mxu0 0.0
  %2770 = vmatpush.msra.mxu0 0.0
  %2771 = vmatpush.msra.mxu0 0.0
  %2772 = vmatpush.msra.mxu0 0.0
  %2773 = vmatpush.msra.mxu0 0.0
  %2774 = vmatpush.msra.mxu0 0.0
  %2775 = vmatpush.msra.mxu0 %v2723
  %2776 = vmatpush.msra.mxu0 %v2722
  %2777 = vmatpush.msra.mxu0 %v2721
  %2778 = vmatpush.msra.mxu0 %v2720
  %2779 = vmatmul.f32.gmra.mxu0 %v2758
  %v2780 = vpop.f32.mrf.mxu0
  %v2781 = vadd.f32 %v2752, %v2780
  %2782 = vmatmul.f32.gmra.mxu0 %v2761
  %v2783 = vpop.f32.mrf.mxu0
  %v2784 = vadd.f32 %v2755, %v2783
  %2785 = vdwg.mxu0
  %v2786 = vld [vmem:[%s53] sm:$0x1]
  %v2788 = vperm.slane %v2786, 0
  %v2790 = vadd.f32 %v2781, %v2788
  %v2791 = vadd.f32 %v2784, %v2788
  %v2792 = vmax.f32 %v2790, 0.0
  %v2793 = vmax.f32 %v2791, 0.0
  %v2794 = vld [vmem:[%s55] sm:$0xff]
  %v2795 = vld [vmem:[%s55 + $0x8] sm:$0xff]
  %v2796 = vld [vmem:[%s55 + $0x10] sm:$0xff]
  %v2797 = vld [vmem:[%s55 + $0x18] sm:$0xff]
  %v2798 = vld [vmem:[%s55 + $0x20] sm:$0xff]
  %v2799 = vld [vmem:[%s55 + $0x28] sm:$0xff]
  %v2800 = vld [vmem:[%s55 + $0x30] sm:$0xff]
  %v2801 = vld [vmem:[%s55 + $0x38] sm:$0xff]
  %v2802 = vld [vmem:[%s59] sm:$0x1]
  %v2804 = vperm.slane %v2802, 0
  %v2807 = vsel %vm300, %v2792, 0
  %v2810 = vsel %vm300, %v2793, 0
  %2812 = vmatpush.msra.mxu0 0.0
  %2813 = vmatpush.msra.mxu0 0.0
  %2814 = vmatpush.msra.mxu0 0.0
  %2815 = vmatpush.msra.mxu0 0.0
  %2816 = vmatpush.msra.mxu0 0.0
  %2817 = vmatpush.msra.mxu0 0.0
  %2818 = vmatpush.msra.mxu0 0.0
  %2819 = vmatpush.msra.mxu0 0.0
  %2820 = vmatpush.msra.mxu0 %v2801
  %2821 = vmatpush.msra.mxu0 %v2800
  %2822 = vmatpush.msra.mxu0 %v2799
  %2823 = vmatpush.msra.mxu0 %v2798
  %2824 = vmatpush.msra.mxu0 %v2797
  %2825 = vmatpush.msra.mxu0 %v2796
  %2826 = vmatpush.msra.mxu0 %v2795
  %2827 = vmatpush.msra.mxu0 %v2794
  %2828 = vmatmul.f32.gmra.mxu0 %v2807
  %v2829 = vpop.f32.mrf.mxu0
  %v2830 = vadd.f32 %v2804, %v2829
  %2831 = vmatmul.f32.gmra.mxu0 %v2810
  %v2832 = vpop.f32.mrf.mxu0
  %v2833 = vadd.f32 %v2804, %v2832
  %2834 = vdwg.mxu0
  %v2835 = vld [vmem:[%s57] sm:$0xff]
  %v2836 = vld [vmem:[%s57 + $0x8] sm:$0xff]
  %v2837 = vld [vmem:[%s57 + $0x10] sm:$0xff]
  %v2838 = vld [vmem:[%s57 + $0x18] sm:$0xff]
  %v2839 = vld [vmem:[%s57 + $0x20] sm:$0xff]
  %v2840 = vld [vmem:[%s57 + $0x28] sm:$0xff]
  %v2841 = vld [vmem:[%s57 + $0x30] sm:$0xff]
  %v2842 = vld [vmem:[%s57 + $0x38] sm:$0xff]
  %v2843 = vld [vmem:[%s61] sm:$0x1]
  %v2845 = vperm.slane %v2843, 0
  %2847 = vmatpush.msra.mxu0 0.0
  %2848 = vmatpush.msra.mxu0 0.0
  %2849 = vmatpush.msra.mxu0 0.0
  %2850 = vmatpush.msra.mxu0 0.0
  %2851 = vmatpush.msra.mxu0 0.0
  %2852 = vmatpush.msra.mxu0 0.0
  %2853 = vmatpush.msra.mxu0 0.0
  %2854 = vmatpush.msra.mxu0 0.0
  %2855 = vmatpush.msra.mxu0 %v2842
  %2856 = vmatpush.msra.mxu0 %v2841
  %2857 = vmatpush.msra.mxu0 %v2840
  %2858 = vmatpush.msra.mxu0 %v2839
  %2859 = vmatpush.msra.mxu0 %v2838
  %2860 = vmatpush.msra.mxu0 %v2837
  %2861 = vmatpush.msra.mxu0 %v2836
  %2862 = vmatpush.msra.mxu0 %v2835
  %2863 = vmatmul.f32.gmra.mxu0 %v2807
  %v2864 = vpop.f32.mrf.mxu0
  %v2865 = vadd.f32 %v2845, %v2864
  %2866 = vmatmul.f32.gmra.mxu0 %v2810
  %v2867 = vpop.f32.mrf.mxu0
  %v2868 = vadd.f32 %v2845, %v2867
  %2869 = vdwg.mxu0
  %2870 = vmatpush.msra.mxu0 0.0
  %2871 = vmatpush.msra.mxu0 0.0
  %2872 = vmatpush.msra.mxu0 0.0
  %2873 = vmatpush.msra.mxu0 0.0
  %2874 = vmatpush.msra.mxu0 0.0
  %2875 = vmatpush.msra.mxu0 0.0
  %2876 = vmatpush.msra.mxu0 0.0
  %2877 = vmatpush.msra.mxu0 0.0
  %2878 = vmatpush.msra.mxu0 0.0
  %2879 = vmatpush.msra.mxu0 0.0
  %2880 = vmatpush.msra.mxu0 0.0
  %2881 = vmatpush.msra.mxu0 0.0
  %2882 = vmatpush.msra.mxu0 0.0
  %2883 = vmatpush.msra.mxu0 0.0
  %2884 = vmatpush.msra.mxu0 %v2833
  %2885 = vmatpush.msra.mxu0 %v2830
  %2886 = vmatmul.f32.gmra.mxu0 %v2273
  %v2887 = vpop.f32.mrf.mxu0
  %v2888 = vadd.f32 0.0, %v2887
  %2889 = vmatmul.f32.gmra.mxu0 %v2276
  %v2890 = vpop.f32.mrf.mxu0
  %v2891 = vadd.f32 0.0, %v2890
  %2892 = vdwg.mxu0
  %v2893 = vadd.f32 %v2830, %v2888
  %v2894 = vadd.f32 %v2833, %v2891
  %s2895 = scalar_lea.vmem %s29, 16
  %v2896 = vld [vmem:[%s2895] sm:$0xff]
  %v2897 = vld [vmem:[%s2895 + $0x8] sm:$0xff]
  %v2898 = vadd.f32 %v2893, %v2896
  %v2899 = vadd.f32 %v2894, %v2897
  %s2900 = scalar_lea.vmem %s31, 32
  %v2901 = vld [vmem:[%s2900] sm:$0xff]
  %v2902 = vld [vmem:[%s2900 + $0x8] sm:$0xff]
  %v2903 = vld [vmem:[%s2900 + $0x10] sm:$0xff]
  %v2904 = vld [vmem:[%s2900 + $0x18] sm:$0xff]
  %s2905 = scalar_lea.vmem %s33, 1
  %v2906 = vld [vmem:[%s2905] sm:$0x1]
  %v2908 = vperm.slane %v2906, 0
  %v2911 = vsel %vm2315, %v2898, 0
  %v2914 = vsel %vm2315, %v2899, 0
  %2916 = vmatpush.msra.mxu0 0.0
  %2917 = vmatpush.msra.mxu0 0.0
  %2918 = vmatpush.msra.mxu0 0.0
  %2919 = vmatpush.msra.mxu0 0.0
  %2920 = vmatpush.msra.mxu0 0.0
  %2921 = vmatpush.msra.mxu0 0.0
  %2922 = vmatpush.msra.mxu0 0.0
  %2923 = vmatpush.msra.mxu0 0.0
  %2924 = vmatpush.msra.mxu0 0.0
  %2925 = vmatpush.msra.mxu0 0.0
  %2926 = vmatpush.msra.mxu0 0.0
  %2927 = vmatpush.msra.mxu0 0.0
  %2928 = vmatpush.msra.mxu0 %v2904
  %2929 = vmatpush.msra.mxu0 %v2903
  %2930 = vmatpush.msra.mxu0 %v2902
  %2931 = vmatpush.msra.mxu0 %v2901
  %2932 = vmatmul.f32.gmra.mxu0 %v2911
  %v2933 = vpop.f32.mrf.mxu0
  %v2934 = vadd.f32 %v2908, %v2933
  %2935 = vmatmul.f32.gmra.mxu0 %v2914
  %v2936 = vpop.f32.mrf.mxu0
  %v2937 = vadd.f32 %v2908, %v2936
  %2938 = vdwg.mxu0
  %v2939 = vmax.f32 %v2934, 0.0
  %v2940 = vmax.f32 %v2937, 0.0
  %s2941 = scalar_lea.vmem %s35, 64
  %v2942 = vld [vmem:[%s2941] sm:$0xff]
  %v2943 = vld [vmem:[%s2941 + $0x8] sm:$0xff]
  %v2944 = vld [vmem:[%s2941 + $0x10] sm:$0xff]
  %v2945 = vld [vmem:[%s2941 + $0x18] sm:$0xff]
  %v2946 = vld [vmem:[%s2941 + $0x20] sm:$0xff]
  %v2947 = vld [vmem:[%s2941 + $0x28] sm:$0xff]
  %v2948 = vld [vmem:[%s2941 + $0x30] sm:$0xff]
  %v2949 = vld [vmem:[%s2941 + $0x38] sm:$0xff]
  %s2950 = scalar_lea.vmem %s37, 1
  %v2951 = vld [vmem:[%s2950] sm:$0x1]
  %v2953 = vperm.slane %v2951, 0
  %v2956 = vsel %vm300, %v2939, 0
  %v2959 = vsel %vm300, %v2940, 0
  %2961 = vmatpush.msra.mxu0 0.0
  %2962 = vmatpush.msra.mxu0 0.0
  %2963 = vmatpush.msra.mxu0 0.0
  %2964 = vmatpush.msra.mxu0 0.0
  %2965 = vmatpush.msra.mxu0 0.0
  %2966 = vmatpush.msra.mxu0 0.0
  %2967 = vmatpush.msra.mxu0 0.0
  %2968 = vmatpush.msra.mxu0 0.0
  %2969 = vmatpush.msra.mxu0 %v2949
  %2970 = vmatpush.msra.mxu0 %v2948
  %2971 = vmatpush.msra.mxu0 %v2947
  %2972 = vmatpush.msra.mxu0 %v2946
  %2973 = vmatpush.msra.mxu0 %v2945
  %2974 = vmatpush.msra.mxu0 %v2944
  %2975 = vmatpush.msra.mxu0 %v2943
  %2976 = vmatpush.msra.mxu0 %v2942
  %2977 = vmatmul.f32.gmra.mxu0 %v2956
  %v2978 = vpop.f32.mrf.mxu0
  %v2979 = vadd.f32 %v2953, %v2978
  %2980 = vmatmul.f32.gmra.mxu0 %v2959
  %v2981 = vpop.f32.mrf.mxu0
  %v2982 = vadd.f32 %v2953, %v2981
  %2983 = vdwg.mxu0
  %v2984 = vadd.f32 %v2979, %v2388
  %v2985 = vadd.f32 %v2982, %v2389
  %s2986 = scalar_lea.vmem %s39, 32
  %v2987 = vld [vmem:[%s2986] sm:$0xff]
  %v2988 = vld [vmem:[%s2986 + $0x8] sm:$0xff]
  %v2989 = vld [vmem:[%s2986 + $0x10] sm:$0xff]
  %v2990 = vld [vmem:[%s2986 + $0x18] sm:$0xff]
  %v2992 = vsel %vm2315, %v2865, 0
  %v2995 = vsel %vm2315, %v2868, 0
  %2997 = vmatpush.msra.mxu0 0.0
  %2998 = vmatpush.msra.mxu0 0.0
  %2999 = vmatpush.msra.mxu0 0.0
  %3000 = vmatpush.msra.mxu0 0.0
  %3001 = vmatpush.msra.mxu0 0.0
  %3002 = vmatpush.msra.mxu0 0.0
  %3003 = vmatpush.msra.mxu0 0.0
  %3004 = vmatpush.msra.mxu0 0.0
  %3005 = vmatpush.msra.mxu0 0.0
  %3006 = vmatpush.msra.mxu0 0.0
  %3007 = vmatpush.msra.mxu0 0.0
  %3008 = vmatpush.msra.mxu0 0.0
  %3009 = vmatpush.msra.mxu0 %v2990
  %3010 = vmatpush.msra.mxu0 %v2989
  %3011 = vmatpush.msra.mxu0 %v2988
  %3012 = vmatpush.msra.mxu0 %v2987
  %3013 = vmatmul.f32.gmra.mxu0 %v2992
  %v3014 = vpop.f32.mrf.mxu0
  %v3015 = vadd.f32 0.0, %v3014
  %3016 = vmatmul.f32.gmra.mxu0 %v2995
  %v3017 = vpop.f32.mrf.mxu0
  %v3018 = vadd.f32 0.0, %v3017
  %3019 = vdwg.mxu0
  %v3020 = vmul.f32 %v2202, %v3015
  %v3021 = vmul.f32 %v2204, %v3018
  %v3022 = vmul.f32 %v2206, %v3015
  %v3023 = vmul.f32 %v2208, %v3018
  %v3024 = vmul.f32 %v2210, %v3015
  %v3025 = vmul.f32 %v2212, %v3018
  %v3026 = vmul.f32 %v2214, %v3015
  %v3027 = vmul.f32 %v2216, %v3018
  %v3028 = vmul.f32 %v2218, %v3015
  %v3029 = vmul.f32 %v2220, %v3018
  %v3030 = vmul.f32 %v2222, %v3015
  %v3031 = vmul.f32 %v2224, %v3018
  %v3032 = vmul.f32 %v2226, %v3015
  %v3033 = vmul.f32 %v2228, %v3018
  %v3034 = vmul.f32 %v2230, %v3015
  %v3035 = vmul.f32 %v2232, %v3018
  %v3036 = vmul.f32 %v2234, %v3015
  %v3037 = vmul.f32 %v2236, %v3018
  %v3038 = vmul.f32 %v2238, %v3015
  %v3039 = vmul.f32 %v2240, %v3018
  %v3040 = vmul.f32 %v2242, %v3015
  %v3041 = vmul.f32 %v2244, %v3018
  %v3042 = vmul.f32 %v2246, %v3015
  %v3043 = vmul.f32 %v2248, %v3018
  %v3044 = vmul.f32 %v2250, %v3015
  %v3045 = vmul.f32 %v2252, %v3018
  %v3046 = vmul.f32 %v2254, %v3015
  %v3047 = vmul.f32 %v2256, %v3018
  %v3048 = vmul.f32 %v2258, %v3015
  %v3049 = vmul.f32 %v2260, %v3018
  %v3050 = vmul.f32 %v2262, %v3015
  %v3051 = vmul.f32 %v2264, %v3018
  %v3052 = vadd.f32 %v3020, %v3021
  %v3053 = vrot.slane %v3052, 4
  %v3054 = vadd.f32 %v3052, %v3053
  %v3055 = vrot.slane %v3054, 2
  %v3056 = vadd.f32 %v3054, %v3055
  %v3057 = vrot.slane %v3056, 1
  %v3058 = vadd.f32 %v3056, %v3057
  %v3059 = vadd.f32 %v3022, %v3023
  %v3060 = vrot.slane %v3059, 4
  %v3061 = vadd.f32 %v3059, %v3060
  %v3062 = vrot.slane %v3061, 2
  %v3063 = vadd.f32 %v3061, %v3062
  %v3064 = vrot.slane %v3063, 1
  %v3065 = vadd.f32 %v3063, %v3064
  %v3066 = vadd.f32 %v3024, %v3025
  %v3067 = vrot.slane %v3066, 4
  %v3068 = vadd.f32 %v3066, %v3067
  %v3069 = vrot.slane %v3068, 2
  %v3070 = vadd.f32 %v3068, %v3069
  %v3071 = vrot.slane %v3070, 1
  %v3072 = vadd.f32 %v3070, %v3071
  %v3073 = vadd.f32 %v3026, %v3027
  %v3074 = vrot.slane %v3073, 4
  %v3075 = vadd.f32 %v3073, %v3074
  %v3076 = vrot.slane %v3075, 2
  %v3077 = vadd.f32 %v3075, %v3076
  %v3078 = vrot.slane %v3077, 1
  %v3079 = vadd.f32 %v3077, %v3078
  %v3080 = vadd.f32 %v3028, %v3029
  %v3081 = vrot.slane %v3080, 4
  %v3082 = vadd.f32 %v3080, %v3081
  %v3083 = vrot.slane %v3082, 2
  %v3084 = vadd.f32 %v3082, %v3083
  %v3085 = vrot.slane %v3084, 1
  %v3086 = vadd.f32 %v3084, %v3085
  %v3087 = vadd.f32 %v3030, %v3031
  %v3088 = vrot.slane %v3087, 4
  %v3089 = vadd.f32 %v3087, %v3088
  %v3090 = vrot.slane %v3089, 2
  %v3091 = vadd.f32 %v3089, %v3090
  %v3092 = vrot.slane %v3091, 1
  %v3093 = vadd.f32 %v3091, %v3092
  %v3094 = vadd.f32 %v3032, %v3033
  %v3095 = vrot.slane %v3094, 4
  %v3096 = vadd.f32 %v3094, %v3095
  %v3097 = vrot.slane %v3096, 2
  %v3098 = vadd.f32 %v3096, %v3097
  %v3099 = vrot.slane %v3098, 1
  %v3100 = vadd.f32 %v3098, %v3099
  %v3101 = vadd.f32 %v3034, %v3035
  %v3102 = vrot.slane %v3101, 4
  %v3103 = vadd.f32 %v3101, %v3102
  %v3104 = vrot.slane %v3103, 2
  %v3105 = vadd.f32 %v3103, %v3104
  %v3106 = vrot.slane %v3105, 1
  %v3107 = vadd.f32 %v3105, %v3106
  %v3108 = vadd.f32 %v3036, %v3037
  %v3109 = vrot.slane %v3108, 4
  %v3110 = vadd.f32 %v3108, %v3109
  %v3111 = vrot.slane %v3110, 2
  %v3112 = vadd.f32 %v3110, %v3111
  %v3113 = vrot.slane %v3112, 1
  %v3114 = vadd.f32 %v3112, %v3113
  %v3115 = vadd.f32 %v3038, %v3039
  %v3116 = vrot.slane %v3115, 4
  %v3117 = vadd.f32 %v3115, %v3116
  %v3118 = vrot.slane %v3117, 2
  %v3119 = vadd.f32 %v3117, %v3118
  %v3120 = vrot.slane %v3119, 1
  %v3121 = vadd.f32 %v3119, %v3120
  %v3122 = vadd.f32 %v3040, %v3041
  %v3123 = vrot.slane %v3122, 4
  %v3124 = vadd.f32 %v3122, %v3123
  %v3125 = vrot.slane %v3124, 2
  %v3126 = vadd.f32 %v3124, %v3125
  %v3127 = vrot.slane %v3126, 1
  %v3128 = vadd.f32 %v3126, %v3127
  %v3129 = vadd.f32 %v3042, %v3043
  %v3130 = vrot.slane %v3129, 4
  %v3131 = vadd.f32 %v3129, %v3130
  %v3132 = vrot.slane %v3131, 2
  %v3133 = vadd.f32 %v3131, %v3132
  %v3134 = vrot.slane %v3133, 1
  %v3135 = vadd.f32 %v3133, %v3134
  %v3136 = vadd.f32 %v3044, %v3045
  %v3137 = vrot.slane %v3136, 4
  %v3138 = vadd.f32 %v3136, %v3137
  %v3139 = vrot.slane %v3138, 2
  %v3140 = vadd.f32 %v3138, %v3139
  %v3141 = vrot.slane %v3140, 1
  %v3142 = vadd.f32 %v3140, %v3141
  %v3143 = vadd.f32 %v3046, %v3047
  %v3144 = vrot.slane %v3143, 4
  %v3145 = vadd.f32 %v3143, %v3144
  %v3146 = vrot.slane %v3145, 2
  %v3147 = vadd.f32 %v3145, %v3146
  %v3148 = vrot.slane %v3147, 1
  %v3149 = vadd.f32 %v3147, %v3148
  %v3150 = vadd.f32 %v3048, %v3049
  %v3151 = vrot.slane %v3150, 4
  %v3152 = vadd.f32 %v3150, %v3151
  %v3153 = vrot.slane %v3152, 2
  %v3154 = vadd.f32 %v3152, %v3153
  %v3155 = vrot.slane %v3154, 1
  %v3156 = vadd.f32 %v3154, %v3155
  %v3157 = vadd.f32 %v3050, %v3051
  %v3158 = vrot.slane %v3157, 4
  %v3159 = vadd.f32 %v3157, %v3158
  %v3160 = vrot.slane %v3159, 2
  %v3161 = vadd.f32 %v3159, %v3160
  %v3162 = vrot.slane %v3161, 1
  %v3163 = vadd.f32 %v3161, %v3162
  %s3164 = scalar_lea.vmem %s41, 128
  %v3165 = vld [vmem:[%s3164] sm:$0xff]
  %v3166 = vld [vmem:[%s3164 + $0x8] sm:$0xff]
  %v3167 = vld [vmem:[%s3164 + $0x10] sm:$0xff]
  %v3168 = vld [vmem:[%s3164 + $0x18] sm:$0xff]
  %v3169 = vld [vmem:[%s3164 + $0x20] sm:$0xff]
  %v3170 = vld [vmem:[%s3164 + $0x28] sm:$0xff]
  %v3171 = vld [vmem:[%s3164 + $0x30] sm:$0xff]
  %v3172 = vld [vmem:[%s3164 + $0x38] sm:$0xff]
  %v3173 = vld [vmem:[%s3164 + $0x40] sm:$0xff]
  %v3174 = vld [vmem:[%s3164 + $0x48] sm:$0xff]
  %v3175 = vld [vmem:[%s3164 + $0x50] sm:$0xff]
  %v3176 = vld [vmem:[%s3164 + $0x58] sm:$0xff]
  %v3177 = vld [vmem:[%s3164 + $0x60] sm:$0xff]
  %v3178 = vld [vmem:[%s3164 + $0x68] sm:$0xff]
  %v3179 = vld [vmem:[%s3164 + $0x70] sm:$0xff]
  %v3180 = vld [vmem:[%s3164 + $0x78] sm:$0xff]
  %s3181 = scalar_lea.vmem %s43, 1
  %v3182 = vld [vmem:[%s3181] sm:$0x1]
  %v3184 = vperm.slane %v3182, 0
  %v3202 = vsel %vm2603, %v3065, %v3058
  %v3203 = vsel %vm2605, %v3072, %v3202
  %v3204 = vsel %vm2607, %v3079, %v3203
  %v3205 = vsel %vm2609, %v3086, %v3204
  %v3206 = vsel %vm2611, %v3093, %v3205
  %v3207 = vsel %vm2613, %v3100, %v3206
  %v3208 = vsel %vm2615, %v3107, %v3207
  %v3209 = vsel %vm2603, %v3121, %v3114
  %v3210 = vsel %vm2605, %v3128, %v3209
  %v3211 = vsel %vm2607, %v3135, %v3210
  %v3212 = vsel %vm2609, %v3142, %v3211
  %v3213 = vsel %vm2611, %v3149, %v3212
  %v3214 = vsel %vm2613, %v3156, %v3213
  %v3215 = vsel %vm2615, %v3163, %v3214
  %3218 = vmatpush.msra.mxu0 %v3180
  %3219 = vmatpush.msra.mxu0 %v3179
  %3220 = vmatpush.msra.mxu0 %v3178
  %3221 = vmatpush.msra.mxu0 %v3177
  %3222 = vmatpush.msra.mxu0 %v3176
  %3223 = vmatpush.msra.mxu0 %v3175
  %3224 = vmatpush.msra.mxu0 %v3174
  %3225 = vmatpush.msra.mxu0 %v3173
  %3226 = vmatpush.msra.mxu0 %v3172
  %3227 = vmatpush.msra.mxu0 %v3171
  %3228 = vmatpush.msra.mxu0 %v3170
  %3229 = vmatpush.msra.mxu0 %v3169
  %3230 = vmatpush.msra.mxu0 %v3168
  %3231 = vmatpush.msra.mxu0 %v3167
  %3232 = vmatpush.msra.mxu0 %v3166
  %3233 = vmatpush.msra.mxu0 %v3165
  %3234 = vmatmul.f32.gmra.mxu0 %v3208
  %v3235 = vpop.f32.mrf.mxu0
  %v3236 = vadd.f32 %v3184, %v3235
  %3237 = vmatmul.f32.gmra.mxu0 %v3215
  %v3238 = vpop.f32.mrf.mxu0
  %v3239 = vadd.f32 %v3184, %v3238
  %3240 = vdwg.mxu0
  %v3241 = vmax.f32 %v3236, 0.0
  %v3242 = vmax.f32 %v3239, 0.0
  %v3243 = vand.u32 2147483647, %v3236
  %v3244 = vand.u32 2147483647, %v3239
  %v3245 = vsub.f32 0.0, %v3243
  %v3246 = vsub.f32 0.0, %v3244
  %v3247 = vmul.f32 %v3245, 1.442695
  %v3248 = vpow.pop %v3247
  %v3249 = vmul.f32 %v3246, 1.442695
  %v3250 = vpow.pop %v3249
  %v3251 = vadd.f32 %v3248, 1.0
  %v3252 = vlog2.pop %v3251
  %v3253 = vmul.f32 %v3252, 0.6931472
  %v3254 = vmul.f32 -0.5, %v3248
  %v3255 = vadd.f32 %v3254, 1.0
  %v3256 = vmul.f32 %v3255, %v3248
  %v3257 = vand.u32 2147483647, %v3248
  %vm3258 = vcmp.lt.f32.partialorder %v3257, 0.0004427343
  %v3259 = vsel %vm3258, %v3256, %v3253
  %v3260 = vadd.f32 %v3250, 1.0
  %v3261 = vlog2.pop %v3260
  %v3262 = vmul.f32 %v3261, 0.6931472
  %v3263 = vmul.f32 -0.5, %v3250
  %v3264 = vadd.f32 %v3263, 1.0
  %v3265 = vmul.f32 %v3264, %v3250
  %v3266 = vand.u32 2147483647, %v3250
  %vm3267 = vcmp.lt.f32.partialorder %v3266, 0.0004427343
  %v3268 = vsel %vm3267, %v3265, %v3262
  %v3269 = vadd.f32 %v3241, %v3259
  %v3270 = vadd.f32 %v3242, %v3268
  %v3271 = vsub.f32 %v3269, 0.6931472
  %v3272 = vsub.f32 %v3270, 0.6931472
  %s3273 = scalar_lea.vmem %s45, 32
  %v3274 = vld [vmem:[%s3273] sm:$0xff]
  %v3275 = vld [vmem:[%s3273 + $0x8] sm:$0xff]
  %v3276 = vld [vmem:[%s3273 + $0x10] sm:$0xff]
  %v3277 = vld [vmem:[%s3273 + $0x18] sm:$0xff]
  %s3278 = scalar_lea.vmem %s47, 1
  %v3279 = vld [vmem:[%s3278] sm:$0x1]
  %v3281 = vperm.slane %v3279, 0
  %v3284 = vsel %vm2315, %v3271, 0
  %v3287 = vsel %vm2315, %v3272, 0
  %3289 = vmatpush.msra.mxu0 0.0
  %3290 = vmatpush.msra.mxu0 0.0
  %3291 = vmatpush.msra.mxu0 0.0
  %3292 = vmatpush.msra.mxu0 0.0
  %3293 = vmatpush.msra.mxu0 0.0
  %3294 = vmatpush.msra.mxu0 0.0
  %3295 = vmatpush.msra.mxu0 0.0
  %3296 = vmatpush.msra.mxu0 0.0
  %3297 = vmatpush.msra.mxu0 0.0
  %3298 = vmatpush.msra.mxu0 0.0
  %3299 = vmatpush.msra.mxu0 0.0
  %3300 = vmatpush.msra.mxu0 0.0
  %3301 = vmatpush.msra.mxu0 %v3277
  %3302 = vmatpush.msra.mxu0 %v3276
  %3303 = vmatpush.msra.mxu0 %v3275
  %3304 = vmatpush.msra.mxu0 %v3274
  %3305 = vmatmul.f32.gmra.mxu0 %v3284
  %v3306 = vpop.f32.mrf.mxu0
  %v3307 = vadd.f32 %v3281, %v3306
  %3308 = vmatmul.f32.gmra.mxu0 %v3287
  %v3309 = vpop.f32.mrf.mxu0
  %v3310 = vadd.f32 %v3281, %v3309
  %3311 = vdwg.mxu0
  %v3312 = vadd.f32 %v3307, %v2718
  %v3313 = vadd.f32 %v3310, %v2719
  %s3314 = scalar_lea.vmem %s49, 32
  %v3315 = vld [vmem:[%s3314] sm:$0xff]
  %v3316 = vld [vmem:[%s3314 + $0x8] sm:$0xff]
  %v3317 = vld [vmem:[%s3314 + $0x10] sm:$0xff]
  %v3318 = vld [vmem:[%s3314 + $0x18] sm:$0xff]
  %s3319 = scalar_lea.vmem %s51, 32
  %v3320 = vld [vmem:[%s3319] sm:$0xff]
  %v3321 = vld [vmem:[%s3319 + $0x8] sm:$0xff]
  %v3322 = vld [vmem:[%s3319 + $0x10] sm:$0xff]
  %v3323 = vld [vmem:[%s3319 + $0x18] sm:$0xff]
  %v3325 = vsel %vm2315, %v3312, 0
  %v3328 = vsel %vm2315, %v3313, 0
  %3330 = vmatpush.msra.mxu0 0.0
  %3331 = vmatpush.msra.mxu0 0.0
  %3332 = vmatpush.msra.mxu0 0.0
  %3333 = vmatpush.msra.mxu0 0.0
  %3334 = vmatpush.msra.mxu0 0.0
  %3335 = vmatpush.msra.mxu0 0.0
  %3336 = vmatpush.msra.mxu0 0.0
  %3337 = vmatpush.msra.mxu0 0.0
  %3338 = vmatpush.msra.mxu0 0.0
  %3339 = vmatpush.msra.mxu0 0.0
  %3340 = vmatpush.msra.mxu0 0.0
  %3341 = vmatpush.msra.mxu0 0.0
  %3342 = vmatpush.msra.mxu0 %v3323
  %3343 = vmatpush.msra.mxu0 %v3322
  %3344 = vmatpush.msra.mxu0 %v3321
  %3345 = vmatpush.msra.mxu0 %v3320
  %3346 = vmatmul.f32.gmra.mxu0 %v3325
  %v3347 = vpop.f32.mrf.mxu0
  %v3348 = vadd.f32 0.0, %v3347
  %3349 = vmatmul.f32.gmra.mxu0 %v3328
  %v3350 = vpop.f32.mrf.mxu0
  %v3351 = vadd.f32 0.0, %v3350
  %3352 = vdwg.mxu0
  %v3354 = vsel %vm2315, %v2984, 0
  %v3357 = vsel %vm2315, %v2985, 0
  %3359 = vmatpush.msra.mxu0 0.0
  %3360 = vmatpush.msra.mxu0 0.0
  %3361 = vmatpush.msra.mxu0 0.0
  %3362 = vmatpush.msra.mxu0 0.0
  %3363 = vmatpush.msra.mxu0 0.0
  %3364 = vmatpush.msra.mxu0 0.0
  %3365 = vmatpush.msra.mxu0 0.0
  %3366 = vmatpush.msra.mxu0 0.0
  %3367 = vmatpush.msra.mxu0 0.0
  %3368 = vmatpush.msra.mxu0 0.0
  %3369 = vmatpush.msra.mxu0 0.0
  %3370 = vmatpush.msra.mxu0 0.0
  %3371 = vmatpush.msra.mxu0 %v3318
  %3372 = vmatpush.msra.mxu0 %v3317
  %3373 = vmatpush.msra.mxu0 %v3316
  %3374 = vmatpush.msra.mxu0 %v3315
  %3375 = vmatmul.f32.gmra.mxu0 %v3354
  %v3376 = vpop.f32.mrf.mxu0
  %v3377 = vadd.f32 %v3348, %v3376
  %3378 = vmatmul.f32.gmra.mxu0 %v3357
  %v3379 = vpop.f32.mrf.mxu0
  %v3380 = vadd.f32 %v3351, %v3379
  %3381 = vdwg.mxu0
  %s3382 = scalar_lea.vmem %s53, 1
  %v3383 = vld [vmem:[%s3382] sm:$0x1]
  %v3385 = vperm.slane %v3383, 0
  %v3387 = vadd.f32 %v3377, %v3385
  %v3388 = vadd.f32 %v3380, %v3385
  %v3389 = vmax.f32 %v3387, 0.0
  %v3390 = vmax.f32 %v3388, 0.0
  %s3391 = scalar_lea.vmem %s55, 64
  %v3392 = vld [vmem:[%s3391] sm:$0xff]
  %v3393 = vld [vmem:[%s3391 + $0x8] sm:$0xff]
  %v3394 = vld [vmem:[%s3391 + $0x10] sm:$0xff]
  %v3395 = vld [vmem:[%s3391 + $0x18] sm:$0xff]
  %v3396 = vld [vmem:[%s3391 + $0x20] sm:$0xff]
  %v3397 = vld [vmem:[%s3391 + $0x28] sm:$0xff]
  %v3398 = vld [vmem:[%s3391 + $0x30] sm:$0xff]
  %v3399 = vld [vmem:[%s3391 + $0x38] sm:$0xff]
  %s3400 = scalar_lea.vmem %s59, 1
  %v3401 = vld [vmem:[%s3400] sm:$0x1]
  %v3403 = vperm.slane %v3401, 0
  %v3406 = vsel %vm300, %v3389, 0
  %v3409 = vsel %vm300, %v3390, 0
  %3411 = vmatpush.msra.mxu0 0.0
  %3412 = vmatpush.msra.mxu0 0.0
  %3413 = vmatpush.msra.mxu0 0.0
  %3414 = vmatpush.msra.mxu0 0.0
  %3415 = vmatpush.msra.mxu0 0.0
  %3416 = vmatpush.msra.mxu0 0.0
  %3417 = vmatpush.msra.mxu0 0.0
  %3418 = vmatpush.msra.mxu0 0.0
  %3419 = vmatpush.msra.mxu0 %v3399
  %3420 = vmatpush.msra.mxu0 %v3398
  %3421 = vmatpush.msra.mxu0 %v3397
  %3422 = vmatpush.msra.mxu0 %v3396
  %3423 = vmatpush.msra.mxu0 %v3395
  %3424 = vmatpush.msra.mxu0 %v3394
  %3425 = vmatpush.msra.mxu0 %v3393
  %3426 = vmatpush.msra.mxu0 %v3392
  %3427 = vmatmul.f32.gmra.mxu0 %v3406
  %v3428 = vpop.f32.mrf.mxu0
  %v3429 = vadd.f32 %v3403, %v3428
  %3430 = vmatmul.f32.gmra.mxu0 %v3409
  %v3431 = vpop.f32.mrf.mxu0
  %v3432 = vadd.f32 %v3403, %v3431
  %3433 = vdwg.mxu0
  %s3434 = scalar_lea.vmem %s57, 64
  %v3435 = vld [vmem:[%s3434] sm:$0xff]
  %v3436 = vld [vmem:[%s3434 + $0x8] sm:$0xff]
  %v3437 = vld [vmem:[%s3434 + $0x10] sm:$0xff]
  %v3438 = vld [vmem:[%s3434 + $0x18] sm:$0xff]
  %v3439 = vld [vmem:[%s3434 + $0x20] sm:$0xff]
  %v3440 = vld [vmem:[%s3434 + $0x28] sm:$0xff]
  %v3441 = vld [vmem:[%s3434 + $0x30] sm:$0xff]
  %v3442 = vld [vmem:[%s3434 + $0x38] sm:$0xff]
  %s3443 = scalar_lea.vmem %s61, 1
  %v3444 = vld [vmem:[%s3443] sm:$0x1]
  %v3446 = vperm.slane %v3444, 0
  %3448 = vmatpush.msra.mxu0 0.0
  %3449 = vmatpush.msra.mxu0 0.0
  %3450 = vmatpush.msra.mxu0 0.0
  %3451 = vmatpush.msra.mxu0 0.0
  %3452 = vmatpush.msra.mxu0 0.0
  %3453 = vmatpush.msra.mxu0 0.0
  %3454 = vmatpush.msra.mxu0 0.0
  %3455 = vmatpush.msra.mxu0 0.0
  %3456 = vmatpush.msra.mxu0 %v3442
  %3457 = vmatpush.msra.mxu0 %v3441
  %3458 = vmatpush.msra.mxu0 %v3440
  %3459 = vmatpush.msra.mxu0 %v3439
  %3460 = vmatpush.msra.mxu0 %v3438
  %3461 = vmatpush.msra.mxu0 %v3437
  %3462 = vmatpush.msra.mxu0 %v3436
  %3463 = vmatpush.msra.mxu0 %v3435
  %3464 = vmatmul.f32.gmra.mxu0 %v3406
  %v3465 = vpop.f32.mrf.mxu0
  %v3466 = vadd.f32 %v3446, %v3465
  %3467 = vmatmul.f32.gmra.mxu0 %v3409
  %v3468 = vpop.f32.mrf.mxu0
  %v3469 = vadd.f32 %v3446, %v3468
  %3470 = vdwg.mxu0
  %v3471 = vld [vmem:[%s13] sm:$0xff]
  %v3472 = vld [vmem:[%s13 + $0x8] sm:$0xff]
  %v3473 = vld [vmem:[%s13 + $0x10] sm:$0xff]
  %v3474 = vld [vmem:[%s13 + $0x18] sm:$0xff]
  %v3475 = vld [vmem:[%s15] sm:$0x1]
  %v3477 = vperm.slane %v3475, 0
  %v3480 = vsel %vm2315, %v3466, 0
  %v3483 = vsel %vm2315, %v3469, 0
  %3485 = vmatpush.msra.mxu0 0.0
  %3486 = vmatpush.msra.mxu0 0.0
  %3487 = vmatpush.msra.mxu0 0.0
  %3488 = vmatpush.msra.mxu0 0.0
  %3489 = vmatpush.msra.mxu0 0.0
  %3490 = vmatpush.msra.mxu0 0.0
  %3491 = vmatpush.msra.mxu0 0.0
  %3492 = vmatpush.msra.mxu0 0.0
  %3493 = vmatpush.msra.mxu0 0.0
  %3494 = vmatpush.msra.mxu0 0.0
  %3495 = vmatpush.msra.mxu0 0.0
  %3496 = vmatpush.msra.mxu0 0.0
  %3497 = vmatpush.msra.mxu0 %v3474
  %3498 = vmatpush.msra.mxu0 %v3473
  %3499 = vmatpush.msra.mxu0 %v3472
  %3500 = vmatpush.msra.mxu0 %v3471
  %3501 = vmatmul.f32.gmra.mxu0 %v3480
  %v3502 = vpop.f32.mrf.mxu0
  %v3503 = vadd.f32 %v3477, %v3502
  %3504 = vmatmul.f32.gmra.mxu0 %v3483
  %v3505 = vpop.f32.mrf.mxu0
  %v3506 = vadd.f32 %v3477, %v3505
  %3507 = vdwg.mxu0
  %v3508 = vmax.f32 %v3503, 0.0
  %v3509 = vmax.f32 %v3506, 0.0
  %v3510 = vand.u32 2147483647, %v3503
  %v3511 = vand.u32 2147483647, %v3506
  %v3512 = vsub.f32 0.0, %v3510
  %v3513 = vsub.f32 0.0, %v3511
  %v3514 = vmul.f32 %v3512, 1.442695
  %v3515 = vpow.pop %v3514
  %v3516 = vmul.f32 %v3513, 1.442695
  %v3517 = vpow.pop %v3516
  %v3518 = vadd.f32 %v3515, 1.0
  %v3519 = vlog2.pop %v3518
  %v3520 = vmul.f32 %v3519, 0.6931472
  %v3521 = vmul.f32 -0.5, %v3515
  %v3522 = vadd.f32 %v3521, 1.0
  %v3523 = vmul.f32 %v3522, %v3515
  %v3524 = vand.u32 2147483647, %v3515
  %vm3525 = vcmp.lt.f32.partialorder %v3524, 0.0004427343
  %v3526 = vsel %vm3525, %v3523, %v3520
  %v3527 = vadd.f32 %v3517, 1.0
  %v3528 = vlog2.pop %v3527
  %v3529 = vmul.f32 %v3528, 0.6931472
  %v3530 = vmul.f32 -0.5, %v3517
  %v3531 = vadd.f32 %v3530, 1.0
  %v3532 = vmul.f32 %v3531, %v3517
  %v3533 = vand.u32 2147483647, %v3517
  %vm3534 = vcmp.lt.f32.partialorder %v3533, 0.0004427343
  %v3535 = vsel %vm3534, %v3532, %v3529
  %v3536 = vadd.f32 %v3508, %v3526
  %v3537 = vadd.f32 %v3509, %v3535
  %v3538 = vsub.f32 %v3536, 0.6931472
  %v3539 = vsub.f32 %v3537, 0.6931472
  %v3540 = vld [vmem:[%s17] sm:$0xff]
  %v3541 = vld [vmem:[%s17 + $0x8] sm:$0xff]
  %v3542 = vld [vmem:[%s17 + $0x10] sm:$0xff]
  %v3543 = vld [vmem:[%s17 + $0x18] sm:$0xff]
  %v3544 = vld [vmem:[%s19] sm:$0x1]
  %v3546 = vperm.slane %v3544, 0
  %v3549 = vsel %vm2315, %v3538, 0
  %v3552 = vsel %vm2315, %v3539, 0
  %3554 = vmatpush.msra.mxu0 0.0
  %3555 = vmatpush.msra.mxu0 0.0
  %3556 = vmatpush.msra.mxu0 0.0
  %3557 = vmatpush.msra.mxu0 0.0
  %3558 = vmatpush.msra.mxu0 0.0
  %3559 = vmatpush.msra.mxu0 0.0
  %3560 = vmatpush.msra.mxu0 0.0
  %3561 = vmatpush.msra.mxu0 0.0
  %3562 = vmatpush.msra.mxu0 0.0
  %3563 = vmatpush.msra.mxu0 0.0
  %3564 = vmatpush.msra.mxu0 0.0
  %3565 = vmatpush.msra.mxu0 0.0
  %3566 = vmatpush.msra.mxu0 %v3543
  %3567 = vmatpush.msra.mxu0 %v3542
  %3568 = vmatpush.msra.mxu0 %v3541
  %3569 = vmatpush.msra.mxu0 %v3540
  %3570 = vmatmul.f32.gmra.mxu0 %v3549
  %v3571 = vpop.f32.mrf.mxu0
  %v3572 = vadd.f32 %v3546, %v3571
  %3573 = vmatmul.f32.gmra.mxu0 %v3552
  %v3574 = vpop.f32.mrf.mxu0
  %v3575 = vadd.f32 %v3546, %v3574
  %3576 = vdwg.mxu0
  %v3577 = vld [vmem:[%s11] sm:$0x3]
  %v3579 = vsel %vm2271, %v3577, 0
  %3581 = vmatpush.msra.mxu0 0.0
  %3582 = vmatpush.msra.mxu0 0.0
  %3583 = vmatpush.msra.mxu0 0.0
  %3584 = vmatpush.msra.mxu0 0.0
  %3585 = vmatpush.msra.mxu0 0.0
  %3586 = vmatpush.msra.mxu0 0.0
  %3587 = vmatpush.msra.mxu0 0.0
  %3588 = vmatpush.msra.mxu0 0.0
  %3589 = vmatpush.msra.mxu0 0.0
  %3590 = vmatpush.msra.mxu0 0.0
  %3591 = vmatpush.msra.mxu0 0.0
  %3592 = vmatpush.msra.mxu0 0.0
  %3593 = vmatpush.msra.mxu0 0.0
  %3594 = vmatpush.msra.mxu0 0.0
  %3595 = vmatpush.msra.mxu0 %v3432
  %3596 = vmatpush.msra.mxu0 %v3429
  %3597 = vmatmul.f32.gmra.mxu0 %v3579
  %v3598 = vpop.f32.mrf.mxu0
  %v3599 = vadd.f32 0.0, %v3598
  %3600 = vdwg.mxu0
  %vm3601 = vcmask 254976
  %3602 = vst.msk [vmem:[%s63] sm:$0x3] %vm3601, %v3599
  %v3603 = vld [vmem:[%s11] sm:$0x3]
  %v3605 = vsel %vm2271, %v3603, 0
  %3607 = vmatpush.msra.mxu0 0.0
  %3608 = vmatpush.msra.mxu0 0.0
  %3609 = vmatpush.msra.mxu0 0.0
  %3610 = vmatpush.msra.mxu0 0.0
  %3611 = vmatpush.msra.mxu0 0.0
  %3612 = vmatpush.msra.mxu0 0.0
  %3613 = vmatpush.msra.mxu0 0.0
  %3614 = vmatpush.msra.mxu0 0.0
  %3615 = vmatpush.msra.mxu0 0.0
  %3616 = vmatpush.msra.mxu0 0.0
  %3617 = vmatpush.msra.mxu0 0.0
  %3618 = vmatpush.msra.mxu0 0.0
  %3619 = vmatpush.msra.mxu0 0.0
  %3620 = vmatpush.msra.mxu0 0.0
  %3621 = vmatpush.msra.mxu0 %v3575
  %3622 = vmatpush.msra.mxu0 %v3572
  %3623 = vmatmul.f32.gmra.mxu0 %v3605
  %v3624 = vpop.f32.mrf.mxu0
  %v3625 = vadd.f32 0.0, %v3624
  %3626 = vdwg.mxu0
  %3627 = vst.msk [vmem:[%s65] sm:$0x3] %vm3601, %v3625
  // Predicated region
  $region126: #{interactor_forward.1} parent=0 // pred_check
    _
  $region127: #{interactor_forward.1} parent=0 // pred_check_branch
    %3629 = sbr.rel (0) target = $region129
  $region128: #{interactor_forward.1} parent=0 // pred_region
    _
  $region129: #{interactor_forward.1} parent=0 // pred_fallthru
    _
  // Predicated region
  $region130: #{interactor_forward.1} parent=0 // pred_check
    _
  $region131: #{interactor_forward.1} parent=0 // pred_check_branch
    %3631 = sbr.rel (0) target = $region133
  $region132: #{interactor_forward.1} parent=0 // pred_region
    _
  $region133: #{interactor_forward.1} parent=0 // pred_fallthru
    _
  // Predicated region
  $region134: #{interactor_forward.1} parent=0 // pred_check
    _
  $region135: #{interactor_forward.1} parent=0 // pred_check_branch
    %3633 = sbr.rel (0) target = $region137
  $region136: #{interactor_forward.1} parent=0 // pred_region
    _
  $region137: #{interactor_forward.1} parent=0 // pred_fallthru
    _
  // Predicated region
  $region138: #{interactor_forward.1} parent=0 // pred_check
    _
  $region139: #{interactor_forward.1} parent=0 // pred_check_branch
    %3635 = sbr.rel (0) target = $region141
  $region140: #{interactor_forward.1} parent=0 // pred_region
    _
  $region141: #{interactor_forward.1} parent=0 // pred_fallthru
    _

</llo_original>
